<compile_context>
chip_gen: v5e
topology: v5e:2x2
jax: 0.10.0
libtpu: 0.0.40
codegen_flags: <defaults>
</compile_context>

<pallas_src>
import functools

import jax
import jax.numpy as jnp
from jax.experimental import pallas as pl
from jax.experimental.pallas import tpu as pltpu

_MIB = 1024 * 1024
_LANE = 128


def _iwt_kernel(x_ref, o_ref):
    """x_ref: (1, 4, Cb, Hb, W).  o_ref: (1, Cb, 2*Hb, 2*W) or (1, Cb, Hb*4*W)."""
    f32 = jnp.float32
    x1 = x_ref[0, 0].astype(f32)
    x2 = x_ref[0, 1].astype(f32)
    x3 = x_ref[0, 2].astype(f32)
    x4 = x_ref[0, 3].astype(f32)

    # 8 add/sub + 4 mul; the per-band /2 is folded into the half-sums/diffs.
    s14 = (x1 + x4) * 0.5
    s23 = (x2 + x3) * 0.5
    d14 = (x1 - x4) * 0.5
    d23 = (x2 - x3) * 0.5

    ee = s14 - s23   # out rows 0::2, cols 0::2
    eo = d14 + d23   # out rows 0::2, cols 1::2
    oe = d14 - d23   # out rows 1::2, cols 0::2
    oo = s14 + s23   # out rows 1::2, cols 1::2

    cb, hb, w = ee.shape
    # Column (lane) interleave: (cb, hb, w, 2) -> (cb, hb, 2w).
    row_even = jnp.stack([ee, eo], axis=-1).reshape(cb, hb, 2 * w)
    row_odd = jnp.stack([oe, oo], axis=-1).reshape(cb, hb, 2 * w)
    # Row interleave: (cb, hb, 2, 2w). Its element order equals both output layouts
    # ((cb, 2hb, 2w) direct and (cb, hb*4w) flat), so one reshape finishes the job.
    h = jnp.stack([row_even, row_odd], axis=2)
    # TODO(synk): if a bundle dump shows these stack/reshapes materializing extra VMEM
    # round-trips, stream the interleave per 8-16 row chunk with lax.fori_loop instead.
    o_ref[0] = h.reshape(o_ref.shape[1:]).astype(o_ref.dtype)


def _round_up(x, m):
    return -(-x // m) * m


def _divisors(n):
    return [d for d in range(1, n + 1) if n % d == 0]


def _vmem_limit_bytes():
    """~3/4 of physical VMEM: ~96 MiB on v5e/v6e (128 MiB), ~48 MiB on v7x (64 MiB)."""
    phys = None
    try:
        phys = getattr(pltpu.get_tpu_info(), "vmem_capacity_bytes", None)
    except Exception:
        phys = None
    if not phys or phys <= 0:
        phys = 64 * _MIB  # conservative default (v7x-sized per-core VMEM)
    return int(min(phys * 3 // 4, 112 * _MIB))


def _choose_tiles(B, C, H, W, itemsize, flat_out, budget_bytes, min_steps=8):
    """Pick (Cb, Hb): legal blocks, prefer >= min_steps grid steps (pipelining +
    both v7x TensorCores), then the largest per-step payload that fits the budget."""
    sub = {4: 8, 2: 16, 1: 32}.get(itemsize, 8)

    cb_cands = [d for d in _divisors(C)
                if (not flat_out) or d == C or d % sub == 0]
    hb_cands = [d for d in _divisors(H)
                if d == H or (d % sub == 0
                              and ((not flat_out) or (d * 4 * W) % _LANE == 0))]

    def footprint(cb, hb):
        # Double-buffered in+out blocks (with (sublane, lane) layout padding) plus
        # f32 intermediates of the interleave (ee/eo/oe/oo, row_even/odd, h).
        in_b = 4 * cb * _round_up(hb, sub) * _round_up(W, _LANE) * itemsize
        if flat_out:
            out_b = _round_up(cb, sub) * _round_up(hb * 4 * W, _LANE) * itemsize
        else:
            out_b = cb * _round_up(2 * hb, sub) * _round_up(2 * W, _LANE) * itemsize
        scratch = 3 * cb * hb * 4 * W * 4
        return 2 * (in_b + out_b) + scratch

    def steps(cb, hb):
        return B * (C // cb) * (H // hb)

    cands = [(cb, hb) for cb in cb_cands for hb in hb_cands]
    fitting = [t for t in cands if footprint(*t) <= budget_bytes]
    if fitting:
        cb, hb = max(fitting, key=lambda t: (min(steps(*t), min_steps),
                                             t[0] * t[1] * W,
                                             -footprint(*t)))
    else:
        # Pathological shapes: take the smallest legal tile; caller raises the limit.
        cb, hb = min(cands, key=lambda t: footprint(*t))
    return cb, hb, footprint(cb, hb)


def _make_iwt_call(B, C, H, W, dtype, flat_out):
    itemsize = jnp.dtype(dtype).itemsize
    vmem_limit = _vmem_limit_bytes()
    Cb, Hb, need = _choose_tiles(B, C, H, W, itemsize, flat_out,
                                 budget_bytes=(vmem_limit * 3) // 4)
    vmem_limit = int(max(vmem_limit, need + 8 * _MIB))  # never under-provision

    grid = (B, C // Cb, H // Hb)
    in_spec = pl.BlockSpec((1, 4, Cb, Hb, W), lambda b, c, h: (b, 0, c, h, 0))
    # TODO(synk): if the input DMA is still exposed on v5e/v6e at these tile sizes,
    # try pipeline_mode=pl.Buffered(3) on in_spec (keep depth 2 on v7x: 64 MiB VMEM).
    if flat_out:
        out_shape = jax.ShapeDtypeStruct((B, C, 4 * H * W), dtype)
        out_spec = pl.BlockSpec((1, Cb, Hb * 4 * W), lambda b, c, h: (b, c, h))
    else:
        out_shape = jax.ShapeDtypeStruct((B, C, 2 * H, 2 * W), dtype)
        out_spec = pl.BlockSpec((1, Cb, 2 * Hb, 2 * W), lambda b, c, h: (b, c, h, 0))

    call = pl.pallas_call(
        _iwt_kernel,
        out_shape=out_shape,
        grid=grid,
        in_specs=[in_spec],
        out_specs=out_spec,
        compiler_params=pltpu.CompilerParams(
            dimension_semantics=("parallel", "parallel", "parallel"),
            vmem_limit_bytes=vmem_limit,
        ),
    )

    def run(x):
        xv = x.reshape(B, 4, C, H, W)            # free: bands are channel-major
        out = call(xv)
        return out.reshape(B, C, 2 * H, 2 * W)   # free for the flat layout

    return jax.jit(run)


@functools.lru_cache(maxsize=None)
def _build_iwt(B, C, H, W, dtype_name):
    dtype = jnp.dtype(dtype_name)
    prefer_flat = (2 * W) % _LANE != 0   # lane-dense flat layout only when needed
    if prefer_flat:
        fn = _make_iwt_call(B, C, H, W, dtype, flat_out=True)
        try:
            fn.lower(jax.ShapeDtypeStruct((B, 4 * C, H, W), dtype)).compile()
            return fn
        except Exception:
            # Flat layout failed to lower on this toolchain; fall back to the direct
            # (always-legal, previously validated) layout below.
            pass
    return _make_iwt_call(B, C, H, W, dtype, flat_out=False)


def iwt(x):
    """Inverse Haar wavelet transform: (B, 4*C, H, W) -> (B, C, 2*H, 2*W)."""
    B, C4, H, W = x.shape
    assert C4 % 4 == 0, "input channel count must be divisible by 4"
    return _build_iwt(B, C4 // 4, H, W, jnp.dtype(x.dtype).name)(x)


def _iwt_reference(x):
    B, C4, H, W = x.shape
    C = C4 // 4
    xf = x.astype(jnp.float32)
    x1 = xf[:, 0:C] / 2
    x2 = xf[:, C:2 * C] / 2
    x3 = xf[:, 2 * C:3 * C] / 2
    x4 = xf[:, 3 * C:4 * C] / 2
    h = jnp.zeros((B, C, 2 * H, 2 * W), jnp.float32)
    h = h.at[:, :, 0::2, 0::2].set(x1 - x2 - x3 + x4)
    h = h.at[:, :, 1::2, 0::2].set(x1 - x2 + x3 - x4)
    h = h.at[:, :, 0::2, 1::2].set(x1 + x2 - x3 - x4)
    h = h.at[:, :, 1::2, 1::2].set(x1 + x2 + x3 + x4)
    return h.astype(x.dtype)


if __name__ == "__main__":
    key = jax.random.PRNGKey(0)

    # Primary case: f32, W=16 -> exercises the lane-dense flat output path.
    B, C, H, W = 2, 4, 16, 16
    x = jax.random.normal(key, (B, 4 * C, H, W), dtype=jnp.float32)
    out = jax.block_until_ready(iwt(x))
    ref = _iwt_reference(x)
    assert out.shape == (B, C, 2 * H, 2 * W), out.shape
    assert jnp.allclose(out, ref, atol=1e-5, rtol=1e-5), "f32 / flat-path mismatch"

    # Direct layout path (2W already a multiple of 128 lanes).
    x2 = jax.random.normal(jax.random.PRNGKey(1), (1, 4, 8, 64), dtype=jnp.float32)
    out2 = jax.block_until_ready(iwt(x2))
    assert jnp.allclose(out2, _iwt_reference(x2), atol=1e-5, rtol=1e-5), "f32 / direct mismatch"

    # bf16 I/O path (math is done in f32 inside the kernel).
    x3 = jax.random.normal(jax.random.PRNGKey(2), (1, 8, 16, 16), dtype=jnp.bfloat16)
    out3 = jax.block_until_ready(iwt(x3))
    ref3 = _iwt_reference(x3).astype(jnp.float32)
    assert jnp.allclose(out3.astype(jnp.float32), ref3, atol=5e-2, rtol=5e-2), "bf16 mismatch"

    print("KERNEL_OK")
</pallas_src>

<mosaic_0001>
module attributes {stable_mosaic.version = 11 : i64} {
  func.func @_iwt_kernel(%arg0: i32, %arg1: i32, %arg2: i32, %arg3: memref<1x4x1x16x16xf32, #tpu.memory_space<vmem>>, %arg4: memref<1x1x32x32xf32, #tpu.memory_space<vmem>>) attributes {dimension_semantics = [#tpu.dimension_semantics<parallel>, #tpu.dimension_semantics<parallel>, #tpu.dimension_semantics<parallel>], iteration_bounds = array<i64: 2, 4, 1>, scalar_prefetch = 0 : i64, scratch_operands = 0 : i64, tpu.core_type = #tpu.core_type<tc>, window_params = [{transform_indices = @transform_0, window_bounds = array<i64: 1, 4, 1, 16, 16>}, {transform_indices = @transform_1, window_bounds = array<i64: 1, 1, 32, 32>}]} {
    %c0 = arith.constant 0 : index
    %c0_0 = arith.constant 0 : index
    %c0_1 = arith.constant 0 : index
    %c0_2 = arith.constant 0 : index
    %c0_3 = arith.constant 0 : index
    %0 = vector.load %arg3[%c0, %c0_0, %c0_1, %c0_2, %c0_3] : memref<1x4x1x16x16xf32, #tpu.memory_space<vmem>>, vector<1x1x1x16x16xf32>
    %1 = vector.shape_cast %0 : vector<1x1x1x16x16xf32> to vector<1x16x16xf32>
    %c0_4 = arith.constant 0 : index
    %c1 = arith.constant 1 : index
    %c0_5 = arith.constant 0 : index
    %c0_6 = arith.constant 0 : index
    %c0_7 = arith.constant 0 : index
    %2 = vector.load %arg3[%c0_4, %c1, %c0_5, %c0_6, %c0_7] : memref<1x4x1x16x16xf32, #tpu.memory_space<vmem>>, vector<1x1x1x16x16xf32>
    %3 = vector.shape_cast %2 : vector<1x1x1x16x16xf32> to vector<1x16x16xf32>
    %c0_8 = arith.constant 0 : index
    %c2 = arith.constant 2 : index
    %c0_9 = arith.constant 0 : index
    %c0_10 = arith.constant 0 : index
    %c0_11 = arith.constant 0 : index
    %4 = vector.load %arg3[%c0_8, %c2, %c0_9, %c0_10, %c0_11] : memref<1x4x1x16x16xf32, #tpu.memory_space<vmem>>, vector<1x1x1x16x16xf32>
    %5 = vector.shape_cast %4 : vector<1x1x1x16x16xf32> to vector<1x16x16xf32>
    %c0_12 = arith.constant 0 : index
    %c3 = arith.constant 3 : index
    %c0_13 = arith.constant 0 : index
    %c0_14 = arith.constant 0 : index
    %c0_15 = arith.constant 0 : index
    %6 = vector.load %arg3[%c0_12, %c3, %c0_13, %c0_14, %c0_15] : memref<1x4x1x16x16xf32, #tpu.memory_space<vmem>>, vector<1x1x1x16x16xf32>
    %7 = vector.shape_cast %6 : vector<1x1x1x16x16xf32> to vector<1x16x16xf32>
    %8 = arith.addf %1, %7 : vector<1x16x16xf32>
    %cst = arith.constant 5.000000e-01 : f32
    %9 = vector.broadcast %cst : f32 to vector<1x16x16xf32>
    %10 = arith.mulf %8, %9 : vector<1x16x16xf32>
    %11 = arith.addf %3, %5 : vector<1x16x16xf32>
    %cst_16 = arith.constant 5.000000e-01 : f32
    %12 = vector.broadcast %cst_16 : f32 to vector<1x16x16xf32>
    %13 = arith.mulf %11, %12 : vector<1x16x16xf32>
    %14 = arith.subf %1, %7 : vector<1x16x16xf32>
    %cst_17 = arith.constant 5.000000e-01 : f32
    %15 = vector.broadcast %cst_17 : f32 to vector<1x16x16xf32>
    %16 = arith.mulf %14, %15 : vector<1x16x16xf32>
    %17 = arith.subf %3, %5 : vector<1x16x16xf32>
    %cst_18 = arith.constant 5.000000e-01 : f32
    %18 = vector.broadcast %cst_18 : f32 to vector<1x16x16xf32>
    %19 = arith.mulf %17, %18 : vector<1x16x16xf32>
    %20 = arith.subf %10, %13 : vector<1x16x16xf32>
    %21 = arith.addf %16, %19 : vector<1x16x16xf32>
    %22 = arith.subf %16, %19 : vector<1x16x16xf32>
    %23 = arith.addf %10, %13 : vector<1x16x16xf32>
    %24 = vector.shape_cast %20 : vector<1x16x16xf32> to vector<1x16x16x1xf32>
    %25 = vector.shape_cast %21 : vector<1x16x16xf32> to vector<1x16x16x1xf32>
    %26 = tpu.concatenate %24, %25 in 3 : vector<1x16x16x1xf32>, vector<1x16x16x1xf32> -> vector<1x16x16x2xf32>
    %27 = vector.shape_cast %26 : vector<1x16x16x2xf32> to vector<1x16x32xf32>
    %28 = vector.shape_cast %22 : vector<1x16x16xf32> to vector<1x16x16x1xf32>
    %29 = vector.shape_cast %23 : vector<1x16x16xf32> to vector<1x16x16x1xf32>
    %30 = tpu.concatenate %28, %29 in 3 : vector<1x16x16x1xf32>, vector<1x16x16x1xf32> -> vector<1x16x16x2xf32>
    %31 = vector.shape_cast %30 : vector<1x16x16x2xf32> to vector<1x16x32xf32>
    %32 = vector.shape_cast %27 : vector<1x16x32xf32> to vector<1x16x1x32xf32>
    %33 = vector.shape_cast %31 : vector<1x16x32xf32> to vector<1x16x1x32xf32>
    %34 = tpu.concatenate %32, %33 in 2 : vector<1x16x1x32xf32>, vector<1x16x1x32xf32> -> vector<1x16x2x32xf32>
    %35 = vector.shape_cast %34 : vector<1x16x2x32xf32> to vector<1x32x32xf32>
    %c0_19 = arith.constant 0 : index
    %c0_20 = arith.constant 0 : index
    %c0_21 = arith.constant 0 : index
    %c0_22 = arith.constant 0 : index
    %36 = vector.load %arg4[%c0_19, %c0_20, %c0_21, %c0_22] : memref<1x1x32x32xf32, #tpu.memory_space<vmem>>, vector<1x1x32x32xf32>
    %37 = vector.shape_cast %36 : vector<1x1x32x32xf32> to vector<1x32x32xf32>
    %38 = vector.shape_cast %35 : vector<1x32x32xf32> to vector<1x1x32x32xf32>
    tpu.vector_store %arg4[%c0_19, %c0_20, %c0_21, %c0_22], %38 {strides = array<i32>} : memref<1x1x32x32xf32, #tpu.memory_space<vmem>>, vector<1x1x32x32xf32>,
    return
  }
  func.func @transform_0(%arg0: i32, %arg1: i32, %arg2: i32) -> (i32, i32, i32, i32, i32) {
    %c0_i32 = arith.constant 0 : i32
    %c0_i32_0 = arith.constant 0 : i32
    %c0_i32_1 = arith.constant 0 : i32
    return %arg0, %c0_i32, %arg1, %arg2, %c0_i32_0 : i32, i32, i32, i32, i32
  }
  func.func @transform_1(%arg0: i32, %arg1: i32, %arg2: i32) -> (i32, i32, i32, i32) {
    %c0_i32 = arith.constant 0 : i32
    %c0_i32_0 = arith.constant 0 : i32
    return %arg0, %arg1, %arg2, %c0_i32 : i32, i32, i32, i32
  }
}

</mosaic_0001>

<llo_original>
// kernel: run.1
$region0: #{run.1}
  #allocation0 [shape = 'u32[]', space=smem, size = 0x4, offset = 0x4, fixed_abs, tag = 'smem constant byte address 0x4 - core index']
  #allocation1 [shape = 'u32[72,128]{1,0:T(1,128)}', space=vmem, size = 0x9000, scoped, tag = 'internal scratch']
  #allocation6 [shape = 's32[]', space=sflag, size = 0x4, offset = 0, fixed_abs, tag = 'sflag constant byte address 0x0 - dummy sync flag']
  %s0 = inlined_call_operand.hbm [shape: f32[2,4,4,16,16], index: 0, kind: input, shape index: {}]
  %s1 = inlined_call_operand.hbm [shape: f32[2,4,32,32], index: 1, kind: output, shape index: {}]
  %s2 = sld [smem:[#allocation0]]
  $region41: #{run.1} parent=0
    _
  %s4 = ssub.s32 1, %s2
  %s5 = scalar_select 0, %s4, %s2
  $region1: #{run.1} parent=0
    #allocation2 [shape = 'u8[65536]{0}', space=vmem, size = 0x10000, scoped, tag = 'input window, operand 0']
    #allocation3 [shape = 's32[2]{0}', space=sflag, size = 0x8, scoped, tag = 'scoped memory for run.1']
    #allocation4 [shape = 's32[2]{0}', space=sflag, size = 0x8, scoped, tag = 'scoped memory for run.1']
    #allocation5 [shape = 'u8[32768]{0}', space=vmem, size = 0x8000, scoped, tag = 'output window, operand 0']
    %6 = vsyncpa [#allocation3], 0
    %s7 = scalar_lea.sflag [#allocation3], 1
    %8 = vsyncpa %s7, 0
    %9 = vsyncpa [#allocation4], 0
    %s10 = scalar_lea.sflag [#allocation4], 1
    %11 = vsyncpa %s10, 0
    loop: start=0, step=1, limit=10
    $region2: #{run.1} parent=1 // loop_pre_header
      _
    $region3: #{run.1} parent=1 // loop_header
      %s13 = sphi 0, %s17
      %p14 = scmp.ge.s32.totalorder %s13, 10
      %s20 = sphi 0, %s39
      %s21 = sphi 0, %s35
      %s22 = sphi 0, %s31
      %s23 = sphi 0, %s20
      %s24 = sphi 0, %s21
      %s25 = sphi 0, %s22
      %s26 = sphi 0, %s23
      %s27 = sphi 0, %s24
      %s28 = sphi 0, %s25
      %s46 = sphi 0, %s48
      %s49 = sphi 0, %s46
      %s50 = sphi 0, %s49
      %s66 = sphi 0, %s50
      %s76 = sphi 0, %s78
      %s79 = sphi 0, %s76
      %s80 = sphi 0, %s79
      %s96 = sphi 0, %s80
    $region4: #{run.1} parent=1 // loop_header_branch
      %16 = sbr.rel (%p14) target = $region8
    $region5: #{run.1} parent=1 // loop_body
      %s18 = ssub.s32 %s13, 1
      %s19 = ssub.s32 %s13, 2
      %s29 = sadd.s32 1, %s22
      %p30 = scmp.ge.s32.totalorder %s29, 1
      %s31 = scalar_select %p30, 0, %s29
      %s32 = sadd.s32 1, %s21
      %s33 = scalar_select %p30, %s32, %s21
      %p34 = scmp.ge.s32.totalorder %s33, 4
      %s35 = scalar_select %p34, 0, %s33
      %s36 = sadd.s32 1, %s20
      %s37 = scalar_select %p34, %s36, %s20
      %p38 = scmp.ge.s32.totalorder %s37, 2
      %s39 = scalar_select %p38, 0, %s37
      %s40 = ssub.s32 %s20, %s39
      %s41 = ssub.s32 %s21, %s35
      %s42 = sor.u32 %s40, %s41
      %s43 = ssub.s32 %s22, %s31
      %s44 = sor.u32 %s42, %s43
      %p45 = scmp.eq.s32.totalorder %s44, 0
      %s47 = sadd.s32 %s46, 1
      %s48 = scalar_select %p45, %s46, %s47
      %p51 = pneg %p45
      %p52 = scmp.eq.s32.totalorder %s13, 7
      %p53 = por %p51, %p52
      %p54 = scmp.ne.s32.totalorder %s46, %s49
      %p55 = scmp.eq.s32.totalorder %s13, 0
      %p56 = por %p54, %p55
      %p57 = scmp.ne.s32.totalorder %s46, %s49
      %p58 = scmp.eq.s32.totalorder %s18, 7
      %p59 = por %p57, %p58
      %p60 = scmp.ne.s32.totalorder %s49, %s50
      %p61 = scmp.eq.s32.totalorder %s18, 0
      %p62 = por %p60, %p61
      %p63 = scmp.ne.s32.totalorder %s49, %s50
      %p64 = scmp.eq.s32.totalorder %s19, 7
      %p65 = por %p63, %p64
      %p67 = scmp.ne.s32.totalorder %s50, %s66
      %p68 = scmp.eq.s32.totalorder %s19, 0
      %p69 = por %p67, %p68
      %s70 = ssub.s32 %s20, %s39
      %s71 = ssub.s32 %s21, %s35
      %s72 = sor.u32 %s70, %s71
      %s73 = ssub.s32 %s22, %s31
      %s74 = sor.u32 %s72, %s73
      %p75 = scmp.eq.s32.totalorder %s74, 0
      %s77 = sadd.s32 %s76, 1
      %s78 = scalar_select %p75, %s76, %s77
      %p81 = pneg %p75
      %p82 = scmp.eq.s32.totalorder %s13, 7
      %p83 = por %p81, %p82
      %p84 = scmp.ne.s32.totalorder %s76, %s79
      %p85 = scmp.eq.s32.totalorder %s13, 0
      %p86 = por %p84, %p85
      %p87 = scmp.ne.s32.totalorder %s76, %s79
      %p88 = scmp.eq.s32.totalorder %s18, 7
      %p89 = por %p87, %p88
      %p90 = scmp.ne.s32.totalorder %s79, %s80
      %p91 = scmp.eq.s32.totalorder %s18, 0
      %p92 = por %p90, %p91
      %p93 = scmp.ne.s32.totalorder %s79, %s80
      %p94 = scmp.eq.s32.totalorder %s19, 7
      %p95 = por %p93, %p94
      %p97 = scmp.ne.s32.totalorder %s80, %s96
      %p98 = scmp.eq.s32.totalorder %s19, 0
      %p99 = por %p97, %p98
      %p100 = scmp.le.s32.totalorder 1, %s13
      %p101 = scmp.lt.s32.totalorder %s13, 9
      %p102 = pnand %p100, %p101
      %p103 = pneg %p102
      // Predicated region
      $region9: #{run.1} parent=5 // pred_check
        _
      $region10: #{run.1} parent=5 // pred_check_branch
        %105 = sbr.rel (%p102) target = $region12
      $region11: #{run.1} parent=5 // pred_region
        %s106 = ssub.s32 %s13, 1
      $region12: #{run.1} parent=5 // pred_fallthru
        _
      %p107 = scmp.lt.s32.totalorder %s13, 8
      // Predicated region
      $region13: #{run.1} parent=5 // pred_check
        %p108 = pneg %p107
      $region14: #{run.1} parent=5 // pred_check_branch
        %110 = sbr.rel (%p108) target = $region16
      $region15: #{run.1} parent=5 // pred_region
        // Predicated region
        $region17: #{run.1} parent=15 // pred_check
          %p111 = pneg %p56
        $region18: #{run.1} parent=15 // pred_check_branch
          %113 = sbr.rel (%p111) target = $region20
        $region19: #{run.1} parent=15 // pred_region
          #allocation7 [shape = 'u32[6]{0}', space=smem, size = 0x18, scoped, tag = 'DMA stride descriptor']
          %s114 = sand.u32 %s46, 1
          %s115 = scalar_lea.sflag [#allocation3], %s114
          %s116 = sand.u32 %s46, 1
          %s117 = smul.addr %s116, 64
          %s118 = scalar_lea.vmem [#allocation2], %s117
          %s119 = smul.u32 2, %s22
          %121 = vsyncadd %s115, 0
          %s122 = smul.addr %s21, 2
          %s123 = sadd.s32 %s119, %s122
          %s124 = smul.addr %s20, 32
          %s125 = sadd.s32 %s123, %s124
          %s126 = smul.addr %s125, 8
          %s127 = scalar_lea.hbm %s0, %s126
          %s129 = sshll.u32 1, 14
          %s130 = sxor.u32 4294967295, %s129
          %s132 = sld [smem:[#allocation0]]
          %s133 = sadd.s32 2, %s132
          %s135 = sshll.u32 7, 26
          %s136 = sxor.u32 4294967295, %s135
          %s137 = sand.u32 0, %s136
          %s138 = sshll.u32 %s133, 26
          %s139 = sor.u32 %s137, %s138
          %s140 = sshll.u32 %s127, 4
          %s141 = int_to_ptr.hbm [resolvable:$true] %s140
          %s142 = sshll.u32 %s118, 4
          %s143 = int_to_ptr.vmem [resolvable:$true] %s142
          %149 = sst [smem:[#allocation7]] 1024
          %s150 = scalar_lea.smem [#allocation7], 1
          %151 = sst [smem:[%s150]] 256
          %s152 = scalar_lea.smem [#allocation7], 2
          %153 = sst [smem:[%s152]] 2
          %s154 = scalar_lea.smem [#allocation7], 3
          %155 = sst [smem:[%s154]] 128
          %s156 = scalar_lea.smem [#allocation7], 4
          %157 = sst [smem:[%s156]] 128
          %s158 = scalar_lea.smem [#allocation7], 5
          %159 = sst [smem:[%s158]] 8
          %161 = dma.general %s141, 1024, %s143, %s115, [#allocation6], [#allocation7], %s139, 0
        $region20: #{run.1} parent=15 // pred_fallthru
          _
      $region16: #{run.1} parent=5 // pred_fallthru
        _
      %p162 = scmp.le.s32.totalorder 1, %s13
      %p163 = scmp.lt.s32.totalorder %s13, 9
      %p164 = pnand %p162, %p163
      %p165 = pneg %p164
      // Predicated region
      $region21: #{run.1} parent=5 // pred_check
        _
      $region22: #{run.1} parent=5 // pred_check_branch
        %167 = sbr.rel (%p164) target = $region24
      $region23: #{run.1} parent=5 // pred_region
        %s168 = ssub.s32 %s13, 1
        %s169 = sand.u32 %s49, 1
        %s170 = scalar_lea.sflag [#allocation3], %s169
        %s171 = sand.u32 %s49, 1
        %s172 = smul.addr %s171, 64
        %s173 = scalar_lea.vmem [#allocation2], %s172
        // Predicated region
        $region25: #{run.1} parent=23 // pred_check
          %p174 = pneg %p62
        $region26: #{run.1} parent=23 // pred_check_branch
          %176 = sbr.rel (%p174) target = $region28
        $region27: #{run.1} parent=23 // pred_region
          %178 = dma.done %s170, 1024
        $region28: #{run.1} parent=23 // pred_fallthru
          _
        %s179 = sand.u32 %s49, 1
        %s180 = scalar_lea.sflag [#allocation3], %s179
        %s181 = sand.u32 %s49, 1
        %s182 = smul.addr %s181, 64
        %s183 = scalar_lea.vmem [#allocation2], %s182
        %p184 = pneg %p62
        %p185 = pneg %p59
        %p186 = pneg %p92
        %p187 = pneg %p89
        %s188 = sand.u32 %s79, 1
        %s189 = scalar_lea.sflag [#allocation4], %s188
        %s190 = sand.u32 %s79, 1
        %s191 = smul.addr %s190, 32
        %s192 = scalar_lea.vmem [#allocation5], %s191
        %s193 = smul.u32 2, %s25
        %s194 = smul.u32 4, %s25
        %v195 = vld [vmem:[%s173] sm:$0xff]
        %v196 = vld [vmem:[%s173 + $0x8] sm:$0xff]
        %s197 = scalar_lea.vmem %s173, 16 [#allocation2]
        %v198 = vld [vmem:[%s197] sm:$0xff]
        %v199 = vld [vmem:[%s197 + $0x8] sm:$0xff]
        %s200 = scalar_lea.vmem %s173, 32 [#allocation2]
        %v201 = vld [vmem:[%s200] sm:$0xff]
        %v202 = vld [vmem:[%s200 + $0x8] sm:$0xff]
        %s203 = scalar_lea.vmem %s173, 48 [#allocation2]
        %v204 = vld [vmem:[%s203] sm:$0xff]
        %v205 = vld [vmem:[%s203 + $0x8] sm:$0xff]
        %v206 = vadd.f32 %v195, %v204
        %v207 = vadd.f32 %v196, %v205
        %v208 = vmul.f32 %v206, 0.5
        %v209 = vmul.f32 %v207, 0.5
        %v210 = vadd.f32 %v198, %v201
        %v211 = vadd.f32 %v199, %v202
        %v212 = vmul.f32 %v210, 0.5
        %v213 = vmul.f32 %v211, 0.5
        %v214 = vsub.f32 %v195, %v204
        %v215 = vsub.f32 %v196, %v205
        %v216 = vmul.f32 %v214, 0.5
        %v217 = vmul.f32 %v215, 0.5
        %v218 = vsub.f32 %v198, %v201
        %v219 = vsub.f32 %v199, %v202
        %v220 = vmul.f32 %v218, 0.5
        %v221 = vmul.f32 %v219, 0.5
        %v222 = vsub.f32 %v208, %v212
        %v223 = vsub.f32 %v209, %v213
        %v224 = vadd.f32 %v216, %v220
        %v225 = vadd.f32 %v217, %v221
        %v226 = vsub.f32 %v216, %v220
        %v227 = vsub.f32 %v217, %v221
        %v228 = vadd.f32 %v208, %v212
        %v229 = vadd.f32 %v209, %v213
        %v230 = vperm.slane %v222, 0
        %v231 = vlaneseq
        %v232 = vshrl.u32 %v231, 7
        %234 = vset.pattern.permute.xlu0 %v232
        %235 = vperm.xlu0 %234, %v230
        %v236 = vpop.permute.xlu0 %235
        %v237 = vlaneseq
        %v238 = vshrl.u32 %v237, 7
        %v239 = vadd.s32 %v238, 8
        %240 = vset.pattern.permute.xlu0 %v239
        %241 = vperm.xlu0 %240, %v230
        %v242 = vpop.permute.xlu0 %241
        %v243 = vperm.slane %v222, 1
        %v244 = vlaneseq
        %v245 = vshrl.u32 %v244, 7
        %247 = vset.pattern.permute.xlu0 %v245
        %248 = vperm.xlu0 %247, %v243
        %v249 = vpop.permute.xlu0 %248
        %v250 = vlaneseq
        %v251 = vshrl.u32 %v250, 7
        %v252 = vadd.s32 %v251, 8
        %253 = vset.pattern.permute.xlu0 %v252
        %254 = vperm.xlu0 %253, %v243
        %v255 = vpop.permute.xlu0 %254
        %v256 = vperm.slane %v222, 2
        %v257 = vlaneseq
        %v258 = vshrl.u32 %v257, 7
        %260 = vset.pattern.permute.xlu0 %v258
        %261 = vperm.xlu0 %260, %v256
        %v262 = vpop.permute.xlu0 %261
        %v263 = vlaneseq
        %v264 = vshrl.u32 %v263, 7
        %v265 = vadd.s32 %v264, 8
        %266 = vset.pattern.permute.xlu0 %v265
        %267 = vperm.xlu0 %266, %v256
        %v268 = vpop.permute.xlu0 %267
        %v269 = vperm.slane %v222, 3
        %v270 = vlaneseq
        %v271 = vshrl.u32 %v270, 7
        %273 = vset.pattern.permute.xlu0 %v271
        %274 = vperm.xlu0 %273, %v269
        %v275 = vpop.permute.xlu0 %274
        %v276 = vlaneseq
        %v277 = vshrl.u32 %v276, 7
        %v278 = vadd.s32 %v277, 8
        %279 = vset.pattern.permute.xlu0 %v278
        %280 = vperm.xlu0 %279, %v269
        %v281 = vpop.permute.xlu0 %280
        %v282 = vperm.slane %v222, 4
        %v283 = vlaneseq
        %v284 = vshrl.u32 %v283, 7
        %286 = vset.pattern.permute.xlu0 %v284
        %287 = vperm.xlu0 %286, %v282
        %v288 = vpop.permute.xlu0 %287
        %v289 = vlaneseq
        %v290 = vshrl.u32 %v289, 7
        %v291 = vadd.s32 %v290, 8
        %292 = vset.pattern.permute.xlu0 %v291
        %293 = vperm.xlu0 %292, %v282
        %v294 = vpop.permute.xlu0 %293
        %v295 = vperm.slane %v222, 5
        %v296 = vlaneseq
        %v297 = vshrl.u32 %v296, 7
        %299 = vset.pattern.permute.xlu0 %v297
        %300 = vperm.xlu0 %299, %v295
        %v301 = vpop.permute.xlu0 %300
        %v302 = vlaneseq
        %v303 = vshrl.u32 %v302, 7
        %v304 = vadd.s32 %v303, 8
        %305 = vset.pattern.permute.xlu0 %v304
        %306 = vperm.xlu0 %305, %v295
        %v307 = vpop.permute.xlu0 %306
        %v308 = vperm.slane %v222, 6
        %v309 = vlaneseq
        %v310 = vshrl.u32 %v309, 7
        %312 = vset.pattern.permute.xlu0 %v310
        %313 = vperm.xlu0 %312, %v308
        %v314 = vpop.permute.xlu0 %313
        %v315 = vlaneseq
        %v316 = vshrl.u32 %v315, 7
        %v317 = vadd.s32 %v316, 8
        %318 = vset.pattern.permute.xlu0 %v317
        %319 = vperm.xlu0 %318, %v308
        %v320 = vpop.permute.xlu0 %319
        %v321 = vperm.slane %v222, 7
        %v322 = vlaneseq
        %v323 = vshrl.u32 %v322, 7
        %325 = vset.pattern.permute.xlu0 %v323
        %326 = vperm.xlu0 %325, %v321
        %v327 = vpop.permute.xlu0 %326
        %v328 = vlaneseq
        %v329 = vshrl.u32 %v328, 7
        %v330 = vadd.s32 %v329, 8
        %331 = vset.pattern.permute.xlu0 %v330
        %332 = vperm.xlu0 %331, %v321
        %v333 = vpop.permute.xlu0 %332
        %v334 = vperm.slane %v223, 0
        %v335 = vlaneseq
        %v336 = vshrl.u32 %v335, 7
        %338 = vset.pattern.permute.xlu0 %v336
        %339 = vperm.xlu0 %338, %v334
        %v340 = vpop.permute.xlu0 %339
        %v341 = vlaneseq
        %v342 = vshrl.u32 %v341, 7
        %v343 = vadd.s32 %v342, 8
        %344 = vset.pattern.permute.xlu0 %v343
        %345 = vperm.xlu0 %344, %v334
        %v346 = vpop.permute.xlu0 %345
        %v347 = vperm.slane %v223, 1
        %v348 = vlaneseq
        %v349 = vshrl.u32 %v348, 7
        %351 = vset.pattern.permute.xlu0 %v349
        %352 = vperm.xlu0 %351, %v347
        %v353 = vpop.permute.xlu0 %352
        %v354 = vlaneseq
        %v355 = vshrl.u32 %v354, 7
        %v356 = vadd.s32 %v355, 8
        %357 = vset.pattern.permute.xlu0 %v356
        %358 = vperm.xlu0 %357, %v347
        %v359 = vpop.permute.xlu0 %358
        %v360 = vperm.slane %v223, 2
        %v361 = vlaneseq
        %v362 = vshrl.u32 %v361, 7
        %364 = vset.pattern.permute.xlu0 %v362
        %365 = vperm.xlu0 %364, %v360
        %v366 = vpop.permute.xlu0 %365
        %v367 = vlaneseq
        %v368 = vshrl.u32 %v367, 7
        %v369 = vadd.s32 %v368, 8
        %370 = vset.pattern.permute.xlu0 %v369
        %371 = vperm.xlu0 %370, %v360
        %v372 = vpop.permute.xlu0 %371
        %v373 = vperm.slane %v223, 3
        %v374 = vlaneseq
        %v375 = vshrl.u32 %v374, 7
        %377 = vset.pattern.permute.xlu0 %v375
        %378 = vperm.xlu0 %377, %v373
        %v379 = vpop.permute.xlu0 %378
        %v380 = vlaneseq
        %v381 = vshrl.u32 %v380, 7
        %v382 = vadd.s32 %v381, 8
        %383 = vset.pattern.permute.xlu0 %v382
        %384 = vperm.xlu0 %383, %v373
        %v385 = vpop.permute.xlu0 %384
        %v386 = vperm.slane %v223, 4
        %v387 = vlaneseq
        %v388 = vshrl.u32 %v387, 7
        %390 = vset.pattern.permute.xlu0 %v388
        %391 = vperm.xlu0 %390, %v386
        %v392 = vpop.permute.xlu0 %391
        %v393 = vlaneseq
        %v394 = vshrl.u32 %v393, 7
        %v395 = vadd.s32 %v394, 8
        %396 = vset.pattern.permute.xlu0 %v395
        %397 = vperm.xlu0 %396, %v386
        %v398 = vpop.permute.xlu0 %397
        %v399 = vperm.slane %v223, 5
        %v400 = vlaneseq
        %v401 = vshrl.u32 %v400, 7
        %403 = vset.pattern.permute.xlu0 %v401
        %404 = vperm.xlu0 %403, %v399
        %v405 = vpop.permute.xlu0 %404
        %v406 = vlaneseq
        %v407 = vshrl.u32 %v406, 7
        %v408 = vadd.s32 %v407, 8
        %409 = vset.pattern.permute.xlu0 %v408
        %410 = vperm.xlu0 %409, %v399
        %v411 = vpop.permute.xlu0 %410
        %v412 = vperm.slane %v223, 6
        %v413 = vlaneseq
        %v414 = vshrl.u32 %v413, 7
        %416 = vset.pattern.permute.xlu0 %v414
        %417 = vperm.xlu0 %416, %v412
        %v418 = vpop.permute.xlu0 %417
        %v419 = vlaneseq
        %v420 = vshrl.u32 %v419, 7
        %v421 = vadd.s32 %v420, 8
        %422 = vset.pattern.permute.xlu0 %v421
        %423 = vperm.xlu0 %422, %v412
        %v424 = vpop.permute.xlu0 %423
        %v425 = vperm.slane %v223, 7
        %v426 = vlaneseq
        %v427 = vshrl.u32 %v426, 7
        %429 = vset.pattern.permute.xlu0 %v427
        %430 = vperm.xlu0 %429, %v425
        %v431 = vpop.permute.xlu0 %430
        %v432 = vlaneseq
        %v433 = vshrl.u32 %v432, 7
        %v434 = vadd.s32 %v433, 8
        %435 = vset.pattern.permute.xlu0 %v434
        %436 = vperm.xlu0 %435, %v425
        %v437 = vpop.permute.xlu0 %436
        %v438 = vperm.slane %v224, 0
        %v439 = vlaneseq
        %v440 = vshrl.u32 %v439, 7
        %442 = vset.pattern.permute.xlu0 %v440
        %443 = vperm.xlu0 %442, %v438
        %v444 = vpop.permute.xlu0 %443
        %v445 = vlaneseq
        %v446 = vshrl.u32 %v445, 7
        %v447 = vadd.s32 %v446, 8
        %448 = vset.pattern.permute.xlu0 %v447
        %449 = vperm.xlu0 %448, %v438
        %v450 = vpop.permute.xlu0 %449
        %v451 = vperm.slane %v224, 1
        %v452 = vlaneseq
        %v453 = vshrl.u32 %v452, 7
        %455 = vset.pattern.permute.xlu0 %v453
        %456 = vperm.xlu0 %455, %v451
        %v457 = vpop.permute.xlu0 %456
        %v458 = vlaneseq
        %v459 = vshrl.u32 %v458, 7
        %v460 = vadd.s32 %v459, 8
        %461 = vset.pattern.permute.xlu0 %v460
        %462 = vperm.xlu0 %461, %v451
        %v463 = vpop.permute.xlu0 %462
        %v464 = vperm.slane %v224, 2
        %v465 = vlaneseq
        %v466 = vshrl.u32 %v465, 7
        %468 = vset.pattern.permute.xlu0 %v466
        %469 = vperm.xlu0 %468, %v464
        %v470 = vpop.permute.xlu0 %469
        %v471 = vlaneseq
        %v472 = vshrl.u32 %v471, 7
        %v473 = vadd.s32 %v472, 8
        %474 = vset.pattern.permute.xlu0 %v473
        %475 = vperm.xlu0 %474, %v464
        %v476 = vpop.permute.xlu0 %475
        %v477 = vperm.slane %v224, 3
        %v478 = vlaneseq
        %v479 = vshrl.u32 %v478, 7
        %481 = vset.pattern.permute.xlu0 %v479
        %482 = vperm.xlu0 %481, %v477
        %v483 = vpop.permute.xlu0 %482
        %v484 = vlaneseq
        %v485 = vshrl.u32 %v484, 7
        %v486 = vadd.s32 %v485, 8
        %487 = vset.pattern.permute.xlu0 %v486
        %488 = vperm.xlu0 %487, %v477
        %v489 = vpop.permute.xlu0 %488
        %v490 = vperm.slane %v224, 4
        %v491 = vlaneseq
        %v492 = vshrl.u32 %v491, 7
        %494 = vset.pattern.permute.xlu0 %v492
        %495 = vperm.xlu0 %494, %v490
        %v496 = vpop.permute.xlu0 %495
        %v497 = vlaneseq
        %v498 = vshrl.u32 %v497, 7
        %v499 = vadd.s32 %v498, 8
        %500 = vset.pattern.permute.xlu0 %v499
        %501 = vperm.xlu0 %500, %v490
        %v502 = vpop.permute.xlu0 %501
        %v503 = vperm.slane %v224, 5
        %v504 = vlaneseq
        %v505 = vshrl.u32 %v504, 7
        %507 = vset.pattern.permute.xlu0 %v505
        %508 = vperm.xlu0 %507, %v503
        %v509 = vpop.permute.xlu0 %508
        %v510 = vlaneseq
        %v511 = vshrl.u32 %v510, 7
        %v512 = vadd.s32 %v511, 8
        %513 = vset.pattern.permute.xlu0 %v512
        %514 = vperm.xlu0 %513, %v503
        %v515 = vpop.permute.xlu0 %514
        %v516 = vperm.slane %v224, 6
        %v517 = vlaneseq
        %v518 = vshrl.u32 %v517, 7
        %520 = vset.pattern.permute.xlu0 %v518
        %521 = vperm.xlu0 %520, %v516
        %v522 = vpop.permute.xlu0 %521
        %v523 = vlaneseq
        %v524 = vshrl.u32 %v523, 7
        %v525 = vadd.s32 %v524, 8
        %526 = vset.pattern.permute.xlu0 %v525
        %527 = vperm.xlu0 %526, %v516
        %v528 = vpop.permute.xlu0 %527
        %v529 = vperm.slane %v224, 7
        %v530 = vlaneseq
        %v531 = vshrl.u32 %v530, 7
        %533 = vset.pattern.permute.xlu0 %v531
        %534 = vperm.xlu0 %533, %v529
        %v535 = vpop.permute.xlu0 %534
        %v536 = vlaneseq
        %v537 = vshrl.u32 %v536, 7
        %v538 = vadd.s32 %v537, 8
        %539 = vset.pattern.permute.xlu0 %v538
        %540 = vperm.xlu0 %539, %v529
        %v541 = vpop.permute.xlu0 %540
        %v542 = vperm.slane %v225, 0
        %v543 = vlaneseq
        %v544 = vshrl.u32 %v543, 7
        %546 = vset.pattern.permute.xlu0 %v544
        %547 = vperm.xlu0 %546, %v542
        %v548 = vpop.permute.xlu0 %547
        %v549 = vlaneseq
        %v550 = vshrl.u32 %v549, 7
        %v551 = vadd.s32 %v550, 8
        %552 = vset.pattern.permute.xlu0 %v551
        %553 = vperm.xlu0 %552, %v542
        %v554 = vpop.permute.xlu0 %553
        %v555 = vperm.slane %v225, 1
        %v556 = vlaneseq
        %v557 = vshrl.u32 %v556, 7
        %559 = vset.pattern.permute.xlu0 %v557
        %560 = vperm.xlu0 %559, %v555
        %v561 = vpop.permute.xlu0 %560
        %v562 = vlaneseq
        %v563 = vshrl.u32 %v562, 7
        %v564 = vadd.s32 %v563, 8
        %565 = vset.pattern.permute.xlu0 %v564
        %566 = vperm.xlu0 %565, %v555
        %v567 = vpop.permute.xlu0 %566
        %v568 = vperm.slane %v225, 2
        %v569 = vlaneseq
        %v570 = vshrl.u32 %v569, 7
        %572 = vset.pattern.permute.xlu0 %v570
        %573 = vperm.xlu0 %572, %v568
        %v574 = vpop.permute.xlu0 %573
        %v575 = vlaneseq
        %v576 = vshrl.u32 %v575, 7
        %v577 = vadd.s32 %v576, 8
        %578 = vset.pattern.permute.xlu0 %v577
        %579 = vperm.xlu0 %578, %v568
        %v580 = vpop.permute.xlu0 %579
        %v581 = vperm.slane %v225, 3
        %v582 = vlaneseq
        %v583 = vshrl.u32 %v582, 7
        %585 = vset.pattern.permute.xlu0 %v583
        %586 = vperm.xlu0 %585, %v581
        %v587 = vpop.permute.xlu0 %586
        %v588 = vlaneseq
        %v589 = vshrl.u32 %v588, 7
        %v590 = vadd.s32 %v589, 8
        %591 = vset.pattern.permute.xlu0 %v590
        %592 = vperm.xlu0 %591, %v581
        %v593 = vpop.permute.xlu0 %592
        %v594 = vperm.slane %v225, 4
        %v595 = vlaneseq
        %v596 = vshrl.u32 %v595, 7
        %598 = vset.pattern.permute.xlu0 %v596
        %599 = vperm.xlu0 %598, %v594
        %v600 = vpop.permute.xlu0 %599
        %v601 = vlaneseq
        %v602 = vshrl.u32 %v601, 7
        %v603 = vadd.s32 %v602, 8
        %604 = vset.pattern.permute.xlu0 %v603
        %605 = vperm.xlu0 %604, %v594
        %v606 = vpop.permute.xlu0 %605
        %v607 = vperm.slane %v225, 5
        %v608 = vlaneseq
        %v609 = vshrl.u32 %v608, 7
        %611 = vset.pattern.permute.xlu0 %v609
        %612 = vperm.xlu0 %611, %v607
        %v613 = vpop.permute.xlu0 %612
        %v614 = vlaneseq
        %v615 = vshrl.u32 %v614, 7
        %v616 = vadd.s32 %v615, 8
        %617 = vset.pattern.permute.xlu0 %v616
        %618 = vperm.xlu0 %617, %v607
        %v619 = vpop.permute.xlu0 %618
        %v620 = vperm.slane %v225, 6
        %v621 = vlaneseq
        %v622 = vshrl.u32 %v621, 7
        %624 = vset.pattern.permute.xlu0 %v622
        %625 = vperm.xlu0 %624, %v620
        %v626 = vpop.permute.xlu0 %625
        %v627 = vlaneseq
        %v628 = vshrl.u32 %v627, 7
        %v629 = vadd.s32 %v628, 8
        %630 = vset.pattern.permute.xlu0 %v629
        %631 = vperm.xlu0 %630, %v620
        %v632 = vpop.permute.xlu0 %631
        %v633 = vperm.slane %v225, 7
        %v634 = vlaneseq
        %v635 = vshrl.u32 %v634, 7
        %637 = vset.pattern.permute.xlu0 %v635
        %638 = vperm.xlu0 %637, %v633
        %v639 = vpop.permute.xlu0 %638
        %v640 = vlaneseq
        %v641 = vshrl.u32 %v640, 7
        %v642 = vadd.s32 %v641, 8
        %643 = vset.pattern.permute.xlu0 %v642
        %644 = vperm.xlu0 %643, %v633
        %v645 = vpop.permute.xlu0 %644
        %vm646 = vcmask 7168
        %v647 = vsel %vm646, %v236, %v444
        %v648 = vsel %vm646, %v242, %v450
        %v649 = vsel %vm646, %v249, %v457
        %v650 = vsel %vm646, %v255, %v463
        %v651 = vsel %vm646, %v262, %v470
        %v652 = vsel %vm646, %v268, %v476
        %v653 = vsel %vm646, %v275, %v483
        %v654 = vsel %vm646, %v281, %v489
        %v655 = vsel %vm646, %v288, %v496
        %v656 = vsel %vm646, %v294, %v502
        %v657 = vsel %vm646, %v301, %v509
        %v658 = vsel %vm646, %v307, %v515
        %v659 = vsel %vm646, %v314, %v522
        %v660 = vsel %vm646, %v320, %v528
        %v661 = vsel %vm646, %v327, %v535
        %v662 = vsel %vm646, %v333, %v541
        %v663 = vsel %vm646, %v340, %v548
        %v664 = vsel %vm646, %v346, %v554
        %v665 = vsel %vm646, %v353, %v561
        %v666 = vsel %vm646, %v359, %v567
        %v667 = vsel %vm646, %v366, %v574
        %v668 = vsel %vm646, %v372, %v580
        %v669 = vsel %vm646, %v379, %v587
        %v670 = vsel %vm646, %v385, %v593
        %v671 = vsel %vm646, %v392, %v600
        %v672 = vsel %vm646, %v398, %v606
        %v673 = vsel %vm646, %v405, %v613
        %v674 = vsel %vm646, %v411, %v619
        %v675 = vsel %vm646, %v418, %v626
        %v676 = vsel %vm646, %v424, %v632
        %v677 = vsel %vm646, %v431, %v639
        %v678 = vsel %vm646, %v437, %v645
        %v679 = vperm.slane %v226, 0
        %v680 = vlaneseq
        %v681 = vshrl.u32 %v680, 7
        %683 = vset.pattern.permute.xlu0 %v681
        %684 = vperm.xlu0 %683, %v679
        %v685 = vpop.permute.xlu0 %684
        %v686 = vlaneseq
        %v687 = vshrl.u32 %v686, 7
        %v688 = vadd.s32 %v687, 8
        %689 = vset.pattern.permute.xlu0 %v688
        %690 = vperm.xlu0 %689, %v679
        %v691 = vpop.permute.xlu0 %690
        %v692 = vperm.slane %v226, 1
        %v693 = vlaneseq
        %v694 = vshrl.u32 %v693, 7
        %696 = vset.pattern.permute.xlu0 %v694
        %697 = vperm.xlu0 %696, %v692
        %v698 = vpop.permute.xlu0 %697
        %v699 = vlaneseq
        %v700 = vshrl.u32 %v699, 7
        %v701 = vadd.s32 %v700, 8
        %702 = vset.pattern.permute.xlu0 %v701
        %703 = vperm.xlu0 %702, %v692
        %v704 = vpop.permute.xlu0 %703
        %v705 = vperm.slane %v226, 2
        %v706 = vlaneseq
        %v707 = vshrl.u32 %v706, 7
        %709 = vset.pattern.permute.xlu0 %v707
        %710 = vperm.xlu0 %709, %v705
        %v711 = vpop.permute.xlu0 %710
        %v712 = vlaneseq
        %v713 = vshrl.u32 %v712, 7
        %v714 = vadd.s32 %v713, 8
        %715 = vset.pattern.permute.xlu0 %v714
        %716 = vperm.xlu0 %715, %v705
        %v717 = vpop.permute.xlu0 %716
        %v718 = vperm.slane %v226, 3
        %v719 = vlaneseq
        %v720 = vshrl.u32 %v719, 7
        %722 = vset.pattern.permute.xlu0 %v720
        %723 = vperm.xlu0 %722, %v718
        %v724 = vpop.permute.xlu0 %723
        %v725 = vlaneseq
        %v726 = vshrl.u32 %v725, 7
        %v727 = vadd.s32 %v726, 8
        %728 = vset.pattern.permute.xlu0 %v727
        %729 = vperm.xlu0 %728, %v718
        %v730 = vpop.permute.xlu0 %729
        %v731 = vperm.slane %v226, 4
        %v732 = vlaneseq
        %v733 = vshrl.u32 %v732, 7
        %735 = vset.pattern.permute.xlu0 %v733
        %736 = vperm.xlu0 %735, %v731
        %v737 = vpop.permute.xlu0 %736
        %v738 = vlaneseq
        %v739 = vshrl.u32 %v738, 7
        %v740 = vadd.s32 %v739, 8
        %741 = vset.pattern.permute.xlu0 %v740
        %742 = vperm.xlu0 %741, %v731
        %v743 = vpop.permute.xlu0 %742
        %v744 = vperm.slane %v226, 5
        %v745 = vlaneseq
        %v746 = vshrl.u32 %v745, 7
        %748 = vset.pattern.permute.xlu0 %v746
        %749 = vperm.xlu0 %748, %v744
        %v750 = vpop.permute.xlu0 %749
        %v751 = vlaneseq
        %v752 = vshrl.u32 %v751, 7
        %v753 = vadd.s32 %v752, 8
        %754 = vset.pattern.permute.xlu0 %v753
        %755 = vperm.xlu0 %754, %v744
        %v756 = vpop.permute.xlu0 %755
        %v757 = vperm.slane %v226, 6
        %v758 = vlaneseq
        %v759 = vshrl.u32 %v758, 7
        %761 = vset.pattern.permute.xlu0 %v759
        %762 = vperm.xlu0 %761, %v757
        %v763 = vpop.permute.xlu0 %762
        %v764 = vlaneseq
        %v765 = vshrl.u32 %v764, 7
        %v766 = vadd.s32 %v765, 8
        %767 = vset.pattern.permute.xlu0 %v766
        %768 = vperm.xlu0 %767, %v757
        %v769 = vpop.permute.xlu0 %768
        %v770 = vperm.slane %v226, 7
        %v771 = vlaneseq
        %v772 = vshrl.u32 %v771, 7
        %774 = vset.pattern.permute.xlu0 %v772
        %775 = vperm.xlu0 %774, %v770
        %v776 = vpop.permute.xlu0 %775
        %v777 = vlaneseq
        %v778 = vshrl.u32 %v777, 7
        %v779 = vadd.s32 %v778, 8
        %780 = vset.pattern.permute.xlu0 %v779
        %781 = vperm.xlu0 %780, %v770
        %v782 = vpop.permute.xlu0 %781
        %v783 = vperm.slane %v227, 0
        %v784 = vlaneseq
        %v785 = vshrl.u32 %v784, 7
        %787 = vset.pattern.permute.xlu0 %v785
        %788 = vperm.xlu0 %787, %v783
        %v789 = vpop.permute.xlu0 %788
        %v790 = vlaneseq
        %v791 = vshrl.u32 %v790, 7
        %v792 = vadd.s32 %v791, 8
        %793 = vset.pattern.permute.xlu0 %v792
        %794 = vperm.xlu0 %793, %v783
        %v795 = vpop.permute.xlu0 %794
        %v796 = vperm.slane %v227, 1
        %v797 = vlaneseq
        %v798 = vshrl.u32 %v797, 7
        %800 = vset.pattern.permute.xlu0 %v798
        %801 = vperm.xlu0 %800, %v796
        %v802 = vpop.permute.xlu0 %801
        %v803 = vlaneseq
        %v804 = vshrl.u32 %v803, 7
        %v805 = vadd.s32 %v804, 8
        %806 = vset.pattern.permute.xlu0 %v805
        %807 = vperm.xlu0 %806, %v796
        %v808 = vpop.permute.xlu0 %807
        %v809 = vperm.slane %v227, 2
        %v810 = vlaneseq
        %v811 = vshrl.u32 %v810, 7
        %813 = vset.pattern.permute.xlu0 %v811
        %814 = vperm.xlu0 %813, %v809
        %v815 = vpop.permute.xlu0 %814
        %v816 = vlaneseq
        %v817 = vshrl.u32 %v816, 7
        %v818 = vadd.s32 %v817, 8
        %819 = vset.pattern.permute.xlu0 %v818
        %820 = vperm.xlu0 %819, %v809
        %v821 = vpop.permute.xlu0 %820
        %v822 = vperm.slane %v227, 3
        %v823 = vlaneseq
        %v824 = vshrl.u32 %v823, 7
        %826 = vset.pattern.permute.xlu0 %v824
        %827 = vperm.xlu0 %826, %v822
        %v828 = vpop.permute.xlu0 %827
        %v829 = vlaneseq
        %v830 = vshrl.u32 %v829, 7
        %v831 = vadd.s32 %v830, 8
        %832 = vset.pattern.permute.xlu0 %v831
        %833 = vperm.xlu0 %832, %v822
        %v834 = vpop.permute.xlu0 %833
        %v835 = vperm.slane %v227, 4
        %v836 = vlaneseq
        %v837 = vshrl.u32 %v836, 7
        %839 = vset.pattern.permute.xlu0 %v837
        %840 = vperm.xlu0 %839, %v835
        %v841 = vpop.permute.xlu0 %840
        %v842 = vlaneseq
        %v843 = vshrl.u32 %v842, 7
        %v844 = vadd.s32 %v843, 8
        %845 = vset.pattern.permute.xlu0 %v844
        %846 = vperm.xlu0 %845, %v835
        %v847 = vpop.permute.xlu0 %846
        %v848 = vperm.slane %v227, 5
        %v849 = vlaneseq
        %v850 = vshrl.u32 %v849, 7
        %852 = vset.pattern.permute.xlu0 %v850
        %853 = vperm.xlu0 %852, %v848
        %v854 = vpop.permute.xlu0 %853
        %v855 = vlaneseq
        %v856 = vshrl.u32 %v855, 7
        %v857 = vadd.s32 %v856, 8
        %858 = vset.pattern.permute.xlu0 %v857
        %859 = vperm.xlu0 %858, %v848
        %v860 = vpop.permute.xlu0 %859
        %v861 = vperm.slane %v227, 6
        %v862 = vlaneseq
        %v863 = vshrl.u32 %v862, 7
        %865 = vset.pattern.permute.xlu0 %v863
        %866 = vperm.xlu0 %865, %v861
        %v867 = vpop.permute.xlu0 %866
        %v868 = vlaneseq
        %v869 = vshrl.u32 %v868, 7
        %v870 = vadd.s32 %v869, 8
        %871 = vset.pattern.permute.xlu0 %v870
        %872 = vperm.xlu0 %871, %v861
        %v873 = vpop.permute.xlu0 %872
        %v874 = vperm.slane %v227, 7
        %v875 = vlaneseq
        %v876 = vshrl.u32 %v875, 7
        %878 = vset.pattern.permute.xlu0 %v876
        %879 = vperm.xlu0 %878, %v874
        %v880 = vpop.permute.xlu0 %879
        %v881 = vlaneseq
        %v882 = vshrl.u32 %v881, 7
        %v883 = vadd.s32 %v882, 8
        %884 = vset.pattern.permute.xlu0 %v883
        %885 = vperm.xlu0 %884, %v874
        %v886 = vpop.permute.xlu0 %885
        %v887 = vperm.slane %v228, 0
        %v888 = vlaneseq
        %v889 = vshrl.u32 %v888, 7
        %891 = vset.pattern.permute.xlu0 %v889
        %892 = vperm.xlu0 %891, %v887
        %v893 = vpop.permute.xlu0 %892
        %v894 = vlaneseq
        %v895 = vshrl.u32 %v894, 7
        %v896 = vadd.s32 %v895, 8
        %897 = vset.pattern.permute.xlu0 %v896
        %898 = vperm.xlu0 %897, %v887
        %v899 = vpop.permute.xlu0 %898
        %v900 = vperm.slane %v228, 1
        %v901 = vlaneseq
        %v902 = vshrl.u32 %v901, 7
        %904 = vset.pattern.permute.xlu0 %v902
        %905 = vperm.xlu0 %904, %v900
        %v906 = vpop.permute.xlu0 %905
        %v907 = vlaneseq
        %v908 = vshrl.u32 %v907, 7
        %v909 = vadd.s32 %v908, 8
        %910 = vset.pattern.permute.xlu0 %v909
        %911 = vperm.xlu0 %910, %v900
        %v912 = vpop.permute.xlu0 %911
        %v913 = vperm.slane %v228, 2
        %v914 = vlaneseq
        %v915 = vshrl.u32 %v914, 7
        %917 = vset.pattern.permute.xlu0 %v915
        %918 = vperm.xlu0 %917, %v913
        %v919 = vpop.permute.xlu0 %918
        %v920 = vlaneseq
        %v921 = vshrl.u32 %v920, 7
        %v922 = vadd.s32 %v921, 8
        %923 = vset.pattern.permute.xlu0 %v922
        %924 = vperm.xlu0 %923, %v913
        %v925 = vpop.permute.xlu0 %924
        %v926 = vperm.slane %v228, 3
        %v927 = vlaneseq
        %v928 = vshrl.u32 %v927, 7
        %930 = vset.pattern.permute.xlu0 %v928
        %931 = vperm.xlu0 %930, %v926
        %v932 = vpop.permute.xlu0 %931
        %v933 = vlaneseq
        %v934 = vshrl.u32 %v933, 7
        %v935 = vadd.s32 %v934, 8
        %936 = vset.pattern.permute.xlu0 %v935
        %937 = vperm.xlu0 %936, %v926
        %v938 = vpop.permute.xlu0 %937
        %v939 = vperm.slane %v228, 4
        %v940 = vlaneseq
        %v941 = vshrl.u32 %v940, 7
        %943 = vset.pattern.permute.xlu0 %v941
        %944 = vperm.xlu0 %943, %v939
        %v945 = vpop.permute.xlu0 %944
        %v946 = vlaneseq
        %v947 = vshrl.u32 %v946, 7
        %v948 = vadd.s32 %v947, 8
        %949 = vset.pattern.permute.xlu0 %v948
        %950 = vperm.xlu0 %949, %v939
        %v951 = vpop.permute.xlu0 %950
        %v952 = vperm.slane %v228, 5
        %v953 = vlaneseq
        %v954 = vshrl.u32 %v953, 7
        %956 = vset.pattern.permute.xlu0 %v954
        %957 = vperm.xlu0 %956, %v952
        %v958 = vpop.permute.xlu0 %957
        %v959 = vlaneseq
        %v960 = vshrl.u32 %v959, 7
        %v961 = vadd.s32 %v960, 8
        %962 = vset.pattern.permute.xlu0 %v961
        %963 = vperm.xlu0 %962, %v952
        %v964 = vpop.permute.xlu0 %963
        %v965 = vperm.slane %v228, 6
        %v966 = vlaneseq
        %v967 = vshrl.u32 %v966, 7
        %969 = vset.pattern.permute.xlu0 %v967
        %970 = vperm.xlu0 %969, %v965
        %v971 = vpop.permute.xlu0 %970
        %v972 = vlaneseq
        %v973 = vshrl.u32 %v972, 7
        %v974 = vadd.s32 %v973, 8
        %975 = vset.pattern.permute.xlu0 %v974
        %976 = vperm.xlu0 %975, %v965
        %v977 = vpop.permute.xlu0 %976
        %v978 = vperm.slane %v228, 7
        %v979 = vlaneseq
        %v980 = vshrl.u32 %v979, 7
        %982 = vset.pattern.permute.xlu0 %v980
        %983 = vperm.xlu0 %982, %v978
        %v984 = vpop.permute.xlu0 %983
        %v985 = vlaneseq
        %v986 = vshrl.u32 %v985, 7
        %v987 = vadd.s32 %v986, 8
        %988 = vset.pattern.permute.xlu0 %v987
        %989 = vperm.xlu0 %988, %v978
        %v990 = vpop.permute.xlu0 %989
        %v991 = vperm.slane %v229, 0
        %v992 = vlaneseq
        %v993 = vshrl.u32 %v992, 7
        %995 = vset.pattern.permute.xlu0 %v993
        %996 = vperm.xlu0 %995, %v991
        %v997 = vpop.permute.xlu0 %996
        %v998 = vlaneseq
        %v999 = vshrl.u32 %v998, 7
        %v1000 = vadd.s32 %v999, 8
        %1001 = vset.pattern.permute.xlu0 %v1000
        %1002 = vperm.xlu0 %1001, %v991
        %v1003 = vpop.permute.xlu0 %1002
        %v1004 = vperm.slane %v229, 1
        %v1005 = vlaneseq
        %v1006 = vshrl.u32 %v1005, 7
        %1008 = vset.pattern.permute.xlu0 %v1006
        %1009 = vperm.xlu0 %1008, %v1004
        %v1010 = vpop.permute.xlu0 %1009
        %v1011 = vlaneseq
        %v1012 = vshrl.u32 %v1011, 7
        %v1013 = vadd.s32 %v1012, 8
        %1014 = vset.pattern.permute.xlu0 %v1013
        %1015 = vperm.xlu0 %1014, %v1004
        %v1016 = vpop.permute.xlu0 %1015
        %v1017 = vperm.slane %v229, 2
        %v1018 = vlaneseq
        %v1019 = vshrl.u32 %v1018, 7
        %1021 = vset.pattern.permute.xlu0 %v1019
        %1022 = vperm.xlu0 %1021, %v1017
        %v1023 = vpop.permute.xlu0 %1022
        %v1024 = vlaneseq
        %v1025 = vshrl.u32 %v1024, 7
        %v1026 = vadd.s32 %v1025, 8
        %1027 = vset.pattern.permute.xlu0 %v1026
        %1028 = vperm.xlu0 %1027, %v1017
        %v1029 = vpop.permute.xlu0 %1028
        %v1030 = vperm.slane %v229, 3
        %v1031 = vlaneseq
        %v1032 = vshrl.u32 %v1031, 7
        %1034 = vset.pattern.permute.xlu0 %v1032
        %1035 = vperm.xlu0 %1034, %v1030
        %v1036 = vpop.permute.xlu0 %1035
        %v1037 = vlaneseq
        %v1038 = vshrl.u32 %v1037, 7
        %v1039 = vadd.s32 %v1038, 8
        %1040 = vset.pattern.permute.xlu0 %v1039
        %1041 = vperm.xlu0 %1040, %v1030
        %v1042 = vpop.permute.xlu0 %1041
        %v1043 = vperm.slane %v229, 4
        %v1044 = vlaneseq
        %v1045 = vshrl.u32 %v1044, 7
        %1047 = vset.pattern.permute.xlu0 %v1045
        %1048 = vperm.xlu0 %1047, %v1043
        %v1049 = vpop.permute.xlu0 %1048
        %v1050 = vlaneseq
        %v1051 = vshrl.u32 %v1050, 7
        %v1052 = vadd.s32 %v1051, 8
        %1053 = vset.pattern.permute.xlu0 %v1052
        %1054 = vperm.xlu0 %1053, %v1043
        %v1055 = vpop.permute.xlu0 %1054
        %v1056 = vperm.slane %v229, 5
        %v1057 = vlaneseq
        %v1058 = vshrl.u32 %v1057, 7
        %1060 = vset.pattern.permute.xlu0 %v1058
        %1061 = vperm.xlu0 %1060, %v1056
        %v1062 = vpop.permute.xlu0 %1061
        %v1063 = vlaneseq
        %v1064 = vshrl.u32 %v1063, 7
        %v1065 = vadd.s32 %v1064, 8
        %1066 = vset.pattern.permute.xlu0 %v1065
        %1067 = vperm.xlu0 %1066, %v1056
        %v1068 = vpop.permute.xlu0 %1067
        %v1069 = vperm.slane %v229, 6
        %v1070 = vlaneseq
        %v1071 = vshrl.u32 %v1070, 7
        %1073 = vset.pattern.permute.xlu0 %v1071
        %1074 = vperm.xlu0 %1073, %v1069
        %v1075 = vpop.permute.xlu0 %1074
        %v1076 = vlaneseq
        %v1077 = vshrl.u32 %v1076, 7
        %v1078 = vadd.s32 %v1077, 8
        %1079 = vset.pattern.permute.xlu0 %v1078
        %1080 = vperm.xlu0 %1079, %v1069
        %v1081 = vpop.permute.xlu0 %1080
        %v1082 = vperm.slane %v229, 7
        %v1083 = vlaneseq
        %v1084 = vshrl.u32 %v1083, 7
        %1086 = vset.pattern.permute.xlu0 %v1084
        %1087 = vperm.xlu0 %1086, %v1082
        %v1088 = vpop.permute.xlu0 %1087
        %v1089 = vlaneseq
        %v1090 = vshrl.u32 %v1089, 7
        %v1091 = vadd.s32 %v1090, 8
        %1092 = vset.pattern.permute.xlu0 %v1091
        %1093 = vperm.xlu0 %1092, %v1082
        %v1094 = vpop.permute.xlu0 %1093
        %v1095 = vsel %vm646, %v685, %v893
        %v1096 = vsel %vm646, %v691, %v899
        %v1097 = vsel %vm646, %v698, %v906
        %v1098 = vsel %vm646, %v704, %v912
        %v1099 = vsel %vm646, %v711, %v919
        %v1100 = vsel %vm646, %v717, %v925
        %v1101 = vsel %vm646, %v724, %v932
        %v1102 = vsel %vm646, %v730, %v938
        %v1103 = vsel %vm646, %v737, %v945
        %v1104 = vsel %vm646, %v743, %v951
        %v1105 = vsel %vm646, %v750, %v958
        %v1106 = vsel %vm646, %v756, %v964
        %v1107 = vsel %vm646, %v763, %v971
        %v1108 = vsel %vm646, %v769, %v977
        %v1109 = vsel %vm646, %v776, %v984
        %v1110 = vsel %vm646, %v782, %v990
        %v1111 = vsel %vm646, %v789, %v997
        %v1112 = vsel %vm646, %v795, %v1003
        %v1113 = vsel %vm646, %v802, %v1010
        %v1114 = vsel %vm646, %v808, %v1016
        %v1115 = vsel %vm646, %v815, %v1023
        %v1116 = vsel %vm646, %v821, %v1029
        %v1117 = vsel %vm646, %v828, %v1036
        %v1118 = vsel %vm646, %v834, %v1042
        %v1119 = vsel %vm646, %v841, %v1049
        %v1120 = vsel %vm646, %v847, %v1055
        %v1121 = vsel %vm646, %v854, %v1062
        %v1122 = vsel %vm646, %v860, %v1068
        %v1123 = vsel %vm646, %v867, %v1075
        %v1124 = vsel %vm646, %v873, %v1081
        %v1125 = vsel %vm646, %v880, %v1088
        %v1126 = vsel %vm646, %v886, %v1094
        %v1127 = vrot.slane %v647, 4
        %vm1128 = vcmask 1047556
        %v1129 = vsel %vm1128, 0.0, %v1127
        %v1131 = vunpack.c.l.s4 1983009808
        %v1132 = vunpack.c.0.s8 %v1131
        %v1133 = vperm.slane %v647, %v1132
        %v1135 = vunpack.c.l.s4 1983009808
        %v1136 = vunpack.c.0.s8 %v1135
        %v1137 = vperm.slane %v1129, %v1136
        %v1138 = vrot.slane %v1133, 4
        %v1139 = vsel %vm1128, 0.0, %v1138
        %v1141 = vunpack.c.l.s4 1934713408
        %v1142 = vunpack.c.0.s8 %v1141
        %v1143 = vperm.slane %v1133, %v1142
        %v1145 = vunpack.c.l.s4 1934713408
        %v1146 = vunpack.c.0.s8 %v1145
        %v1147 = vperm.slane %v1139, %v1146
        %v1148 = vrot.slane %v1137, 4
        %v1149 = vsel %vm1128, 0.0, %v1148
        %v1151 = vunpack.c.l.s4 1934713408
        %v1152 = vunpack.c.0.s8 %v1151
        %v1153 = vperm.slane %v1137, %v1152
        %v1155 = vunpack.c.l.s4 1934713408
        %v1156 = vunpack.c.0.s8 %v1155
        %v1157 = vperm.slane %v1149, %v1156
        %v1158 = vrot.slane %v1143, 4
        %v1159 = vsel %vm1128, 0.0, %v1158
        %v1160 = vrot.slane %v1147, 4
        %v1161 = vsel %vm1128, 0.0, %v1160
        %v1162 = vrot.slane %v1153, 4
        %v1163 = vsel %vm1128, 0.0, %v1162
        %v1164 = vrot.slane %v1157, 4
        %v1165 = vsel %vm1128, 0.0, %v1164
        %v1166 = vrot.slane %v648, 4
        %v1167 = vsel %vm1128, 0.0, %v1166
        %v1169 = vunpack.c.l.s4 1983009808
        %v1170 = vunpack.c.0.s8 %v1169
        %v1171 = vperm.slane %v648, %v1170
        %v1173 = vunpack.c.l.s4 1983009808
        %v1174 = vunpack.c.0.s8 %v1173
        %v1175 = vperm.slane %v1167, %v1174
        %v1176 = vrot.slane %v1171, 4
        %v1177 = vsel %vm1128, 0.0, %v1176
        %v1179 = vunpack.c.l.s4 1934713408
        %v1180 = vunpack.c.0.s8 %v1179
        %v1181 = vperm.slane %v1171, %v1180
        %v1183 = vunpack.c.l.s4 1934713408
        %v1184 = vunpack.c.0.s8 %v1183
        %v1185 = vperm.slane %v1177, %v1184
        %v1186 = vrot.slane %v1175, 4
        %v1187 = vsel %vm1128, 0.0, %v1186
        %v1189 = vunpack.c.l.s4 1934713408
        %v1190 = vunpack.c.0.s8 %v1189
        %v1191 = vperm.slane %v1175, %v1190
        %v1193 = vunpack.c.l.s4 1934713408
        %v1194 = vunpack.c.0.s8 %v1193
        %v1195 = vperm.slane %v1187, %v1194
        %v1196 = vrot.slane %v1181, 4
        %v1197 = vsel %vm1128, 0.0, %v1196
        %v1198 = vrot.slane %v1185, 4
        %v1199 = vsel %vm1128, 0.0, %v1198
        %v1200 = vrot.slane %v1191, 4
        %v1201 = vsel %vm1128, 0.0, %v1200
        %v1202 = vrot.slane %v1195, 4
        %v1203 = vsel %vm1128, 0.0, %v1202
        %v1204 = vrot.slane %v649, 4
        %v1205 = vsel %vm1128, 0.0, %v1204
        %v1207 = vunpack.c.l.s4 1983009808
        %v1208 = vunpack.c.0.s8 %v1207
        %v1209 = vperm.slane %v649, %v1208
        %v1211 = vunpack.c.l.s4 1983009808
        %v1212 = vunpack.c.0.s8 %v1211
        %v1213 = vperm.slane %v1205, %v1212
        %v1214 = vrot.slane %v1209, 4
        %v1215 = vsel %vm1128, 0.0, %v1214
        %v1217 = vunpack.c.l.s4 1934713408
        %v1218 = vunpack.c.0.s8 %v1217
        %v1219 = vperm.slane %v1209, %v1218
        %v1221 = vunpack.c.l.s4 1934713408
        %v1222 = vunpack.c.0.s8 %v1221
        %v1223 = vperm.slane %v1215, %v1222
        %v1224 = vrot.slane %v1213, 4
        %v1225 = vsel %vm1128, 0.0, %v1224
        %v1227 = vunpack.c.l.s4 1934713408
        %v1228 = vunpack.c.0.s8 %v1227
        %v1229 = vperm.slane %v1213, %v1228
        %v1231 = vunpack.c.l.s4 1934713408
        %v1232 = vunpack.c.0.s8 %v1231
        %v1233 = vperm.slane %v1225, %v1232
        %v1234 = vrot.slane %v1219, 4
        %v1235 = vsel %vm1128, 0.0, %v1234
        %v1236 = vrot.slane %v1223, 4
        %v1237 = vsel %vm1128, 0.0, %v1236
        %v1238 = vrot.slane %v1229, 4
        %v1239 = vsel %vm1128, 0.0, %v1238
        %v1240 = vrot.slane %v1233, 4
        %v1241 = vsel %vm1128, 0.0, %v1240
        %v1242 = vrot.slane %v650, 4
        %v1243 = vsel %vm1128, 0.0, %v1242
        %v1245 = vunpack.c.l.s4 1983009808
        %v1246 = vunpack.c.0.s8 %v1245
        %v1247 = vperm.slane %v650, %v1246
        %v1249 = vunpack.c.l.s4 1983009808
        %v1250 = vunpack.c.0.s8 %v1249
        %v1251 = vperm.slane %v1243, %v1250
        %v1252 = vrot.slane %v1247, 4
        %v1253 = vsel %vm1128, 0.0, %v1252
        %v1255 = vunpack.c.l.s4 1934713408
        %v1256 = vunpack.c.0.s8 %v1255
        %v1257 = vperm.slane %v1247, %v1256
        %v1259 = vunpack.c.l.s4 1934713408
        %v1260 = vunpack.c.0.s8 %v1259
        %v1261 = vperm.slane %v1253, %v1260
        %v1262 = vrot.slane %v1251, 4
        %v1263 = vsel %vm1128, 0.0, %v1262
        %v1265 = vunpack.c.l.s4 1934713408
        %v1266 = vunpack.c.0.s8 %v1265
        %v1267 = vperm.slane %v1251, %v1266
        %v1269 = vunpack.c.l.s4 1934713408
        %v1270 = vunpack.c.0.s8 %v1269
        %v1271 = vperm.slane %v1263, %v1270
        %v1272 = vrot.slane %v1257, 4
        %v1273 = vsel %vm1128, 0.0, %v1272
        %v1274 = vrot.slane %v1261, 4
        %v1275 = vsel %vm1128, 0.0, %v1274
        %v1276 = vrot.slane %v1267, 4
        %v1277 = vsel %vm1128, 0.0, %v1276
        %v1278 = vrot.slane %v1271, 4
        %v1279 = vsel %vm1128, 0.0, %v1278
        %v1280 = vrot.slane %v651, 4
        %v1281 = vsel %vm1128, 0.0, %v1280
        %v1283 = vunpack.c.l.s4 1983009808
        %v1284 = vunpack.c.0.s8 %v1283
        %v1285 = vperm.slane %v651, %v1284
        %v1287 = vunpack.c.l.s4 1983009808
        %v1288 = vunpack.c.0.s8 %v1287
        %v1289 = vperm.slane %v1281, %v1288
        %v1290 = vrot.slane %v1285, 4
        %v1291 = vsel %vm1128, 0.0, %v1290
        %v1293 = vunpack.c.l.s4 1934713408
        %v1294 = vunpack.c.0.s8 %v1293
        %v1295 = vperm.slane %v1285, %v1294
        %v1297 = vunpack.c.l.s4 1934713408
        %v1298 = vunpack.c.0.s8 %v1297
        %v1299 = vperm.slane %v1291, %v1298
        %v1300 = vrot.slane %v1289, 4
        %v1301 = vsel %vm1128, 0.0, %v1300
        %v1303 = vunpack.c.l.s4 1934713408
        %v1304 = vunpack.c.0.s8 %v1303
        %v1305 = vperm.slane %v1289, %v1304
        %v1307 = vunpack.c.l.s4 1934713408
        %v1308 = vunpack.c.0.s8 %v1307
        %v1309 = vperm.slane %v1301, %v1308
        %v1310 = vrot.slane %v1295, 4
        %v1311 = vsel %vm1128, 0.0, %v1310
        %v1312 = vrot.slane %v1299, 4
        %v1313 = vsel %vm1128, 0.0, %v1312
        %v1314 = vrot.slane %v1305, 4
        %v1315 = vsel %vm1128, 0.0, %v1314
        %v1316 = vrot.slane %v1309, 4
        %v1317 = vsel %vm1128, 0.0, %v1316
        %v1318 = vrot.slane %v652, 4
        %v1319 = vsel %vm1128, 0.0, %v1318
        %v1321 = vunpack.c.l.s4 1983009808
        %v1322 = vunpack.c.0.s8 %v1321
        %v1323 = vperm.slane %v652, %v1322
        %v1325 = vunpack.c.l.s4 1983009808
        %v1326 = vunpack.c.0.s8 %v1325
        %v1327 = vperm.slane %v1319, %v1326
        %v1328 = vrot.slane %v1323, 4
        %v1329 = vsel %vm1128, 0.0, %v1328
        %v1331 = vunpack.c.l.s4 1934713408
        %v1332 = vunpack.c.0.s8 %v1331
        %v1333 = vperm.slane %v1323, %v1332
        %v1335 = vunpack.c.l.s4 1934713408
        %v1336 = vunpack.c.0.s8 %v1335
        %v1337 = vperm.slane %v1329, %v1336
        %v1338 = vrot.slane %v1327, 4
        %v1339 = vsel %vm1128, 0.0, %v1338
        %v1341 = vunpack.c.l.s4 1934713408
        %v1342 = vunpack.c.0.s8 %v1341
        %v1343 = vperm.slane %v1327, %v1342
        %v1345 = vunpack.c.l.s4 1934713408
        %v1346 = vunpack.c.0.s8 %v1345
        %v1347 = vperm.slane %v1339, %v1346
        %v1348 = vrot.slane %v1333, 4
        %v1349 = vsel %vm1128, 0.0, %v1348
        %v1350 = vrot.slane %v1337, 4
        %v1351 = vsel %vm1128, 0.0, %v1350
        %v1352 = vrot.slane %v1343, 4
        %v1353 = vsel %vm1128, 0.0, %v1352
        %v1354 = vrot.slane %v1347, 4
        %v1355 = vsel %vm1128, 0.0, %v1354
        %v1356 = vrot.slane %v653, 4
        %v1357 = vsel %vm1128, 0.0, %v1356
        %v1359 = vunpack.c.l.s4 1983009808
        %v1360 = vunpack.c.0.s8 %v1359
        %v1361 = vperm.slane %v653, %v1360
        %v1363 = vunpack.c.l.s4 1983009808
        %v1364 = vunpack.c.0.s8 %v1363
        %v1365 = vperm.slane %v1357, %v1364
        %v1366 = vrot.slane %v1361, 4
        %v1367 = vsel %vm1128, 0.0, %v1366
        %v1369 = vunpack.c.l.s4 1934713408
        %v1370 = vunpack.c.0.s8 %v1369
        %v1371 = vperm.slane %v1361, %v1370
        %v1373 = vunpack.c.l.s4 1934713408
        %v1374 = vunpack.c.0.s8 %v1373
        %v1375 = vperm.slane %v1367, %v1374
        %v1376 = vrot.slane %v1365, 4
        %v1377 = vsel %vm1128, 0.0, %v1376
        %v1379 = vunpack.c.l.s4 1934713408
        %v1380 = vunpack.c.0.s8 %v1379
        %v1381 = vperm.slane %v1365, %v1380
        %v1383 = vunpack.c.l.s4 1934713408
        %v1384 = vunpack.c.0.s8 %v1383
        %v1385 = vperm.slane %v1377, %v1384
        %v1386 = vrot.slane %v1371, 4
        %v1387 = vsel %vm1128, 0.0, %v1386
        %v1388 = vrot.slane %v1375, 4
        %v1389 = vsel %vm1128, 0.0, %v1388
        %v1390 = vrot.slane %v1381, 4
        %v1391 = vsel %vm1128, 0.0, %v1390
        %v1392 = vrot.slane %v1385, 4
        %v1393 = vsel %vm1128, 0.0, %v1392
        %v1394 = vrot.slane %v654, 4
        %v1395 = vsel %vm1128, 0.0, %v1394
        %v1397 = vunpack.c.l.s4 1983009808
        %v1398 = vunpack.c.0.s8 %v1397
        %v1399 = vperm.slane %v654, %v1398
        %v1401 = vunpack.c.l.s4 1983009808
        %v1402 = vunpack.c.0.s8 %v1401
        %v1403 = vperm.slane %v1395, %v1402
        %v1404 = vrot.slane %v1399, 4
        %v1405 = vsel %vm1128, 0.0, %v1404
        %v1407 = vunpack.c.l.s4 1934713408
        %v1408 = vunpack.c.0.s8 %v1407
        %v1409 = vperm.slane %v1399, %v1408
        %v1411 = vunpack.c.l.s4 1934713408
        %v1412 = vunpack.c.0.s8 %v1411
        %v1413 = vperm.slane %v1405, %v1412
        %v1414 = vrot.slane %v1403, 4
        %v1415 = vsel %vm1128, 0.0, %v1414
        %v1417 = vunpack.c.l.s4 1934713408
        %v1418 = vunpack.c.0.s8 %v1417
        %v1419 = vperm.slane %v1403, %v1418
        %v1421 = vunpack.c.l.s4 1934713408
        %v1422 = vunpack.c.0.s8 %v1421
        %v1423 = vperm.slane %v1415, %v1422
        %v1424 = vrot.slane %v1409, 4
        %v1425 = vsel %vm1128, 0.0, %v1424
        %v1426 = vrot.slane %v1413, 4
        %v1427 = vsel %vm1128, 0.0, %v1426
        %v1428 = vrot.slane %v1419, 4
        %v1429 = vsel %vm1128, 0.0, %v1428
        %v1430 = vrot.slane %v1423, 4
        %v1431 = vsel %vm1128, 0.0, %v1430
        %v1432 = vrot.slane %v655, 4
        %v1433 = vsel %vm1128, 0.0, %v1432
        %v1435 = vunpack.c.l.s4 1983009808
        %v1436 = vunpack.c.0.s8 %v1435
        %v1437 = vperm.slane %v655, %v1436
        %v1439 = vunpack.c.l.s4 1983009808
        %v1440 = vunpack.c.0.s8 %v1439
        %v1441 = vperm.slane %v1433, %v1440
        %v1442 = vrot.slane %v1437, 4
        %v1443 = vsel %vm1128, 0.0, %v1442
        %v1445 = vunpack.c.l.s4 1934713408
        %v1446 = vunpack.c.0.s8 %v1445
        %v1447 = vperm.slane %v1437, %v1446
        %v1449 = vunpack.c.l.s4 1934713408
        %v1450 = vunpack.c.0.s8 %v1449
        %v1451 = vperm.slane %v1443, %v1450
        %v1452 = vrot.slane %v1441, 4
        %v1453 = vsel %vm1128, 0.0, %v1452
        %v1455 = vunpack.c.l.s4 1934713408
        %v1456 = vunpack.c.0.s8 %v1455
        %v1457 = vperm.slane %v1441, %v1456
        %v1459 = vunpack.c.l.s4 1934713408
        %v1460 = vunpack.c.0.s8 %v1459
        %v1461 = vperm.slane %v1453, %v1460
        %v1462 = vrot.slane %v1447, 4
        %v1463 = vsel %vm1128, 0.0, %v1462
        %v1464 = vrot.slane %v1451, 4
        %v1465 = vsel %vm1128, 0.0, %v1464
        %v1466 = vrot.slane %v1457, 4
        %v1467 = vsel %vm1128, 0.0, %v1466
        %v1468 = vrot.slane %v1461, 4
        %v1469 = vsel %vm1128, 0.0, %v1468
        %v1470 = vrot.slane %v656, 4
        %v1471 = vsel %vm1128, 0.0, %v1470
        %v1473 = vunpack.c.l.s4 1983009808
        %v1474 = vunpack.c.0.s8 %v1473
        %v1475 = vperm.slane %v656, %v1474
        %v1477 = vunpack.c.l.s4 1983009808
        %v1478 = vunpack.c.0.s8 %v1477
        %v1479 = vperm.slane %v1471, %v1478
        %v1480 = vrot.slane %v1475, 4
        %v1481 = vsel %vm1128, 0.0, %v1480
        %v1483 = vunpack.c.l.s4 1934713408
        %v1484 = vunpack.c.0.s8 %v1483
        %v1485 = vperm.slane %v1475, %v1484
        %v1487 = vunpack.c.l.s4 1934713408
        %v1488 = vunpack.c.0.s8 %v1487
        %v1489 = vperm.slane %v1481, %v1488
        %v1490 = vrot.slane %v1479, 4
        %v1491 = vsel %vm1128, 0.0, %v1490
        %v1493 = vunpack.c.l.s4 1934713408
        %v1494 = vunpack.c.0.s8 %v1493
        %v1495 = vperm.slane %v1479, %v1494
        %v1497 = vunpack.c.l.s4 1934713408
        %v1498 = vunpack.c.0.s8 %v1497
        %v1499 = vperm.slane %v1491, %v1498
        %v1500 = vrot.slane %v1485, 4
        %v1501 = vsel %vm1128, 0.0, %v1500
        %v1502 = vrot.slane %v1489, 4
        %v1503 = vsel %vm1128, 0.0, %v1502
        %v1504 = vrot.slane %v1495, 4
        %v1505 = vsel %vm1128, 0.0, %v1504
        %v1506 = vrot.slane %v1499, 4
        %v1507 = vsel %vm1128, 0.0, %v1506
        %v1508 = vrot.slane %v657, 4
        %v1509 = vsel %vm1128, 0.0, %v1508
        %v1511 = vunpack.c.l.s4 1983009808
        %v1512 = vunpack.c.0.s8 %v1511
        %v1513 = vperm.slane %v657, %v1512
        %v1515 = vunpack.c.l.s4 1983009808
        %v1516 = vunpack.c.0.s8 %v1515
        %v1517 = vperm.slane %v1509, %v1516
        %v1518 = vrot.slane %v1513, 4
        %v1519 = vsel %vm1128, 0.0, %v1518
        %v1521 = vunpack.c.l.s4 1934713408
        %v1522 = vunpack.c.0.s8 %v1521
        %v1523 = vperm.slane %v1513, %v1522
        %v1525 = vunpack.c.l.s4 1934713408
        %v1526 = vunpack.c.0.s8 %v1525
        %v1527 = vperm.slane %v1519, %v1526
        %v1528 = vrot.slane %v1517, 4
        %v1529 = vsel %vm1128, 0.0, %v1528
        %v1531 = vunpack.c.l.s4 1934713408
        %v1532 = vunpack.c.0.s8 %v1531
        %v1533 = vperm.slane %v1517, %v1532
        %v1535 = vunpack.c.l.s4 1934713408
        %v1536 = vunpack.c.0.s8 %v1535
        %v1537 = vperm.slane %v1529, %v1536
        %v1538 = vrot.slane %v1523, 4
        %v1539 = vsel %vm1128, 0.0, %v1538
        %v1540 = vrot.slane %v1527, 4
        %v1541 = vsel %vm1128, 0.0, %v1540
        %v1542 = vrot.slane %v1533, 4
        %v1543 = vsel %vm1128, 0.0, %v1542
        %v1544 = vrot.slane %v1537, 4
        %v1545 = vsel %vm1128, 0.0, %v1544
        %v1546 = vrot.slane %v658, 4
        %v1547 = vsel %vm1128, 0.0, %v1546
        %v1549 = vunpack.c.l.s4 1983009808
        %v1550 = vunpack.c.0.s8 %v1549
        %v1551 = vperm.slane %v658, %v1550
        %v1553 = vunpack.c.l.s4 1983009808
        %v1554 = vunpack.c.0.s8 %v1553
        %v1555 = vperm.slane %v1547, %v1554
        %v1556 = vrot.slane %v1551, 4
        %v1557 = vsel %vm1128, 0.0, %v1556
        %v1559 = vunpack.c.l.s4 1934713408
        %v1560 = vunpack.c.0.s8 %v1559
        %v1561 = vperm.slane %v1551, %v1560
        %v1563 = vunpack.c.l.s4 1934713408
        %v1564 = vunpack.c.0.s8 %v1563
        %v1565 = vperm.slane %v1557, %v1564
        %v1566 = vrot.slane %v1555, 4
        %v1567 = vsel %vm1128, 0.0, %v1566
        %v1569 = vunpack.c.l.s4 1934713408
        %v1570 = vunpack.c.0.s8 %v1569
        %v1571 = vperm.slane %v1555, %v1570
        %v1573 = vunpack.c.l.s4 1934713408
        %v1574 = vunpack.c.0.s8 %v1573
        %v1575 = vperm.slane %v1567, %v1574
        %v1576 = vrot.slane %v1561, 4
        %v1577 = vsel %vm1128, 0.0, %v1576
        %v1578 = vrot.slane %v1565, 4
        %v1579 = vsel %vm1128, 0.0, %v1578
        %v1580 = vrot.slane %v1571, 4
        %v1581 = vsel %vm1128, 0.0, %v1580
        %v1582 = vrot.slane %v1575, 4
        %v1583 = vsel %vm1128, 0.0, %v1582
        %v1584 = vrot.slane %v659, 4
        %v1585 = vsel %vm1128, 0.0, %v1584
        %v1587 = vunpack.c.l.s4 1983009808
        %v1588 = vunpack.c.0.s8 %v1587
        %v1589 = vperm.slane %v659, %v1588
        %v1591 = vunpack.c.l.s4 1983009808
        %v1592 = vunpack.c.0.s8 %v1591
        %v1593 = vperm.slane %v1585, %v1592
        %v1594 = vrot.slane %v1589, 4
        %v1595 = vsel %vm1128, 0.0, %v1594
        %v1597 = vunpack.c.l.s4 1934713408
        %v1598 = vunpack.c.0.s8 %v1597
        %v1599 = vperm.slane %v1589, %v1598
        %v1601 = vunpack.c.l.s4 1934713408
        %v1602 = vunpack.c.0.s8 %v1601
        %v1603 = vperm.slane %v1595, %v1602
        %v1604 = vrot.slane %v1593, 4
        %v1605 = vsel %vm1128, 0.0, %v1604
        %v1607 = vunpack.c.l.s4 1934713408
        %v1608 = vunpack.c.0.s8 %v1607
        %v1609 = vperm.slane %v1593, %v1608
        %v1611 = vunpack.c.l.s4 1934713408
        %v1612 = vunpack.c.0.s8 %v1611
        %v1613 = vperm.slane %v1605, %v1612
        %v1614 = vrot.slane %v1599, 4
        %v1615 = vsel %vm1128, 0.0, %v1614
        %v1616 = vrot.slane %v1603, 4
        %v1617 = vsel %vm1128, 0.0, %v1616
        %v1618 = vrot.slane %v1609, 4
        %v1619 = vsel %vm1128, 0.0, %v1618
        %v1620 = vrot.slane %v1613, 4
        %v1621 = vsel %vm1128, 0.0, %v1620
        %v1622 = vrot.slane %v660, 4
        %v1623 = vsel %vm1128, 0.0, %v1622
        %v1625 = vunpack.c.l.s4 1983009808
        %v1626 = vunpack.c.0.s8 %v1625
        %v1627 = vperm.slane %v660, %v1626
        %v1629 = vunpack.c.l.s4 1983009808
        %v1630 = vunpack.c.0.s8 %v1629
        %v1631 = vperm.slane %v1623, %v1630
        %v1632 = vrot.slane %v1627, 4
        %v1633 = vsel %vm1128, 0.0, %v1632
        %v1635 = vunpack.c.l.s4 1934713408
        %v1636 = vunpack.c.0.s8 %v1635
        %v1637 = vperm.slane %v1627, %v1636
        %v1639 = vunpack.c.l.s4 1934713408
        %v1640 = vunpack.c.0.s8 %v1639
        %v1641 = vperm.slane %v1633, %v1640
        %v1642 = vrot.slane %v1631, 4
        %v1643 = vsel %vm1128, 0.0, %v1642
        %v1645 = vunpack.c.l.s4 1934713408
        %v1646 = vunpack.c.0.s8 %v1645
        %v1647 = vperm.slane %v1631, %v1646
        %v1649 = vunpack.c.l.s4 1934713408
        %v1650 = vunpack.c.0.s8 %v1649
        %v1651 = vperm.slane %v1643, %v1650
        %v1652 = vrot.slane %v1637, 4
        %v1653 = vsel %vm1128, 0.0, %v1652
        %v1654 = vrot.slane %v1641, 4
        %v1655 = vsel %vm1128, 0.0, %v1654
        %v1656 = vrot.slane %v1647, 4
        %v1657 = vsel %vm1128, 0.0, %v1656
        %v1658 = vrot.slane %v1651, 4
        %v1659 = vsel %vm1128, 0.0, %v1658
        %v1660 = vrot.slane %v661, 4
        %v1661 = vsel %vm1128, 0.0, %v1660
        %v1663 = vunpack.c.l.s4 1983009808
        %v1664 = vunpack.c.0.s8 %v1663
        %v1665 = vperm.slane %v661, %v1664
        %v1667 = vunpack.c.l.s4 1983009808
        %v1668 = vunpack.c.0.s8 %v1667
        %v1669 = vperm.slane %v1661, %v1668
        %v1670 = vrot.slane %v1665, 4
        %v1671 = vsel %vm1128, 0.0, %v1670
        %v1673 = vunpack.c.l.s4 1934713408
        %v1674 = vunpack.c.0.s8 %v1673
        %v1675 = vperm.slane %v1665, %v1674
        %v1677 = vunpack.c.l.s4 1934713408
        %v1678 = vunpack.c.0.s8 %v1677
        %v1679 = vperm.slane %v1671, %v1678
        %v1680 = vrot.slane %v1669, 4
        %v1681 = vsel %vm1128, 0.0, %v1680
        %v1683 = vunpack.c.l.s4 1934713408
        %v1684 = vunpack.c.0.s8 %v1683
        %v1685 = vperm.slane %v1669, %v1684
        %v1687 = vunpack.c.l.s4 1934713408
        %v1688 = vunpack.c.0.s8 %v1687
        %v1689 = vperm.slane %v1681, %v1688
        %v1690 = vrot.slane %v1675, 4
        %v1691 = vsel %vm1128, 0.0, %v1690
        %v1692 = vrot.slane %v1679, 4
        %v1693 = vsel %vm1128, 0.0, %v1692
        %v1694 = vrot.slane %v1685, 4
        %v1695 = vsel %vm1128, 0.0, %v1694
        %v1696 = vrot.slane %v1689, 4
        %v1697 = vsel %vm1128, 0.0, %v1696
        %v1698 = vrot.slane %v662, 4
        %v1699 = vsel %vm1128, 0.0, %v1698
        %v1701 = vunpack.c.l.s4 1983009808
        %v1702 = vunpack.c.0.s8 %v1701
        %v1703 = vperm.slane %v662, %v1702
        %v1705 = vunpack.c.l.s4 1983009808
        %v1706 = vunpack.c.0.s8 %v1705
        %v1707 = vperm.slane %v1699, %v1706
        %v1708 = vrot.slane %v1703, 4
        %v1709 = vsel %vm1128, 0.0, %v1708
        %v1711 = vunpack.c.l.s4 1934713408
        %v1712 = vunpack.c.0.s8 %v1711
        %v1713 = vperm.slane %v1703, %v1712
        %v1715 = vunpack.c.l.s4 1934713408
        %v1716 = vunpack.c.0.s8 %v1715
        %v1717 = vperm.slane %v1709, %v1716
        %v1718 = vrot.slane %v1707, 4
        %v1719 = vsel %vm1128, 0.0, %v1718
        %v1721 = vunpack.c.l.s4 1934713408
        %v1722 = vunpack.c.0.s8 %v1721
        %v1723 = vperm.slane %v1707, %v1722
        %v1725 = vunpack.c.l.s4 1934713408
        %v1726 = vunpack.c.0.s8 %v1725
        %v1727 = vperm.slane %v1719, %v1726
        %v1728 = vrot.slane %v1713, 4
        %v1729 = vsel %vm1128, 0.0, %v1728
        %v1730 = vrot.slane %v1717, 4
        %v1731 = vsel %vm1128, 0.0, %v1730
        %v1732 = vrot.slane %v1723, 4
        %v1733 = vsel %vm1128, 0.0, %v1732
        %v1734 = vrot.slane %v1727, 4
        %v1735 = vsel %vm1128, 0.0, %v1734
        %v1736 = vrot.slane %v663, 4
        %v1737 = vsel %vm1128, 0.0, %v1736
        %v1739 = vunpack.c.l.s4 1983009808
        %v1740 = vunpack.c.0.s8 %v1739
        %v1741 = vperm.slane %v663, %v1740
        %v1743 = vunpack.c.l.s4 1983009808
        %v1744 = vunpack.c.0.s8 %v1743
        %v1745 = vperm.slane %v1737, %v1744
        %v1746 = vrot.slane %v1741, 4
        %v1747 = vsel %vm1128, 0.0, %v1746
        %v1749 = vunpack.c.l.s4 1934713408
        %v1750 = vunpack.c.0.s8 %v1749
        %v1751 = vperm.slane %v1741, %v1750
        %v1753 = vunpack.c.l.s4 1934713408
        %v1754 = vunpack.c.0.s8 %v1753
        %v1755 = vperm.slane %v1747, %v1754
        %v1756 = vrot.slane %v1745, 4
        %v1757 = vsel %vm1128, 0.0, %v1756
        %v1759 = vunpack.c.l.s4 1934713408
        %v1760 = vunpack.c.0.s8 %v1759
        %v1761 = vperm.slane %v1745, %v1760
        %v1763 = vunpack.c.l.s4 1934713408
        %v1764 = vunpack.c.0.s8 %v1763
        %v1765 = vperm.slane %v1757, %v1764
        %v1766 = vrot.slane %v1751, 4
        %v1767 = vsel %vm1128, 0.0, %v1766
        %v1768 = vrot.slane %v1755, 4
        %v1769 = vsel %vm1128, 0.0, %v1768
        %v1770 = vrot.slane %v1761, 4
        %v1771 = vsel %vm1128, 0.0, %v1770
        %v1772 = vrot.slane %v1765, 4
        %v1773 = vsel %vm1128, 0.0, %v1772
        %v1774 = vrot.slane %v664, 4
        %v1775 = vsel %vm1128, 0.0, %v1774
        %v1777 = vunpack.c.l.s4 1983009808
        %v1778 = vunpack.c.0.s8 %v1777
        %v1779 = vperm.slane %v664, %v1778
        %v1781 = vunpack.c.l.s4 1983009808
        %v1782 = vunpack.c.0.s8 %v1781
        %v1783 = vperm.slane %v1775, %v1782
        %v1784 = vrot.slane %v1779, 4
        %v1785 = vsel %vm1128, 0.0, %v1784
        %v1787 = vunpack.c.l.s4 1934713408
        %v1788 = vunpack.c.0.s8 %v1787
        %v1789 = vperm.slane %v1779, %v1788
        %v1791 = vunpack.c.l.s4 1934713408
        %v1792 = vunpack.c.0.s8 %v1791
        %v1793 = vperm.slane %v1785, %v1792
        %v1794 = vrot.slane %v1783, 4
        %v1795 = vsel %vm1128, 0.0, %v1794
        %v1797 = vunpack.c.l.s4 1934713408
        %v1798 = vunpack.c.0.s8 %v1797
        %v1799 = vperm.slane %v1783, %v1798
        %v1801 = vunpack.c.l.s4 1934713408
        %v1802 = vunpack.c.0.s8 %v1801
        %v1803 = vperm.slane %v1795, %v1802
        %v1804 = vrot.slane %v1789, 4
        %v1805 = vsel %vm1128, 0.0, %v1804
        %v1806 = vrot.slane %v1793, 4
        %v1807 = vsel %vm1128, 0.0, %v1806
        %v1808 = vrot.slane %v1799, 4
        %v1809 = vsel %vm1128, 0.0, %v1808
        %v1810 = vrot.slane %v1803, 4
        %v1811 = vsel %vm1128, 0.0, %v1810
        %v1812 = vrot.slane %v665, 4
        %v1813 = vsel %vm1128, 0.0, %v1812
        %v1815 = vunpack.c.l.s4 1983009808
        %v1816 = vunpack.c.0.s8 %v1815
        %v1817 = vperm.slane %v665, %v1816
        %v1819 = vunpack.c.l.s4 1983009808
        %v1820 = vunpack.c.0.s8 %v1819
        %v1821 = vperm.slane %v1813, %v1820
        %v1822 = vrot.slane %v1817, 4
        %v1823 = vsel %vm1128, 0.0, %v1822
        %v1825 = vunpack.c.l.s4 1934713408
        %v1826 = vunpack.c.0.s8 %v1825
        %v1827 = vperm.slane %v1817, %v1826
        %v1829 = vunpack.c.l.s4 1934713408
        %v1830 = vunpack.c.0.s8 %v1829
        %v1831 = vperm.slane %v1823, %v1830
        %v1832 = vrot.slane %v1821, 4
        %v1833 = vsel %vm1128, 0.0, %v1832
        %v1835 = vunpack.c.l.s4 1934713408
        %v1836 = vunpack.c.0.s8 %v1835
        %v1837 = vperm.slane %v1821, %v1836
        %v1839 = vunpack.c.l.s4 1934713408
        %v1840 = vunpack.c.0.s8 %v1839
        %v1841 = vperm.slane %v1833, %v1840
        %v1842 = vrot.slane %v1827, 4
        %v1843 = vsel %vm1128, 0.0, %v1842
        %v1844 = vrot.slane %v1831, 4
        %v1845 = vsel %vm1128, 0.0, %v1844
        %v1846 = vrot.slane %v1837, 4
        %v1847 = vsel %vm1128, 0.0, %v1846
        %v1848 = vrot.slane %v1841, 4
        %v1849 = vsel %vm1128, 0.0, %v1848
        %v1850 = vrot.slane %v666, 4
        %v1851 = vsel %vm1128, 0.0, %v1850
        %v1853 = vunpack.c.l.s4 1983009808
        %v1854 = vunpack.c.0.s8 %v1853
        %v1855 = vperm.slane %v666, %v1854
        %v1857 = vunpack.c.l.s4 1983009808
        %v1858 = vunpack.c.0.s8 %v1857
        %v1859 = vperm.slane %v1851, %v1858
        %v1860 = vrot.slane %v1855, 4
        %v1861 = vsel %vm1128, 0.0, %v1860
        %v1863 = vunpack.c.l.s4 1934713408
        %v1864 = vunpack.c.0.s8 %v1863
        %v1865 = vperm.slane %v1855, %v1864
        %v1867 = vunpack.c.l.s4 1934713408
        %v1868 = vunpack.c.0.s8 %v1867
        %v1869 = vperm.slane %v1861, %v1868
        %v1870 = vrot.slane %v1859, 4
        %v1871 = vsel %vm1128, 0.0, %v1870
        %v1873 = vunpack.c.l.s4 1934713408
        %v1874 = vunpack.c.0.s8 %v1873
        %v1875 = vperm.slane %v1859, %v1874
        %v1877 = vunpack.c.l.s4 1934713408
        %v1878 = vunpack.c.0.s8 %v1877
        %v1879 = vperm.slane %v1871, %v1878
        %v1880 = vrot.slane %v1865, 4
        %v1881 = vsel %vm1128, 0.0, %v1880
        %v1882 = vrot.slane %v1869, 4
        %v1883 = vsel %vm1128, 0.0, %v1882
        %v1884 = vrot.slane %v1875, 4
        %v1885 = vsel %vm1128, 0.0, %v1884
        %v1886 = vrot.slane %v1879, 4
        %v1887 = vsel %vm1128, 0.0, %v1886
        %v1888 = vrot.slane %v667, 4
        %v1889 = vsel %vm1128, 0.0, %v1888
        %v1891 = vunpack.c.l.s4 1983009808
        %v1892 = vunpack.c.0.s8 %v1891
        %v1893 = vperm.slane %v667, %v1892
        %v1895 = vunpack.c.l.s4 1983009808
        %v1896 = vunpack.c.0.s8 %v1895
        %v1897 = vperm.slane %v1889, %v1896
        %v1898 = vrot.slane %v1893, 4
        %v1899 = vsel %vm1128, 0.0, %v1898
        %v1901 = vunpack.c.l.s4 1934713408
        %v1902 = vunpack.c.0.s8 %v1901
        %v1903 = vperm.slane %v1893, %v1902
        %v1905 = vunpack.c.l.s4 1934713408
        %v1906 = vunpack.c.0.s8 %v1905
        %v1907 = vperm.slane %v1899, %v1906
        %v1908 = vrot.slane %v1897, 4
        %v1909 = vsel %vm1128, 0.0, %v1908
        %v1911 = vunpack.c.l.s4 1934713408
        %v1912 = vunpack.c.0.s8 %v1911
        %v1913 = vperm.slane %v1897, %v1912
        %v1915 = vunpack.c.l.s4 1934713408
        %v1916 = vunpack.c.0.s8 %v1915
        %v1917 = vperm.slane %v1909, %v1916
        %v1918 = vrot.slane %v1903, 4
        %v1919 = vsel %vm1128, 0.0, %v1918
        %v1920 = vrot.slane %v1907, 4
        %v1921 = vsel %vm1128, 0.0, %v1920
        %v1922 = vrot.slane %v1913, 4
        %v1923 = vsel %vm1128, 0.0, %v1922
        %v1924 = vrot.slane %v1917, 4
        %v1925 = vsel %vm1128, 0.0, %v1924
        %v1926 = vrot.slane %v668, 4
        %v1927 = vsel %vm1128, 0.0, %v1926
        %v1929 = vunpack.c.l.s4 1983009808
        %v1930 = vunpack.c.0.s8 %v1929
        %v1931 = vperm.slane %v668, %v1930
        %v1933 = vunpack.c.l.s4 1983009808
        %v1934 = vunpack.c.0.s8 %v1933
        %v1935 = vperm.slane %v1927, %v1934
        %v1936 = vrot.slane %v1931, 4
        %v1937 = vsel %vm1128, 0.0, %v1936
        %v1939 = vunpack.c.l.s4 1934713408
        %v1940 = vunpack.c.0.s8 %v1939
        %v1941 = vperm.slane %v1931, %v1940
        %v1943 = vunpack.c.l.s4 1934713408
        %v1944 = vunpack.c.0.s8 %v1943
        %v1945 = vperm.slane %v1937, %v1944
        %v1946 = vrot.slane %v1935, 4
        %v1947 = vsel %vm1128, 0.0, %v1946
        %v1949 = vunpack.c.l.s4 1934713408
        %v1950 = vunpack.c.0.s8 %v1949
        %v1951 = vperm.slane %v1935, %v1950
        %v1953 = vunpack.c.l.s4 1934713408
        %v1954 = vunpack.c.0.s8 %v1953
        %v1955 = vperm.slane %v1947, %v1954
        %v1956 = vrot.slane %v1941, 4
        %v1957 = vsel %vm1128, 0.0, %v1956
        %v1958 = vrot.slane %v1945, 4
        %v1959 = vsel %vm1128, 0.0, %v1958
        %v1960 = vrot.slane %v1951, 4
        %v1961 = vsel %vm1128, 0.0, %v1960
        %v1962 = vrot.slane %v1955, 4
        %v1963 = vsel %vm1128, 0.0, %v1962
        %v1964 = vrot.slane %v669, 4
        %v1965 = vsel %vm1128, 0.0, %v1964
        %v1967 = vunpack.c.l.s4 1983009808
        %v1968 = vunpack.c.0.s8 %v1967
        %v1969 = vperm.slane %v669, %v1968
        %v1971 = vunpack.c.l.s4 1983009808
        %v1972 = vunpack.c.0.s8 %v1971
        %v1973 = vperm.slane %v1965, %v1972
        %v1974 = vrot.slane %v1969, 4
        %v1975 = vsel %vm1128, 0.0, %v1974
        %v1977 = vunpack.c.l.s4 1934713408
        %v1978 = vunpack.c.0.s8 %v1977
        %v1979 = vperm.slane %v1969, %v1978
        %v1981 = vunpack.c.l.s4 1934713408
        %v1982 = vunpack.c.0.s8 %v1981
        %v1983 = vperm.slane %v1975, %v1982
        %v1984 = vrot.slane %v1973, 4
        %v1985 = vsel %vm1128, 0.0, %v1984
        %v1987 = vunpack.c.l.s4 1934713408
        %v1988 = vunpack.c.0.s8 %v1987
        %v1989 = vperm.slane %v1973, %v1988
        %v1991 = vunpack.c.l.s4 1934713408
        %v1992 = vunpack.c.0.s8 %v1991
        %v1993 = vperm.slane %v1985, %v1992
        %v1994 = vrot.slane %v1979, 4
        %v1995 = vsel %vm1128, 0.0, %v1994
        %v1996 = vrot.slane %v1983, 4
        %v1997 = vsel %vm1128, 0.0, %v1996
        %v1998 = vrot.slane %v1989, 4
        %v1999 = vsel %vm1128, 0.0, %v1998
        %v2000 = vrot.slane %v1993, 4
        %v2001 = vsel %vm1128, 0.0, %v2000
        %v2002 = vrot.slane %v670, 4
        %v2003 = vsel %vm1128, 0.0, %v2002
        %v2005 = vunpack.c.l.s4 1983009808
        %v2006 = vunpack.c.0.s8 %v2005
        %v2007 = vperm.slane %v670, %v2006
        %v2009 = vunpack.c.l.s4 1983009808
        %v2010 = vunpack.c.0.s8 %v2009
        %v2011 = vperm.slane %v2003, %v2010
        %v2012 = vrot.slane %v2007, 4
        %v2013 = vsel %vm1128, 0.0, %v2012
        %v2015 = vunpack.c.l.s4 1934713408
        %v2016 = vunpack.c.0.s8 %v2015
        %v2017 = vperm.slane %v2007, %v2016
        %v2019 = vunpack.c.l.s4 1934713408
        %v2020 = vunpack.c.0.s8 %v2019
        %v2021 = vperm.slane %v2013, %v2020
        %v2022 = vrot.slane %v2011, 4
        %v2023 = vsel %vm1128, 0.0, %v2022
        %v2025 = vunpack.c.l.s4 1934713408
        %v2026 = vunpack.c.0.s8 %v2025
        %v2027 = vperm.slane %v2011, %v2026
        %v2029 = vunpack.c.l.s4 1934713408
        %v2030 = vunpack.c.0.s8 %v2029
        %v2031 = vperm.slane %v2023, %v2030
        %v2032 = vrot.slane %v2017, 4
        %v2033 = vsel %vm1128, 0.0, %v2032
        %v2034 = vrot.slane %v2021, 4
        %v2035 = vsel %vm1128, 0.0, %v2034
        %v2036 = vrot.slane %v2027, 4
        %v2037 = vsel %vm1128, 0.0, %v2036
        %v2038 = vrot.slane %v2031, 4
        %v2039 = vsel %vm1128, 0.0, %v2038
        %v2040 = vrot.slane %v671, 4
        %v2041 = vsel %vm1128, 0.0, %v2040
        %v2043 = vunpack.c.l.s4 1983009808
        %v2044 = vunpack.c.0.s8 %v2043
        %v2045 = vperm.slane %v671, %v2044
        %v2047 = vunpack.c.l.s4 1983009808
        %v2048 = vunpack.c.0.s8 %v2047
        %v2049 = vperm.slane %v2041, %v2048
        %v2050 = vrot.slane %v2045, 4
        %v2051 = vsel %vm1128, 0.0, %v2050
        %v2053 = vunpack.c.l.s4 1934713408
        %v2054 = vunpack.c.0.s8 %v2053
        %v2055 = vperm.slane %v2045, %v2054
        %v2057 = vunpack.c.l.s4 1934713408
        %v2058 = vunpack.c.0.s8 %v2057
        %v2059 = vperm.slane %v2051, %v2058
        %v2060 = vrot.slane %v2049, 4
        %v2061 = vsel %vm1128, 0.0, %v2060
        %v2063 = vunpack.c.l.s4 1934713408
        %v2064 = vunpack.c.0.s8 %v2063
        %v2065 = vperm.slane %v2049, %v2064
        %v2067 = vunpack.c.l.s4 1934713408
        %v2068 = vunpack.c.0.s8 %v2067
        %v2069 = vperm.slane %v2061, %v2068
        %v2070 = vrot.slane %v2055, 4
        %v2071 = vsel %vm1128, 0.0, %v2070
        %v2072 = vrot.slane %v2059, 4
        %v2073 = vsel %vm1128, 0.0, %v2072
        %v2074 = vrot.slane %v2065, 4
        %v2075 = vsel %vm1128, 0.0, %v2074
        %v2076 = vrot.slane %v2069, 4
        %v2077 = vsel %vm1128, 0.0, %v2076
        %v2078 = vrot.slane %v672, 4
        %v2079 = vsel %vm1128, 0.0, %v2078
        %v2081 = vunpack.c.l.s4 1983009808
        %v2082 = vunpack.c.0.s8 %v2081
        %v2083 = vperm.slane %v672, %v2082
        %v2085 = vunpack.c.l.s4 1983009808
        %v2086 = vunpack.c.0.s8 %v2085
        %v2087 = vperm.slane %v2079, %v2086
        %v2088 = vrot.slane %v2083, 4
        %v2089 = vsel %vm1128, 0.0, %v2088
        %v2091 = vunpack.c.l.s4 1934713408
        %v2092 = vunpack.c.0.s8 %v2091
        %v2093 = vperm.slane %v2083, %v2092
        %v2095 = vunpack.c.l.s4 1934713408
        %v2096 = vunpack.c.0.s8 %v2095
        %v2097 = vperm.slane %v2089, %v2096
        %v2098 = vrot.slane %v2087, 4
        %v2099 = vsel %vm1128, 0.0, %v2098
        %v2101 = vunpack.c.l.s4 1934713408
        %v2102 = vunpack.c.0.s8 %v2101
        %v2103 = vperm.slane %v2087, %v2102
        %v2105 = vunpack.c.l.s4 1934713408
        %v2106 = vunpack.c.0.s8 %v2105
        %v2107 = vperm.slane %v2099, %v2106
        %v2108 = vrot.slane %v2093, 4
        %v2109 = vsel %vm1128, 0.0, %v2108
        %v2110 = vrot.slane %v2097, 4
        %v2111 = vsel %vm1128, 0.0, %v2110
        %v2112 = vrot.slane %v2103, 4
        %v2113 = vsel %vm1128, 0.0, %v2112
        %v2114 = vrot.slane %v2107, 4
        %v2115 = vsel %vm1128, 0.0, %v2114
        %v2116 = vrot.slane %v673, 4
        %v2117 = vsel %vm1128, 0.0, %v2116
        %v2119 = vunpack.c.l.s4 1983009808
        %v2120 = vunpack.c.0.s8 %v2119
        %v2121 = vperm.slane %v673, %v2120
        %v2123 = vunpack.c.l.s4 1983009808
        %v2124 = vunpack.c.0.s8 %v2123
        %v2125 = vperm.slane %v2117, %v2124
        %v2126 = vrot.slane %v2121, 4
        %v2127 = vsel %vm1128, 0.0, %v2126
        %v2129 = vunpack.c.l.s4 1934713408
        %v2130 = vunpack.c.0.s8 %v2129
        %v2131 = vperm.slane %v2121, %v2130
        %v2133 = vunpack.c.l.s4 1934713408
        %v2134 = vunpack.c.0.s8 %v2133
        %v2135 = vperm.slane %v2127, %v2134
        %v2136 = vrot.slane %v2125, 4
        %v2137 = vsel %vm1128, 0.0, %v2136
        %v2139 = vunpack.c.l.s4 1934713408
        %v2140 = vunpack.c.0.s8 %v2139
        %v2141 = vperm.slane %v2125, %v2140
        %v2143 = vunpack.c.l.s4 1934713408
        %v2144 = vunpack.c.0.s8 %v2143
        %v2145 = vperm.slane %v2137, %v2144
        %v2146 = vrot.slane %v2131, 4
        %v2147 = vsel %vm1128, 0.0, %v2146
        %v2148 = vrot.slane %v2135, 4
        %v2149 = vsel %vm1128, 0.0, %v2148
        %v2150 = vrot.slane %v2141, 4
        %v2151 = vsel %vm1128, 0.0, %v2150
        %v2152 = vrot.slane %v2145, 4
        %v2153 = vsel %vm1128, 0.0, %v2152
        %v2154 = vrot.slane %v674, 4
        %v2155 = vsel %vm1128, 0.0, %v2154
        %v2157 = vunpack.c.l.s4 1983009808
        %v2158 = vunpack.c.0.s8 %v2157
        %v2159 = vperm.slane %v674, %v2158
        %v2161 = vunpack.c.l.s4 1983009808
        %v2162 = vunpack.c.0.s8 %v2161
        %v2163 = vperm.slane %v2155, %v2162
        %v2164 = vrot.slane %v2159, 4
        %v2165 = vsel %vm1128, 0.0, %v2164
        %v2167 = vunpack.c.l.s4 1934713408
        %v2168 = vunpack.c.0.s8 %v2167
        %v2169 = vperm.slane %v2159, %v2168
        %v2171 = vunpack.c.l.s4 1934713408
        %v2172 = vunpack.c.0.s8 %v2171
        %v2173 = vperm.slane %v2165, %v2172
        %v2174 = vrot.slane %v2163, 4
        %v2175 = vsel %vm1128, 0.0, %v2174
        %v2177 = vunpack.c.l.s4 1934713408
        %v2178 = vunpack.c.0.s8 %v2177
        %v2179 = vperm.slane %v2163, %v2178
        %v2181 = vunpack.c.l.s4 1934713408
        %v2182 = vunpack.c.0.s8 %v2181
        %v2183 = vperm.slane %v2175, %v2182
        %v2184 = vrot.slane %v2169, 4
        %v2185 = vsel %vm1128, 0.0, %v2184
        %v2186 = vrot.slane %v2173, 4
        %v2187 = vsel %vm1128, 0.0, %v2186
        %v2188 = vrot.slane %v2179, 4
        %v2189 = vsel %vm1128, 0.0, %v2188
        %v2190 = vrot.slane %v2183, 4
        %v2191 = vsel %vm1128, 0.0, %v2190
        %v2192 = vrot.slane %v675, 4
        %v2193 = vsel %vm1128, 0.0, %v2192
        %v2195 = vunpack.c.l.s4 1983009808
        %v2196 = vunpack.c.0.s8 %v2195
        %v2197 = vperm.slane %v675, %v2196
        %v2199 = vunpack.c.l.s4 1983009808
        %v2200 = vunpack.c.0.s8 %v2199
        %v2201 = vperm.slane %v2193, %v2200
        %v2202 = vrot.slane %v2197, 4
        %v2203 = vsel %vm1128, 0.0, %v2202
        %v2205 = vunpack.c.l.s4 1934713408
        %v2206 = vunpack.c.0.s8 %v2205
        %v2207 = vperm.slane %v2197, %v2206
        %v2209 = vunpack.c.l.s4 1934713408
        %v2210 = vunpack.c.0.s8 %v2209
        %v2211 = vperm.slane %v2203, %v2210
        %v2212 = vrot.slane %v2201, 4
        %v2213 = vsel %vm1128, 0.0, %v2212
        %v2215 = vunpack.c.l.s4 1934713408
        %v2216 = vunpack.c.0.s8 %v2215
        %v2217 = vperm.slane %v2201, %v2216
        %v2219 = vunpack.c.l.s4 1934713408
        %v2220 = vunpack.c.0.s8 %v2219
        %v2221 = vperm.slane %v2213, %v2220
        %v2222 = vrot.slane %v2207, 4
        %v2223 = vsel %vm1128, 0.0, %v2222
        %v2224 = vrot.slane %v2211, 4
        %v2225 = vsel %vm1128, 0.0, %v2224
        %v2226 = vrot.slane %v2217, 4
        %v2227 = vsel %vm1128, 0.0, %v2226
        %v2228 = vrot.slane %v2221, 4
        %v2229 = vsel %vm1128, 0.0, %v2228
        %v2230 = vrot.slane %v676, 4
        %v2231 = vsel %vm1128, 0.0, %v2230
        %v2233 = vunpack.c.l.s4 1983009808
        %v2234 = vunpack.c.0.s8 %v2233
        %v2235 = vperm.slane %v676, %v2234
        %v2237 = vunpack.c.l.s4 1983009808
        %v2238 = vunpack.c.0.s8 %v2237
        %v2239 = vperm.slane %v2231, %v2238
        %v2240 = vrot.slane %v2235, 4
        %v2241 = vsel %vm1128, 0.0, %v2240
        %v2243 = vunpack.c.l.s4 1934713408
        %v2244 = vunpack.c.0.s8 %v2243
        %v2245 = vperm.slane %v2235, %v2244
        %v2247 = vunpack.c.l.s4 1934713408
        %v2248 = vunpack.c.0.s8 %v2247
        %v2249 = vperm.slane %v2241, %v2248
        %v2250 = vrot.slane %v2239, 4
        %v2251 = vsel %vm1128, 0.0, %v2250
        %v2253 = vunpack.c.l.s4 1934713408
        %v2254 = vunpack.c.0.s8 %v2253
        %v2255 = vperm.slane %v2239, %v2254
        %v2257 = vunpack.c.l.s4 1934713408
        %v2258 = vunpack.c.0.s8 %v2257
        %v2259 = vperm.slane %v2251, %v2258
        %v2260 = vrot.slane %v2245, 4
        %v2261 = vsel %vm1128, 0.0, %v2260
        %v2262 = vrot.slane %v2249, 4
        %v2263 = vsel %vm1128, 0.0, %v2262
        %v2264 = vrot.slane %v2255, 4
        %v2265 = vsel %vm1128, 0.0, %v2264
        %v2266 = vrot.slane %v2259, 4
        %v2267 = vsel %vm1128, 0.0, %v2266
        %v2268 = vrot.slane %v677, 4
        %v2269 = vsel %vm1128, 0.0, %v2268
        %v2271 = vunpack.c.l.s4 1983009808
        %v2272 = vunpack.c.0.s8 %v2271
        %v2273 = vperm.slane %v677, %v2272
        %v2275 = vunpack.c.l.s4 1983009808
        %v2276 = vunpack.c.0.s8 %v2275
        %v2277 = vperm.slane %v2269, %v2276
        %v2278 = vrot.slane %v2273, 4
        %v2279 = vsel %vm1128, 0.0, %v2278
        %v2281 = vunpack.c.l.s4 1934713408
        %v2282 = vunpack.c.0.s8 %v2281
        %v2283 = vperm.slane %v2273, %v2282
        %v2285 = vunpack.c.l.s4 1934713408
        %v2286 = vunpack.c.0.s8 %v2285
        %v2287 = vperm.slane %v2279, %v2286
        %v2288 = vrot.slane %v2277, 4
        %v2289 = vsel %vm1128, 0.0, %v2288
        %v2291 = vunpack.c.l.s4 1934713408
        %v2292 = vunpack.c.0.s8 %v2291
        %v2293 = vperm.slane %v2277, %v2292
        %v2295 = vunpack.c.l.s4 1934713408
        %v2296 = vunpack.c.0.s8 %v2295
        %v2297 = vperm.slane %v2289, %v2296
        %v2298 = vrot.slane %v2283, 4
        %v2299 = vsel %vm1128, 0.0, %v2298
        %v2300 = vrot.slane %v2287, 4
        %v2301 = vsel %vm1128, 0.0, %v2300
        %v2302 = vrot.slane %v2293, 4
        %v2303 = vsel %vm1128, 0.0, %v2302
        %v2304 = vrot.slane %v2297, 4
        %v2305 = vsel %vm1128, 0.0, %v2304
        %v2306 = vrot.slane %v678, 4
        %v2307 = vsel %vm1128, 0.0, %v2306
        %v2309 = vunpack.c.l.s4 1983009808
        %v2310 = vunpack.c.0.s8 %v2309
        %v2311 = vperm.slane %v678, %v2310
        %v2313 = vunpack.c.l.s4 1983009808
        %v2314 = vunpack.c.0.s8 %v2313
        %v2315 = vperm.slane %v2307, %v2314
        %v2316 = vrot.slane %v2311, 4
        %v2317 = vsel %vm1128, 0.0, %v2316
        %v2319 = vunpack.c.l.s4 1934713408
        %v2320 = vunpack.c.0.s8 %v2319
        %v2321 = vperm.slane %v2311, %v2320
        %v2323 = vunpack.c.l.s4 1934713408
        %v2324 = vunpack.c.0.s8 %v2323
        %v2325 = vperm.slane %v2317, %v2324
        %v2326 = vrot.slane %v2315, 4
        %v2327 = vsel %vm1128, 0.0, %v2326
        %v2329 = vunpack.c.l.s4 1934713408
        %v2330 = vunpack.c.0.s8 %v2329
        %v2331 = vperm.slane %v2315, %v2330
        %v2333 = vunpack.c.l.s4 1934713408
        %v2334 = vunpack.c.0.s8 %v2333
        %v2335 = vperm.slane %v2327, %v2334
        %v2336 = vrot.slane %v2321, 4
        %v2337 = vsel %vm1128, 0.0, %v2336
        %v2338 = vrot.slane %v2325, 4
        %v2339 = vsel %vm1128, 0.0, %v2338
        %v2340 = vrot.slane %v2331, 4
        %v2341 = vsel %vm1128, 0.0, %v2340
        %v2342 = vrot.slane %v2335, 4
        %v2343 = vsel %vm1128, 0.0, %v2342
        %2360 = vrot.lane.b32.xlu0 %v1159, 2
        %v2361 = vpop.permute.xlu0 %2360
        %2362 = vrot.lane.b32.xlu0 %v1235, 2
        %v2363 = vpop.permute.xlu0 %2362
        %2364 = vrot.lane.b32.xlu0 %v1311, 2
        %v2365 = vpop.permute.xlu0 %2364
        %2366 = vrot.lane.b32.xlu0 %v1387, 2
        %v2367 = vpop.permute.xlu0 %2366
        %2368 = vrot.lane.b32.xlu0 %v1463, 2
        %v2369 = vpop.permute.xlu0 %2368
        %2370 = vrot.lane.b32.xlu0 %v1539, 2
        %v2371 = vpop.permute.xlu0 %2370
        %2372 = vrot.lane.b32.xlu0 %v1615, 2
        %v2373 = vpop.permute.xlu0 %2372
        %2374 = vrot.lane.b32.xlu0 %v1691, 2
        %v2375 = vpop.permute.xlu0 %2374
        %2376 = vrot.lane.b32.xlu0 %v1767, 2
        %v2377 = vpop.permute.xlu0 %2376
        %2378 = vrot.lane.b32.xlu0 %v1843, 2
        %v2379 = vpop.permute.xlu0 %2378
        %2380 = vrot.lane.b32.xlu0 %v1919, 2
        %v2381 = vpop.permute.xlu0 %2380
        %2382 = vrot.lane.b32.xlu0 %v1995, 2
        %v2383 = vpop.permute.xlu0 %2382
        %2384 = vrot.lane.b32.xlu0 %v2071, 2
        %v2385 = vpop.permute.xlu0 %2384
        %2386 = vrot.lane.b32.xlu0 %v2147, 2
        %v2387 = vpop.permute.xlu0 %2386
        %2388 = vrot.lane.b32.xlu0 %v2223, 2
        %v2389 = vpop.permute.xlu0 %2388
        %2390 = vrot.lane.b32.xlu0 %v2299, 2
        %v2391 = vpop.permute.xlu0 %2390
        %2424 = vrot.lane.b32.xlu0 %v1147, 4
        %v2425 = vpop.permute.xlu0 %2424
        %2426 = vrot.lane.b32.xlu0 %v1223, 4
        %v2427 = vpop.permute.xlu0 %2426
        %2428 = vrot.lane.b32.xlu0 %v1299, 4
        %v2429 = vpop.permute.xlu0 %2428
        %2430 = vrot.lane.b32.xlu0 %v1375, 4
        %v2431 = vpop.permute.xlu0 %2430
        %2432 = vrot.lane.b32.xlu0 %v1451, 4
        %v2433 = vpop.permute.xlu0 %2432
        %2434 = vrot.lane.b32.xlu0 %v1527, 4
        %v2435 = vpop.permute.xlu0 %2434
        %2436 = vrot.lane.b32.xlu0 %v1603, 4
        %v2437 = vpop.permute.xlu0 %2436
        %2438 = vrot.lane.b32.xlu0 %v1679, 4
        %v2439 = vpop.permute.xlu0 %2438
        %2440 = vrot.lane.b32.xlu0 %v1755, 4
        %v2441 = vpop.permute.xlu0 %2440
        %2442 = vrot.lane.b32.xlu0 %v1831, 4
        %v2443 = vpop.permute.xlu0 %2442
        %2444 = vrot.lane.b32.xlu0 %v1907, 4
        %v2445 = vpop.permute.xlu0 %2444
        %2446 = vrot.lane.b32.xlu0 %v1983, 4
        %v2447 = vpop.permute.xlu0 %2446
        %2448 = vrot.lane.b32.xlu0 %v2059, 4
        %v2449 = vpop.permute.xlu0 %2448
        %2450 = vrot.lane.b32.xlu0 %v2135, 4
        %v2451 = vpop.permute.xlu0 %2450
        %2452 = vrot.lane.b32.xlu0 %v2211, 4
        %v2453 = vpop.permute.xlu0 %2452
        %2454 = vrot.lane.b32.xlu0 %v2287, 4
        %v2455 = vpop.permute.xlu0 %2454
        %2488 = vrot.lane.b32.xlu0 %v1161, 6
        %v2489 = vpop.permute.xlu0 %2488
        %2490 = vrot.lane.b32.xlu0 %v1237, 6
        %v2491 = vpop.permute.xlu0 %2490
        %2492 = vrot.lane.b32.xlu0 %v1313, 6
        %v2493 = vpop.permute.xlu0 %2492
        %2494 = vrot.lane.b32.xlu0 %v1389, 6
        %v2495 = vpop.permute.xlu0 %2494
        %2496 = vrot.lane.b32.xlu0 %v1465, 6
        %v2497 = vpop.permute.xlu0 %2496
        %2498 = vrot.lane.b32.xlu0 %v1541, 6
        %v2499 = vpop.permute.xlu0 %2498
        %2500 = vrot.lane.b32.xlu0 %v1617, 6
        %v2501 = vpop.permute.xlu0 %2500
        %2502 = vrot.lane.b32.xlu0 %v1693, 6
        %v2503 = vpop.permute.xlu0 %2502
        %2504 = vrot.lane.b32.xlu0 %v1769, 6
        %v2505 = vpop.permute.xlu0 %2504
        %2506 = vrot.lane.b32.xlu0 %v1845, 6
        %v2507 = vpop.permute.xlu0 %2506
        %2508 = vrot.lane.b32.xlu0 %v1921, 6
        %v2509 = vpop.permute.xlu0 %2508
        %2510 = vrot.lane.b32.xlu0 %v1997, 6
        %v2511 = vpop.permute.xlu0 %2510
        %2512 = vrot.lane.b32.xlu0 %v2073, 6
        %v2513 = vpop.permute.xlu0 %2512
        %2514 = vrot.lane.b32.xlu0 %v2149, 6
        %v2515 = vpop.permute.xlu0 %2514
        %2516 = vrot.lane.b32.xlu0 %v2225, 6
        %v2517 = vpop.permute.xlu0 %2516
        %2518 = vrot.lane.b32.xlu0 %v2301, 6
        %v2519 = vpop.permute.xlu0 %2518
        %2552 = vrot.lane.b32.xlu0 %v1153, 8
        %v2553 = vpop.permute.xlu0 %2552
        %2554 = vrot.lane.b32.xlu0 %v1229, 8
        %v2555 = vpop.permute.xlu0 %2554
        %2556 = vrot.lane.b32.xlu0 %v1305, 8
        %v2557 = vpop.permute.xlu0 %2556
        %2558 = vrot.lane.b32.xlu0 %v1381, 8
        %v2559 = vpop.permute.xlu0 %2558
        %2560 = vrot.lane.b32.xlu0 %v1457, 8
        %v2561 = vpop.permute.xlu0 %2560
        %2562 = vrot.lane.b32.xlu0 %v1533, 8
        %v2563 = vpop.permute.xlu0 %2562
        %2564 = vrot.lane.b32.xlu0 %v1609, 8
        %v2565 = vpop.permute.xlu0 %2564
        %2566 = vrot.lane.b32.xlu0 %v1685, 8
        %v2567 = vpop.permute.xlu0 %2566
        %2568 = vrot.lane.b32.xlu0 %v1761, 8
        %v2569 = vpop.permute.xlu0 %2568
        %2570 = vrot.lane.b32.xlu0 %v1837, 8
        %v2571 = vpop.permute.xlu0 %2570
        %2572 = vrot.lane.b32.xlu0 %v1913, 8
        %v2573 = vpop.permute.xlu0 %2572
        %2574 = vrot.lane.b32.xlu0 %v1989, 8
        %v2575 = vpop.permute.xlu0 %2574
        %2576 = vrot.lane.b32.xlu0 %v2065, 8
        %v2577 = vpop.permute.xlu0 %2576
        %2578 = vrot.lane.b32.xlu0 %v2141, 8
        %v2579 = vpop.permute.xlu0 %2578
        %2580 = vrot.lane.b32.xlu0 %v2217, 8
        %v2581 = vpop.permute.xlu0 %2580
        %2582 = vrot.lane.b32.xlu0 %v2293, 8
        %v2583 = vpop.permute.xlu0 %2582
        %2616 = vrot.lane.b32.xlu0 %v1163, 10
        %v2617 = vpop.permute.xlu0 %2616
        %2618 = vrot.lane.b32.xlu0 %v1239, 10
        %v2619 = vpop.permute.xlu0 %2618
        %2620 = vrot.lane.b32.xlu0 %v1315, 10
        %v2621 = vpop.permute.xlu0 %2620
        %2622 = vrot.lane.b32.xlu0 %v1391, 10
        %v2623 = vpop.permute.xlu0 %2622
        %2624 = vrot.lane.b32.xlu0 %v1467, 10
        %v2625 = vpop.permute.xlu0 %2624
        %2626 = vrot.lane.b32.xlu0 %v1543, 10
        %v2627 = vpop.permute.xlu0 %2626
        %2628 = vrot.lane.b32.xlu0 %v1619, 10
        %v2629 = vpop.permute.xlu0 %2628
        %2630 = vrot.lane.b32.xlu0 %v1695, 10
        %v2631 = vpop.permute.xlu0 %2630
        %2632 = vrot.lane.b32.xlu0 %v1771, 10
        %v2633 = vpop.permute.xlu0 %2632
        %2634 = vrot.lane.b32.xlu0 %v1847, 10
        %v2635 = vpop.permute.xlu0 %2634
        %2636 = vrot.lane.b32.xlu0 %v1923, 10
        %v2637 = vpop.permute.xlu0 %2636
        %2638 = vrot.lane.b32.xlu0 %v1999, 10
        %v2639 = vpop.permute.xlu0 %2638
        %2640 = vrot.lane.b32.xlu0 %v2075, 10
        %v2641 = vpop.permute.xlu0 %2640
        %2642 = vrot.lane.b32.xlu0 %v2151, 10
        %v2643 = vpop.permute.xlu0 %2642
        %2644 = vrot.lane.b32.xlu0 %v2227, 10
        %v2645 = vpop.permute.xlu0 %2644
        %2646 = vrot.lane.b32.xlu0 %v2303, 10
        %v2647 = vpop.permute.xlu0 %2646
        %2680 = vrot.lane.b32.xlu0 %v1157, 12
        %v2681 = vpop.permute.xlu0 %2680
        %2682 = vrot.lane.b32.xlu0 %v1233, 12
        %v2683 = vpop.permute.xlu0 %2682
        %2684 = vrot.lane.b32.xlu0 %v1309, 12
        %v2685 = vpop.permute.xlu0 %2684
        %2686 = vrot.lane.b32.xlu0 %v1385, 12
        %v2687 = vpop.permute.xlu0 %2686
        %2688 = vrot.lane.b32.xlu0 %v1461, 12
        %v2689 = vpop.permute.xlu0 %2688
        %2690 = vrot.lane.b32.xlu0 %v1537, 12
        %v2691 = vpop.permute.xlu0 %2690
        %2692 = vrot.lane.b32.xlu0 %v1613, 12
        %v2693 = vpop.permute.xlu0 %2692
        %2694 = vrot.lane.b32.xlu0 %v1689, 12
        %v2695 = vpop.permute.xlu0 %2694
        %2696 = vrot.lane.b32.xlu0 %v1765, 12
        %v2697 = vpop.permute.xlu0 %2696
        %2698 = vrot.lane.b32.xlu0 %v1841, 12
        %v2699 = vpop.permute.xlu0 %2698
        %2700 = vrot.lane.b32.xlu0 %v1917, 12
        %v2701 = vpop.permute.xlu0 %2700
        %2702 = vrot.lane.b32.xlu0 %v1993, 12
        %v2703 = vpop.permute.xlu0 %2702
        %2704 = vrot.lane.b32.xlu0 %v2069, 12
        %v2705 = vpop.permute.xlu0 %2704
        %2706 = vrot.lane.b32.xlu0 %v2145, 12
        %v2707 = vpop.permute.xlu0 %2706
        %2708 = vrot.lane.b32.xlu0 %v2221, 12
        %v2709 = vpop.permute.xlu0 %2708
        %2710 = vrot.lane.b32.xlu0 %v2297, 12
        %v2711 = vpop.permute.xlu0 %2710
        %2744 = vrot.lane.b32.xlu0 %v1165, 14
        %v2745 = vpop.permute.xlu0 %2744
        %2746 = vrot.lane.b32.xlu0 %v1241, 14
        %v2747 = vpop.permute.xlu0 %2746
        %2748 = vrot.lane.b32.xlu0 %v1317, 14
        %v2749 = vpop.permute.xlu0 %2748
        %2750 = vrot.lane.b32.xlu0 %v1393, 14
        %v2751 = vpop.permute.xlu0 %2750
        %2752 = vrot.lane.b32.xlu0 %v1469, 14
        %v2753 = vpop.permute.xlu0 %2752
        %2754 = vrot.lane.b32.xlu0 %v1545, 14
        %v2755 = vpop.permute.xlu0 %2754
        %2756 = vrot.lane.b32.xlu0 %v1621, 14
        %v2757 = vpop.permute.xlu0 %2756
        %2758 = vrot.lane.b32.xlu0 %v1697, 14
        %v2759 = vpop.permute.xlu0 %2758
        %2760 = vrot.lane.b32.xlu0 %v1773, 14
        %v2761 = vpop.permute.xlu0 %2760
        %2762 = vrot.lane.b32.xlu0 %v1849, 14
        %v2763 = vpop.permute.xlu0 %2762
        %2764 = vrot.lane.b32.xlu0 %v1925, 14
        %v2765 = vpop.permute.xlu0 %2764
        %2766 = vrot.lane.b32.xlu0 %v2001, 14
        %v2767 = vpop.permute.xlu0 %2766
        %2768 = vrot.lane.b32.xlu0 %v2077, 14
        %v2769 = vpop.permute.xlu0 %2768
        %2770 = vrot.lane.b32.xlu0 %v2153, 14
        %v2771 = vpop.permute.xlu0 %2770
        %2772 = vrot.lane.b32.xlu0 %v2229, 14
        %v2773 = vpop.permute.xlu0 %2772
        %2774 = vrot.lane.b32.xlu0 %v2305, 14
        %v2775 = vpop.permute.xlu0 %2774
        %2808 = vrot.lane.b32.xlu0 %v1181, 16
        %v2809 = vpop.permute.xlu0 %2808
        %2810 = vrot.lane.b32.xlu0 %v1257, 16
        %v2811 = vpop.permute.xlu0 %2810
        %2812 = vrot.lane.b32.xlu0 %v1333, 16
        %v2813 = vpop.permute.xlu0 %2812
        %2814 = vrot.lane.b32.xlu0 %v1409, 16
        %v2815 = vpop.permute.xlu0 %2814
        %2816 = vrot.lane.b32.xlu0 %v1485, 16
        %v2817 = vpop.permute.xlu0 %2816
        %2818 = vrot.lane.b32.xlu0 %v1561, 16
        %v2819 = vpop.permute.xlu0 %2818
        %2820 = vrot.lane.b32.xlu0 %v1637, 16
        %v2821 = vpop.permute.xlu0 %2820
        %2822 = vrot.lane.b32.xlu0 %v1713, 16
        %v2823 = vpop.permute.xlu0 %2822
        %2824 = vrot.lane.b32.xlu0 %v1789, 16
        %v2825 = vpop.permute.xlu0 %2824
        %2826 = vrot.lane.b32.xlu0 %v1865, 16
        %v2827 = vpop.permute.xlu0 %2826
        %2828 = vrot.lane.b32.xlu0 %v1941, 16
        %v2829 = vpop.permute.xlu0 %2828
        %2830 = vrot.lane.b32.xlu0 %v2017, 16
        %v2831 = vpop.permute.xlu0 %2830
        %2832 = vrot.lane.b32.xlu0 %v2093, 16
        %v2833 = vpop.permute.xlu0 %2832
        %2834 = vrot.lane.b32.xlu0 %v2169, 16
        %v2835 = vpop.permute.xlu0 %2834
        %2836 = vrot.lane.b32.xlu0 %v2245, 16
        %v2837 = vpop.permute.xlu0 %2836
        %2838 = vrot.lane.b32.xlu0 %v2321, 16
        %v2839 = vpop.permute.xlu0 %2838
        %2872 = vrot.lane.b32.xlu0 %v1197, 18
        %v2873 = vpop.permute.xlu0 %2872
        %2874 = vrot.lane.b32.xlu0 %v1273, 18
        %v2875 = vpop.permute.xlu0 %2874
        %2876 = vrot.lane.b32.xlu0 %v1349, 18
        %v2877 = vpop.permute.xlu0 %2876
        %2878 = vrot.lane.b32.xlu0 %v1425, 18
        %v2879 = vpop.permute.xlu0 %2878
        %2880 = vrot.lane.b32.xlu0 %v1501, 18
        %v2881 = vpop.permute.xlu0 %2880
        %2882 = vrot.lane.b32.xlu0 %v1577, 18
        %v2883 = vpop.permute.xlu0 %2882
        %2884 = vrot.lane.b32.xlu0 %v1653, 18
        %v2885 = vpop.permute.xlu0 %2884
        %2886 = vrot.lane.b32.xlu0 %v1729, 18
        %v2887 = vpop.permute.xlu0 %2886
        %2888 = vrot.lane.b32.xlu0 %v1805, 18
        %v2889 = vpop.permute.xlu0 %2888
        %2890 = vrot.lane.b32.xlu0 %v1881, 18
        %v2891 = vpop.permute.xlu0 %2890
        %2892 = vrot.lane.b32.xlu0 %v1957, 18
        %v2893 = vpop.permute.xlu0 %2892
        %2894 = vrot.lane.b32.xlu0 %v2033, 18
        %v2895 = vpop.permute.xlu0 %2894
        %2896 = vrot.lane.b32.xlu0 %v2109, 18
        %v2897 = vpop.permute.xlu0 %2896
        %2898 = vrot.lane.b32.xlu0 %v2185, 18
        %v2899 = vpop.permute.xlu0 %2898
        %2900 = vrot.lane.b32.xlu0 %v2261, 18
        %v2901 = vpop.permute.xlu0 %2900
        %2902 = vrot.lane.b32.xlu0 %v2337, 18
        %v2903 = vpop.permute.xlu0 %2902
        %2936 = vrot.lane.b32.xlu0 %v1185, 20
        %v2937 = vpop.permute.xlu0 %2936
        %2938 = vrot.lane.b32.xlu0 %v1261, 20
        %v2939 = vpop.permute.xlu0 %2938
        %2940 = vrot.lane.b32.xlu0 %v1337, 20
        %v2941 = vpop.permute.xlu0 %2940
        %2942 = vrot.lane.b32.xlu0 %v1413, 20
        %v2943 = vpop.permute.xlu0 %2942
        %2944 = vrot.lane.b32.xlu0 %v1489, 20
        %v2945 = vpop.permute.xlu0 %2944
        %2946 = vrot.lane.b32.xlu0 %v1565, 20
        %v2947 = vpop.permute.xlu0 %2946
        %2948 = vrot.lane.b32.xlu0 %v1641, 20
        %v2949 = vpop.permute.xlu0 %2948
        %2950 = vrot.lane.b32.xlu0 %v1717, 20
        %v2951 = vpop.permute.xlu0 %2950
        %2952 = vrot.lane.b32.xlu0 %v1793, 20
        %v2953 = vpop.permute.xlu0 %2952
        %2954 = vrot.lane.b32.xlu0 %v1869, 20
        %v2955 = vpop.permute.xlu0 %2954
        %2956 = vrot.lane.b32.xlu0 %v1945, 20
        %v2957 = vpop.permute.xlu0 %2956
        %2958 = vrot.lane.b32.xlu0 %v2021, 20
        %v2959 = vpop.permute.xlu0 %2958
        %2960 = vrot.lane.b32.xlu0 %v2097, 20
        %v2961 = vpop.permute.xlu0 %2960
        %2962 = vrot.lane.b32.xlu0 %v2173, 20
        %v2963 = vpop.permute.xlu0 %2962
        %2964 = vrot.lane.b32.xlu0 %v2249, 20
        %v2965 = vpop.permute.xlu0 %2964
        %2966 = vrot.lane.b32.xlu0 %v2325, 20
        %v2967 = vpop.permute.xlu0 %2966
        %3000 = vrot.lane.b32.xlu0 %v1199, 22
        %v3001 = vpop.permute.xlu0 %3000
        %3002 = vrot.lane.b32.xlu0 %v1275, 22
        %v3003 = vpop.permute.xlu0 %3002
        %3004 = vrot.lane.b32.xlu0 %v1351, 22
        %v3005 = vpop.permute.xlu0 %3004
        %3006 = vrot.lane.b32.xlu0 %v1427, 22
        %v3007 = vpop.permute.xlu0 %3006
        %3008 = vrot.lane.b32.xlu0 %v1503, 22
        %v3009 = vpop.permute.xlu0 %3008
        %3010 = vrot.lane.b32.xlu0 %v1579, 22
        %v3011 = vpop.permute.xlu0 %3010
        %3012 = vrot.lane.b32.xlu0 %v1655, 22
        %v3013 = vpop.permute.xlu0 %3012
        %3014 = vrot.lane.b32.xlu0 %v1731, 22
        %v3015 = vpop.permute.xlu0 %3014
        %3016 = vrot.lane.b32.xlu0 %v1807, 22
        %v3017 = vpop.permute.xlu0 %3016
        %3018 = vrot.lane.b32.xlu0 %v1883, 22
        %v3019 = vpop.permute.xlu0 %3018
        %3020 = vrot.lane.b32.xlu0 %v1959, 22
        %v3021 = vpop.permute.xlu0 %3020
        %3022 = vrot.lane.b32.xlu0 %v2035, 22
        %v3023 = vpop.permute.xlu0 %3022
        %3024 = vrot.lane.b32.xlu0 %v2111, 22
        %v3025 = vpop.permute.xlu0 %3024
        %3026 = vrot.lane.b32.xlu0 %v2187, 22
        %v3027 = vpop.permute.xlu0 %3026
        %3028 = vrot.lane.b32.xlu0 %v2263, 22
        %v3029 = vpop.permute.xlu0 %3028
        %3030 = vrot.lane.b32.xlu0 %v2339, 22
        %v3031 = vpop.permute.xlu0 %3030
        %3064 = vrot.lane.b32.xlu0 %v1191, 24
        %v3065 = vpop.permute.xlu0 %3064
        %3066 = vrot.lane.b32.xlu0 %v1267, 24
        %v3067 = vpop.permute.xlu0 %3066
        %3068 = vrot.lane.b32.xlu0 %v1343, 24
        %v3069 = vpop.permute.xlu0 %3068
        %3070 = vrot.lane.b32.xlu0 %v1419, 24
        %v3071 = vpop.permute.xlu0 %3070
        %3072 = vrot.lane.b32.xlu0 %v1495, 24
        %v3073 = vpop.permute.xlu0 %3072
        %3074 = vrot.lane.b32.xlu0 %v1571, 24
        %v3075 = vpop.permute.xlu0 %3074
        %3076 = vrot.lane.b32.xlu0 %v1647, 24
        %v3077 = vpop.permute.xlu0 %3076
        %3078 = vrot.lane.b32.xlu0 %v1723, 24
        %v3079 = vpop.permute.xlu0 %3078
        %3080 = vrot.lane.b32.xlu0 %v1799, 24
        %v3081 = vpop.permute.xlu0 %3080
        %3082 = vrot.lane.b32.xlu0 %v1875, 24
        %v3083 = vpop.permute.xlu0 %3082
        %3084 = vrot.lane.b32.xlu0 %v1951, 24
        %v3085 = vpop.permute.xlu0 %3084
        %3086 = vrot.lane.b32.xlu0 %v2027, 24
        %v3087 = vpop.permute.xlu0 %3086
        %3088 = vrot.lane.b32.xlu0 %v2103, 24
        %v3089 = vpop.permute.xlu0 %3088
        %3090 = vrot.lane.b32.xlu0 %v2179, 24
        %v3091 = vpop.permute.xlu0 %3090
        %3092 = vrot.lane.b32.xlu0 %v2255, 24
        %v3093 = vpop.permute.xlu0 %3092
        %3094 = vrot.lane.b32.xlu0 %v2331, 24
        %v3095 = vpop.permute.xlu0 %3094
        %3128 = vrot.lane.b32.xlu0 %v1201, 26
        %v3129 = vpop.permute.xlu0 %3128
        %3130 = vrot.lane.b32.xlu0 %v1277, 26
        %v3131 = vpop.permute.xlu0 %3130
        %3132 = vrot.lane.b32.xlu0 %v1353, 26
        %v3133 = vpop.permute.xlu0 %3132
        %3134 = vrot.lane.b32.xlu0 %v1429, 26
        %v3135 = vpop.permute.xlu0 %3134
        %3136 = vrot.lane.b32.xlu0 %v1505, 26
        %v3137 = vpop.permute.xlu0 %3136
        %3138 = vrot.lane.b32.xlu0 %v1581, 26
        %v3139 = vpop.permute.xlu0 %3138
        %3140 = vrot.lane.b32.xlu0 %v1657, 26
        %v3141 = vpop.permute.xlu0 %3140
        %3142 = vrot.lane.b32.xlu0 %v1733, 26
        %v3143 = vpop.permute.xlu0 %3142
        %3144 = vrot.lane.b32.xlu0 %v1809, 26
        %v3145 = vpop.permute.xlu0 %3144
        %3146 = vrot.lane.b32.xlu0 %v1885, 26
        %v3147 = vpop.permute.xlu0 %3146
        %3148 = vrot.lane.b32.xlu0 %v1961, 26
        %v3149 = vpop.permute.xlu0 %3148
        %3150 = vrot.lane.b32.xlu0 %v2037, 26
        %v3151 = vpop.permute.xlu0 %3150
        %3152 = vrot.lane.b32.xlu0 %v2113, 26
        %v3153 = vpop.permute.xlu0 %3152
        %3154 = vrot.lane.b32.xlu0 %v2189, 26
        %v3155 = vpop.permute.xlu0 %3154
        %3156 = vrot.lane.b32.xlu0 %v2265, 26
        %v3157 = vpop.permute.xlu0 %3156
        %3158 = vrot.lane.b32.xlu0 %v2341, 26
        %v3159 = vpop.permute.xlu0 %3158
        %3192 = vrot.lane.b32.xlu0 %v1195, 28
        %v3193 = vpop.permute.xlu0 %3192
        %3194 = vrot.lane.b32.xlu0 %v1271, 28
        %v3195 = vpop.permute.xlu0 %3194
        %3196 = vrot.lane.b32.xlu0 %v1347, 28
        %v3197 = vpop.permute.xlu0 %3196
        %3198 = vrot.lane.b32.xlu0 %v1423, 28
        %v3199 = vpop.permute.xlu0 %3198
        %3200 = vrot.lane.b32.xlu0 %v1499, 28
        %v3201 = vpop.permute.xlu0 %3200
        %3202 = vrot.lane.b32.xlu0 %v1575, 28
        %v3203 = vpop.permute.xlu0 %3202
        %3204 = vrot.lane.b32.xlu0 %v1651, 28
        %v3205 = vpop.permute.xlu0 %3204
        %3206 = vrot.lane.b32.xlu0 %v1727, 28
        %v3207 = vpop.permute.xlu0 %3206
        %3208 = vrot.lane.b32.xlu0 %v1803, 28
        %v3209 = vpop.permute.xlu0 %3208
        %3210 = vrot.lane.b32.xlu0 %v1879, 28
        %v3211 = vpop.permute.xlu0 %3210
        %3212 = vrot.lane.b32.xlu0 %v1955, 28
        %v3213 = vpop.permute.xlu0 %3212
        %3214 = vrot.lane.b32.xlu0 %v2031, 28
        %v3215 = vpop.permute.xlu0 %3214
        %3216 = vrot.lane.b32.xlu0 %v2107, 28
        %v3217 = vpop.permute.xlu0 %3216
        %3218 = vrot.lane.b32.xlu0 %v2183, 28
        %v3219 = vpop.permute.xlu0 %3218
        %3220 = vrot.lane.b32.xlu0 %v2259, 28
        %v3221 = vpop.permute.xlu0 %3220
        %3222 = vrot.lane.b32.xlu0 %v2335, 28
        %v3223 = vpop.permute.xlu0 %3222
        %3256 = vrot.lane.b32.xlu0 %v1203, 30
        %v3257 = vpop.permute.xlu0 %3256
        %3258 = vrot.lane.b32.xlu0 %v1279, 30
        %v3259 = vpop.permute.xlu0 %3258
        %3260 = vrot.lane.b32.xlu0 %v1355, 30
        %v3261 = vpop.permute.xlu0 %3260
        %3262 = vrot.lane.b32.xlu0 %v1431, 30
        %v3263 = vpop.permute.xlu0 %3262
        %3264 = vrot.lane.b32.xlu0 %v1507, 30
        %v3265 = vpop.permute.xlu0 %3264
        %3266 = vrot.lane.b32.xlu0 %v1583, 30
        %v3267 = vpop.permute.xlu0 %3266
        %3268 = vrot.lane.b32.xlu0 %v1659, 30
        %v3269 = vpop.permute.xlu0 %3268
        %3270 = vrot.lane.b32.xlu0 %v1735, 30
        %v3271 = vpop.permute.xlu0 %3270
        %3272 = vrot.lane.b32.xlu0 %v1811, 30
        %v3273 = vpop.permute.xlu0 %3272
        %3274 = vrot.lane.b32.xlu0 %v1887, 30
        %v3275 = vpop.permute.xlu0 %3274
        %3276 = vrot.lane.b32.xlu0 %v1963, 30
        %v3277 = vpop.permute.xlu0 %3276
        %3278 = vrot.lane.b32.xlu0 %v2039, 30
        %v3279 = vpop.permute.xlu0 %3278
        %3280 = vrot.lane.b32.xlu0 %v2115, 30
        %v3281 = vpop.permute.xlu0 %3280
        %3282 = vrot.lane.b32.xlu0 %v2191, 30
        %v3283 = vpop.permute.xlu0 %3282
        %3284 = vrot.lane.b32.xlu0 %v2267, 30
        %v3285 = vpop.permute.xlu0 %3284
        %3286 = vrot.lane.b32.xlu0 %v2343, 30
        %v3287 = vpop.permute.xlu0 %3286
        %vm3304 = vcmask 15360
        %v3305 = vsel %vm3304, %v1143, %v2361
        %v3306 = vsel %vm3304, %v1219, %v2363
        %v3307 = vsel %vm3304, %v1295, %v2365
        %v3308 = vsel %vm3304, %v1371, %v2367
        %v3309 = vsel %vm3304, %v1447, %v2369
        %v3310 = vsel %vm3304, %v1523, %v2371
        %v3311 = vsel %vm3304, %v1599, %v2373
        %v3312 = vsel %vm3304, %v1675, %v2375
        %v3313 = vsel %vm3304, %v1751, %v2377
        %v3314 = vsel %vm3304, %v1827, %v2379
        %v3315 = vsel %vm3304, %v1903, %v2381
        %v3316 = vsel %vm3304, %v1979, %v2383
        %v3317 = vsel %vm3304, %v2055, %v2385
        %v3318 = vsel %vm3304, %v2131, %v2387
        %v3319 = vsel %vm3304, %v2207, %v2389
        %v3320 = vsel %vm3304, %v2283, %v2391
        %vm3321 = vcmask 31744
        %v3322 = vsel %vm3321, %v3305, %v2425
        %v3323 = vsel %vm3321, %v3306, %v2427
        %v3324 = vsel %vm3321, %v3307, %v2429
        %v3325 = vsel %vm3321, %v3308, %v2431
        %v3326 = vsel %vm3321, %v3309, %v2433
        %v3327 = vsel %vm3321, %v3310, %v2435
        %v3328 = vsel %vm3321, %v3311, %v2437
        %v3329 = vsel %vm3321, %v3312, %v2439
        %v3330 = vsel %vm3321, %v3313, %v2441
        %v3331 = vsel %vm3321, %v3314, %v2443
        %v3332 = vsel %vm3321, %v3315, %v2445
        %v3333 = vsel %vm3321, %v3316, %v2447
        %v3334 = vsel %vm3321, %v3317, %v2449
        %v3335 = vsel %vm3321, %v3318, %v2451
        %v3336 = vsel %vm3321, %v3319, %v2453
        %v3337 = vsel %vm3321, %v3320, %v2455
        %vm3338 = vcmask 48128
        %v3339 = vsel %vm3338, %v3322, %v2489
        %v3340 = vsel %vm3338, %v3323, %v2491
        %v3341 = vsel %vm3338, %v3324, %v2493
        %v3342 = vsel %vm3338, %v3325, %v2495
        %v3343 = vsel %vm3338, %v3326, %v2497
        %v3344 = vsel %vm3338, %v3327, %v2499
        %v3345 = vsel %vm3338, %v3328, %v2501
        %v3346 = vsel %vm3338, %v3329, %v2503
        %v3347 = vsel %vm3338, %v3330, %v2505
        %v3348 = vsel %vm3338, %v3331, %v2507
        %v3349 = vsel %vm3338, %v3332, %v2509
        %v3350 = vsel %vm3338, %v3333, %v2511
        %v3351 = vsel %vm3338, %v3334, %v2513
        %v3352 = vsel %vm3338, %v3335, %v2515
        %v3353 = vsel %vm3338, %v3336, %v2517
        %v3354 = vsel %vm3338, %v3337, %v2519
        %vm3355 = vcmask 64512
        %v3356 = vsel %vm3355, %v3339, %v2553
        %v3357 = vsel %vm3355, %v3340, %v2555
        %v3358 = vsel %vm3355, %v3341, %v2557
        %v3359 = vsel %vm3355, %v3342, %v2559
        %v3360 = vsel %vm3355, %v3343, %v2561
        %v3361 = vsel %vm3355, %v3344, %v2563
        %v3362 = vsel %vm3355, %v3345, %v2565
        %v3363 = vsel %vm3355, %v3346, %v2567
        %v3364 = vsel %vm3355, %v3347, %v2569
        %v3365 = vsel %vm3355, %v3348, %v2571
        %v3366 = vsel %vm3355, %v3349, %v2573
        %v3367 = vsel %vm3355, %v3350, %v2575
        %v3368 = vsel %vm3355, %v3351, %v2577
        %v3369 = vsel %vm3355, %v3352, %v2579
        %v3370 = vsel %vm3355, %v3353, %v2581
        %v3371 = vsel %vm3355, %v3354, %v2583
        %vm3372 = vcmask 80896
        %v3373 = vsel %vm3372, %v3356, %v2617
        %v3374 = vsel %vm3372, %v3357, %v2619
        %v3375 = vsel %vm3372, %v3358, %v2621
        %v3376 = vsel %vm3372, %v3359, %v2623
        %v3377 = vsel %vm3372, %v3360, %v2625
        %v3378 = vsel %vm3372, %v3361, %v2627
        %v3379 = vsel %vm3372, %v3362, %v2629
        %v3380 = vsel %vm3372, %v3363, %v2631
        %v3381 = vsel %vm3372, %v3364, %v2633
        %v3382 = vsel %vm3372, %v3365, %v2635
        %v3383 = vsel %vm3372, %v3366, %v2637
        %v3384 = vsel %vm3372, %v3367, %v2639
        %v3385 = vsel %vm3372, %v3368, %v2641
        %v3386 = vsel %vm3372, %v3369, %v2643
        %v3387 = vsel %vm3372, %v3370, %v2645
        %v3388 = vsel %vm3372, %v3371, %v2647
        %vm3389 = vcmask 97280
        %v3390 = vsel %vm3389, %v3373, %v2681
        %v3391 = vsel %vm3389, %v3374, %v2683
        %v3392 = vsel %vm3389, %v3375, %v2685
        %v3393 = vsel %vm3389, %v3376, %v2687
        %v3394 = vsel %vm3389, %v3377, %v2689
        %v3395 = vsel %vm3389, %v3378, %v2691
        %v3396 = vsel %vm3389, %v3379, %v2693
        %v3397 = vsel %vm3389, %v3380, %v2695
        %v3398 = vsel %vm3389, %v3381, %v2697
        %v3399 = vsel %vm3389, %v3382, %v2699
        %v3400 = vsel %vm3389, %v3383, %v2701
        %v3401 = vsel %vm3389, %v3384, %v2703
        %v3402 = vsel %vm3389, %v3385, %v2705
        %v3403 = vsel %vm3389, %v3386, %v2707
        %v3404 = vsel %vm3389, %v3387, %v2709
        %v3405 = vsel %vm3389, %v3388, %v2711
        %vm3406 = vcmask 113664
        %v3407 = vsel %vm3406, %v3390, %v2745
        %v3408 = vsel %vm3406, %v3391, %v2747
        %v3409 = vsel %vm3406, %v3392, %v2749
        %v3410 = vsel %vm3406, %v3393, %v2751
        %v3411 = vsel %vm3406, %v3394, %v2753
        %v3412 = vsel %vm3406, %v3395, %v2755
        %v3413 = vsel %vm3406, %v3396, %v2757
        %v3414 = vsel %vm3406, %v3397, %v2759
        %v3415 = vsel %vm3406, %v3398, %v2761
        %v3416 = vsel %vm3406, %v3399, %v2763
        %v3417 = vsel %vm3406, %v3400, %v2765
        %v3418 = vsel %vm3406, %v3401, %v2767
        %v3419 = vsel %vm3406, %v3402, %v2769
        %v3420 = vsel %vm3406, %v3403, %v2771
        %v3421 = vsel %vm3406, %v3404, %v2773
        %v3422 = vsel %vm3406, %v3405, %v2775
        %vm3423 = vcmask 130048
        %v3424 = vsel %vm3423, %v3407, %v2809
        %v3425 = vsel %vm3423, %v3408, %v2811
        %v3426 = vsel %vm3423, %v3409, %v2813
        %v3427 = vsel %vm3423, %v3410, %v2815
        %v3428 = vsel %vm3423, %v3411, %v2817
        %v3429 = vsel %vm3423, %v3412, %v2819
        %v3430 = vsel %vm3423, %v3413, %v2821
        %v3431 = vsel %vm3423, %v3414, %v2823
        %v3432 = vsel %vm3423, %v3415, %v2825
        %v3433 = vsel %vm3423, %v3416, %v2827
        %v3434 = vsel %vm3423, %v3417, %v2829
        %v3435 = vsel %vm3423, %v3418, %v2831
        %v3436 = vsel %vm3423, %v3419, %v2833
        %v3437 = vsel %vm3423, %v3420, %v2835
        %v3438 = vsel %vm3423, %v3421, %v2837
        %v3439 = vsel %vm3423, %v3422, %v2839
        %vm3440 = vcmask 146432
        %v3441 = vsel %vm3440, %v3424, %v2873
        %v3442 = vsel %vm3440, %v3425, %v2875
        %v3443 = vsel %vm3440, %v3426, %v2877
        %v3444 = vsel %vm3440, %v3427, %v2879
        %v3445 = vsel %vm3440, %v3428, %v2881
        %v3446 = vsel %vm3440, %v3429, %v2883
        %v3447 = vsel %vm3440, %v3430, %v2885
        %v3448 = vsel %vm3440, %v3431, %v2887
        %v3449 = vsel %vm3440, %v3432, %v2889
        %v3450 = vsel %vm3440, %v3433, %v2891
        %v3451 = vsel %vm3440, %v3434, %v2893
        %v3452 = vsel %vm3440, %v3435, %v2895
        %v3453 = vsel %vm3440, %v3436, %v2897
        %v3454 = vsel %vm3440, %v3437, %v2899
        %v3455 = vsel %vm3440, %v3438, %v2901
        %v3456 = vsel %vm3440, %v3439, %v2903
        %vm3457 = vcmask 162816
        %v3458 = vsel %vm3457, %v3441, %v2937
        %v3459 = vsel %vm3457, %v3442, %v2939
        %v3460 = vsel %vm3457, %v3443, %v2941
        %v3461 = vsel %vm3457, %v3444, %v2943
        %v3462 = vsel %vm3457, %v3445, %v2945
        %v3463 = vsel %vm3457, %v3446, %v2947
        %v3464 = vsel %vm3457, %v3447, %v2949
        %v3465 = vsel %vm3457, %v3448, %v2951
        %v3466 = vsel %vm3457, %v3449, %v2953
        %v3467 = vsel %vm3457, %v3450, %v2955
        %v3468 = vsel %vm3457, %v3451, %v2957
        %v3469 = vsel %vm3457, %v3452, %v2959
        %v3470 = vsel %vm3457, %v3453, %v2961
        %v3471 = vsel %vm3457, %v3454, %v2963
        %v3472 = vsel %vm3457, %v3455, %v2965
        %v3473 = vsel %vm3457, %v3456, %v2967
        %vm3474 = vcmask 179200
        %v3475 = vsel %vm3474, %v3458, %v3001
        %v3476 = vsel %vm3474, %v3459, %v3003
        %v3477 = vsel %vm3474, %v3460, %v3005
        %v3478 = vsel %vm3474, %v3461, %v3007
        %v3479 = vsel %vm3474, %v3462, %v3009
        %v3480 = vsel %vm3474, %v3463, %v3011
        %v3481 = vsel %vm3474, %v3464, %v3013
        %v3482 = vsel %vm3474, %v3465, %v3015
        %v3483 = vsel %vm3474, %v3466, %v3017
        %v3484 = vsel %vm3474, %v3467, %v3019
        %v3485 = vsel %vm3474, %v3468, %v3021
        %v3486 = vsel %vm3474, %v3469, %v3023
        %v3487 = vsel %vm3474, %v3470, %v3025
        %v3488 = vsel %vm3474, %v3471, %v3027
        %v3489 = vsel %vm3474, %v3472, %v3029
        %v3490 = vsel %vm3474, %v3473, %v3031
        %vm3491 = vcmask 195584
        %v3492 = vsel %vm3491, %v3475, %v3065
        %v3493 = vsel %vm3491, %v3476, %v3067
        %v3494 = vsel %vm3491, %v3477, %v3069
        %v3495 = vsel %vm3491, %v3478, %v3071
        %v3496 = vsel %vm3491, %v3479, %v3073
        %v3497 = vsel %vm3491, %v3480, %v3075
        %v3498 = vsel %vm3491, %v3481, %v3077
        %v3499 = vsel %vm3491, %v3482, %v3079
        %v3500 = vsel %vm3491, %v3483, %v3081
        %v3501 = vsel %vm3491, %v3484, %v3083
        %v3502 = vsel %vm3491, %v3485, %v3085
        %v3503 = vsel %vm3491, %v3486, %v3087
        %v3504 = vsel %vm3491, %v3487, %v3089
        %v3505 = vsel %vm3491, %v3488, %v3091
        %v3506 = vsel %vm3491, %v3489, %v3093
        %v3507 = vsel %vm3491, %v3490, %v3095
        %vm3508 = vcmask 211968
        %v3509 = vsel %vm3508, %v3492, %v3129
        %v3510 = vsel %vm3508, %v3493, %v3131
        %v3511 = vsel %vm3508, %v3494, %v3133
        %v3512 = vsel %vm3508, %v3495, %v3135
        %v3513 = vsel %vm3508, %v3496, %v3137
        %v3514 = vsel %vm3508, %v3497, %v3139
        %v3515 = vsel %vm3508, %v3498, %v3141
        %v3516 = vsel %vm3508, %v3499, %v3143
        %v3517 = vsel %vm3508, %v3500, %v3145
        %v3518 = vsel %vm3508, %v3501, %v3147
        %v3519 = vsel %vm3508, %v3502, %v3149
        %v3520 = vsel %vm3508, %v3503, %v3151
        %v3521 = vsel %vm3508, %v3504, %v3153
        %v3522 = vsel %vm3508, %v3505, %v3155
        %v3523 = vsel %vm3508, %v3506, %v3157
        %v3524 = vsel %vm3508, %v3507, %v3159
        %vm3525 = vcmask 228352
        %v3526 = vsel %vm3525, %v3509, %v3193
        %v3527 = vsel %vm3525, %v3510, %v3195
        %v3528 = vsel %vm3525, %v3511, %v3197
        %v3529 = vsel %vm3525, %v3512, %v3199
        %v3530 = vsel %vm3525, %v3513, %v3201
        %v3531 = vsel %vm3525, %v3514, %v3203
        %v3532 = vsel %vm3525, %v3515, %v3205
        %v3533 = vsel %vm3525, %v3516, %v3207
        %v3534 = vsel %vm3525, %v3517, %v3209
        %v3535 = vsel %vm3525, %v3518, %v3211
        %v3536 = vsel %vm3525, %v3519, %v3213
        %v3537 = vsel %vm3525, %v3520, %v3215
        %v3538 = vsel %vm3525, %v3521, %v3217
        %v3539 = vsel %vm3525, %v3522, %v3219
        %v3540 = vsel %vm3525, %v3523, %v3221
        %v3541 = vsel %vm3525, %v3524, %v3223
        %vm3542 = vcmask 244736
        %v3543 = vsel %vm3542, %v3526, %v3257
        %v3544 = vsel %vm3542, %v3527, %v3259
        %v3545 = vsel %vm3542, %v3528, %v3261
        %v3546 = vsel %vm3542, %v3529, %v3263
        %v3547 = vsel %vm3542, %v3530, %v3265
        %v3548 = vsel %vm3542, %v3531, %v3267
        %v3549 = vsel %vm3542, %v3532, %v3269
        %v3550 = vsel %vm3542, %v3533, %v3271
        %v3551 = vsel %vm3542, %v3534, %v3273
        %v3552 = vsel %vm3542, %v3535, %v3275
        %v3553 = vsel %vm3542, %v3536, %v3277
        %v3554 = vsel %vm3542, %v3537, %v3279
        %v3555 = vsel %vm3542, %v3538, %v3281
        %v3556 = vsel %vm3542, %v3539, %v3283
        %v3557 = vsel %vm3542, %v3540, %v3285
        %v3558 = vsel %vm3542, %v3541, %v3287
        %v3559 = vrot.slane %v1095, 4
        %v3560 = vsel %vm1128, 0.0, %v3559
        %v3562 = vunpack.c.l.s4 1983009808
        %v3563 = vunpack.c.0.s8 %v3562
        %v3564 = vperm.slane %v1095, %v3563
        %v3566 = vunpack.c.l.s4 1983009808
        %v3567 = vunpack.c.0.s8 %v3566
        %v3568 = vperm.slane %v3560, %v3567
        %v3569 = vrot.slane %v3564, 4
        %v3570 = vsel %vm1128, 0.0, %v3569
        %v3572 = vunpack.c.l.s4 1934713408
        %v3573 = vunpack.c.0.s8 %v3572
        %v3574 = vperm.slane %v3564, %v3573
        %v3576 = vunpack.c.l.s4 1934713408
        %v3577 = vunpack.c.0.s8 %v3576
        %v3578 = vperm.slane %v3570, %v3577
        %v3579 = vrot.slane %v3568, 4
        %v3580 = vsel %vm1128, 0.0, %v3579
        %v3582 = vunpack.c.l.s4 1934713408
        %v3583 = vunpack.c.0.s8 %v3582
        %v3584 = vperm.slane %v3568, %v3583
        %v3586 = vunpack.c.l.s4 1934713408
        %v3587 = vunpack.c.0.s8 %v3586
        %v3588 = vperm.slane %v3580, %v3587
        %v3589 = vrot.slane %v3574, 4
        %v3590 = vsel %vm1128, 0.0, %v3589
        %v3591 = vrot.slane %v3578, 4
        %v3592 = vsel %vm1128, 0.0, %v3591
        %v3593 = vrot.slane %v3584, 4
        %v3594 = vsel %vm1128, 0.0, %v3593
        %v3595 = vrot.slane %v3588, 4
        %v3596 = vsel %vm1128, 0.0, %v3595
        %v3597 = vrot.slane %v1096, 4
        %v3598 = vsel %vm1128, 0.0, %v3597
        %v3600 = vunpack.c.l.s4 1983009808
        %v3601 = vunpack.c.0.s8 %v3600
        %v3602 = vperm.slane %v1096, %v3601
        %v3604 = vunpack.c.l.s4 1983009808
        %v3605 = vunpack.c.0.s8 %v3604
        %v3606 = vperm.slane %v3598, %v3605
        %v3607 = vrot.slane %v3602, 4
        %v3608 = vsel %vm1128, 0.0, %v3607
        %v3610 = vunpack.c.l.s4 1934713408
        %v3611 = vunpack.c.0.s8 %v3610
        %v3612 = vperm.slane %v3602, %v3611
        %v3614 = vunpack.c.l.s4 1934713408
        %v3615 = vunpack.c.0.s8 %v3614
        %v3616 = vperm.slane %v3608, %v3615
        %v3617 = vrot.slane %v3606, 4
        %v3618 = vsel %vm1128, 0.0, %v3617
        %v3620 = vunpack.c.l.s4 1934713408
        %v3621 = vunpack.c.0.s8 %v3620
        %v3622 = vperm.slane %v3606, %v3621
        %v3624 = vunpack.c.l.s4 1934713408
        %v3625 = vunpack.c.0.s8 %v3624
        %v3626 = vperm.slane %v3618, %v3625
        %v3627 = vrot.slane %v3612, 4
        %v3628 = vsel %vm1128, 0.0, %v3627
        %v3629 = vrot.slane %v3616, 4
        %v3630 = vsel %vm1128, 0.0, %v3629
        %v3631 = vrot.slane %v3622, 4
        %v3632 = vsel %vm1128, 0.0, %v3631
        %v3633 = vrot.slane %v3626, 4
        %v3634 = vsel %vm1128, 0.0, %v3633
        %v3635 = vrot.slane %v1097, 4
        %v3636 = vsel %vm1128, 0.0, %v3635
        %v3638 = vunpack.c.l.s4 1983009808
        %v3639 = vunpack.c.0.s8 %v3638
        %v3640 = vperm.slane %v1097, %v3639
        %v3642 = vunpack.c.l.s4 1983009808
        %v3643 = vunpack.c.0.s8 %v3642
        %v3644 = vperm.slane %v3636, %v3643
        %v3645 = vrot.slane %v3640, 4
        %v3646 = vsel %vm1128, 0.0, %v3645
        %v3648 = vunpack.c.l.s4 1934713408
        %v3649 = vunpack.c.0.s8 %v3648
        %v3650 = vperm.slane %v3640, %v3649
        %v3652 = vunpack.c.l.s4 1934713408
        %v3653 = vunpack.c.0.s8 %v3652
        %v3654 = vperm.slane %v3646, %v3653
        %v3655 = vrot.slane %v3644, 4
        %v3656 = vsel %vm1128, 0.0, %v3655
        %v3658 = vunpack.c.l.s4 1934713408
        %v3659 = vunpack.c.0.s8 %v3658
        %v3660 = vperm.slane %v3644, %v3659
        %v3662 = vunpack.c.l.s4 1934713408
        %v3663 = vunpack.c.0.s8 %v3662
        %v3664 = vperm.slane %v3656, %v3663
        %v3665 = vrot.slane %v3650, 4
        %v3666 = vsel %vm1128, 0.0, %v3665
        %v3667 = vrot.slane %v3654, 4
        %v3668 = vsel %vm1128, 0.0, %v3667
        %v3669 = vrot.slane %v3660, 4
        %v3670 = vsel %vm1128, 0.0, %v3669
        %v3671 = vrot.slane %v3664, 4
        %v3672 = vsel %vm1128, 0.0, %v3671
        %v3673 = vrot.slane %v1098, 4
        %v3674 = vsel %vm1128, 0.0, %v3673
        %v3676 = vunpack.c.l.s4 1983009808
        %v3677 = vunpack.c.0.s8 %v3676
        %v3678 = vperm.slane %v1098, %v3677
        %v3680 = vunpack.c.l.s4 1983009808
        %v3681 = vunpack.c.0.s8 %v3680
        %v3682 = vperm.slane %v3674, %v3681
        %v3683 = vrot.slane %v3678, 4
        %v3684 = vsel %vm1128, 0.0, %v3683
        %v3686 = vunpack.c.l.s4 1934713408
        %v3687 = vunpack.c.0.s8 %v3686
        %v3688 = vperm.slane %v3678, %v3687
        %v3690 = vunpack.c.l.s4 1934713408
        %v3691 = vunpack.c.0.s8 %v3690
        %v3692 = vperm.slane %v3684, %v3691
        %v3693 = vrot.slane %v3682, 4
        %v3694 = vsel %vm1128, 0.0, %v3693
        %v3696 = vunpack.c.l.s4 1934713408
        %v3697 = vunpack.c.0.s8 %v3696
        %v3698 = vperm.slane %v3682, %v3697
        %v3700 = vunpack.c.l.s4 1934713408
        %v3701 = vunpack.c.0.s8 %v3700
        %v3702 = vperm.slane %v3694, %v3701
        %v3703 = vrot.slane %v3688, 4
        %v3704 = vsel %vm1128, 0.0, %v3703
        %v3705 = vrot.slane %v3692, 4
        %v3706 = vsel %vm1128, 0.0, %v3705
        %v3707 = vrot.slane %v3698, 4
        %v3708 = vsel %vm1128, 0.0, %v3707
        %v3709 = vrot.slane %v3702, 4
        %v3710 = vsel %vm1128, 0.0, %v3709
        %v3711 = vrot.slane %v1099, 4
        %v3712 = vsel %vm1128, 0.0, %v3711
        %v3714 = vunpack.c.l.s4 1983009808
        %v3715 = vunpack.c.0.s8 %v3714
        %v3716 = vperm.slane %v1099, %v3715
        %v3718 = vunpack.c.l.s4 1983009808
        %v3719 = vunpack.c.0.s8 %v3718
        %v3720 = vperm.slane %v3712, %v3719
        %v3721 = vrot.slane %v3716, 4
        %v3722 = vsel %vm1128, 0.0, %v3721
        %v3724 = vunpack.c.l.s4 1934713408
        %v3725 = vunpack.c.0.s8 %v3724
        %v3726 = vperm.slane %v3716, %v3725
        %v3728 = vunpack.c.l.s4 1934713408
        %v3729 = vunpack.c.0.s8 %v3728
        %v3730 = vperm.slane %v3722, %v3729
        %v3731 = vrot.slane %v3720, 4
        %v3732 = vsel %vm1128, 0.0, %v3731
        %v3734 = vunpack.c.l.s4 1934713408
        %v3735 = vunpack.c.0.s8 %v3734
        %v3736 = vperm.slane %v3720, %v3735
        %v3738 = vunpack.c.l.s4 1934713408
        %v3739 = vunpack.c.0.s8 %v3738
        %v3740 = vperm.slane %v3732, %v3739
        %v3741 = vrot.slane %v3726, 4
        %v3742 = vsel %vm1128, 0.0, %v3741
        %v3743 = vrot.slane %v3730, 4
        %v3744 = vsel %vm1128, 0.0, %v3743
        %v3745 = vrot.slane %v3736, 4
        %v3746 = vsel %vm1128, 0.0, %v3745
        %v3747 = vrot.slane %v3740, 4
        %v3748 = vsel %vm1128, 0.0, %v3747
        %v3749 = vrot.slane %v1100, 4
        %v3750 = vsel %vm1128, 0.0, %v3749
        %v3752 = vunpack.c.l.s4 1983009808
        %v3753 = vunpack.c.0.s8 %v3752
        %v3754 = vperm.slane %v1100, %v3753
        %v3756 = vunpack.c.l.s4 1983009808
        %v3757 = vunpack.c.0.s8 %v3756
        %v3758 = vperm.slane %v3750, %v3757
        %v3759 = vrot.slane %v3754, 4
        %v3760 = vsel %vm1128, 0.0, %v3759
        %v3762 = vunpack.c.l.s4 1934713408
        %v3763 = vunpack.c.0.s8 %v3762
        %v3764 = vperm.slane %v3754, %v3763
        %v3766 = vunpack.c.l.s4 1934713408
        %v3767 = vunpack.c.0.s8 %v3766
        %v3768 = vperm.slane %v3760, %v3767
        %v3769 = vrot.slane %v3758, 4
        %v3770 = vsel %vm1128, 0.0, %v3769
        %v3772 = vunpack.c.l.s4 1934713408
        %v3773 = vunpack.c.0.s8 %v3772
        %v3774 = vperm.slane %v3758, %v3773
        %v3776 = vunpack.c.l.s4 1934713408
        %v3777 = vunpack.c.0.s8 %v3776
        %v3778 = vperm.slane %v3770, %v3777
        %v3779 = vrot.slane %v3764, 4
        %v3780 = vsel %vm1128, 0.0, %v3779
        %v3781 = vrot.slane %v3768, 4
        %v3782 = vsel %vm1128, 0.0, %v3781
        %v3783 = vrot.slane %v3774, 4
        %v3784 = vsel %vm1128, 0.0, %v3783
        %v3785 = vrot.slane %v3778, 4
        %v3786 = vsel %vm1128, 0.0, %v3785
        %v3787 = vrot.slane %v1101, 4
        %v3788 = vsel %vm1128, 0.0, %v3787
        %v3790 = vunpack.c.l.s4 1983009808
        %v3791 = vunpack.c.0.s8 %v3790
        %v3792 = vperm.slane %v1101, %v3791
        %v3794 = vunpack.c.l.s4 1983009808
        %v3795 = vunpack.c.0.s8 %v3794
        %v3796 = vperm.slane %v3788, %v3795
        %v3797 = vrot.slane %v3792, 4
        %v3798 = vsel %vm1128, 0.0, %v3797
        %v3800 = vunpack.c.l.s4 1934713408
        %v3801 = vunpack.c.0.s8 %v3800
        %v3802 = vperm.slane %v3792, %v3801
        %v3804 = vunpack.c.l.s4 1934713408
        %v3805 = vunpack.c.0.s8 %v3804
        %v3806 = vperm.slane %v3798, %v3805
        %v3807 = vrot.slane %v3796, 4
        %v3808 = vsel %vm1128, 0.0, %v3807
        %v3810 = vunpack.c.l.s4 1934713408
        %v3811 = vunpack.c.0.s8 %v3810
        %v3812 = vperm.slane %v3796, %v3811
        %v3814 = vunpack.c.l.s4 1934713408
        %v3815 = vunpack.c.0.s8 %v3814
        %v3816 = vperm.slane %v3808, %v3815
        %v3817 = vrot.slane %v3802, 4
        %v3818 = vsel %vm1128, 0.0, %v3817
        %v3819 = vrot.slane %v3806, 4
        %v3820 = vsel %vm1128, 0.0, %v3819
        %v3821 = vrot.slane %v3812, 4
        %v3822 = vsel %vm1128, 0.0, %v3821
        %v3823 = vrot.slane %v3816, 4
        %v3824 = vsel %vm1128, 0.0, %v3823
        %v3825 = vrot.slane %v1102, 4
        %v3826 = vsel %vm1128, 0.0, %v3825
        %v3828 = vunpack.c.l.s4 1983009808
        %v3829 = vunpack.c.0.s8 %v3828
        %v3830 = vperm.slane %v1102, %v3829
        %v3832 = vunpack.c.l.s4 1983009808
        %v3833 = vunpack.c.0.s8 %v3832
        %v3834 = vperm.slane %v3826, %v3833
        %v3835 = vrot.slane %v3830, 4
        %v3836 = vsel %vm1128, 0.0, %v3835
        %v3838 = vunpack.c.l.s4 1934713408
        %v3839 = vunpack.c.0.s8 %v3838
        %v3840 = vperm.slane %v3830, %v3839
        %v3842 = vunpack.c.l.s4 1934713408
        %v3843 = vunpack.c.0.s8 %v3842
        %v3844 = vperm.slane %v3836, %v3843
        %v3845 = vrot.slane %v3834, 4
        %v3846 = vsel %vm1128, 0.0, %v3845
        %v3848 = vunpack.c.l.s4 1934713408
        %v3849 = vunpack.c.0.s8 %v3848
        %v3850 = vperm.slane %v3834, %v3849
        %v3852 = vunpack.c.l.s4 1934713408
        %v3853 = vunpack.c.0.s8 %v3852
        %v3854 = vperm.slane %v3846, %v3853
        %v3855 = vrot.slane %v3840, 4
        %v3856 = vsel %vm1128, 0.0, %v3855
        %v3857 = vrot.slane %v3844, 4
        %v3858 = vsel %vm1128, 0.0, %v3857
        %v3859 = vrot.slane %v3850, 4
        %v3860 = vsel %vm1128, 0.0, %v3859
        %v3861 = vrot.slane %v3854, 4
        %v3862 = vsel %vm1128, 0.0, %v3861
        %v3863 = vrot.slane %v1103, 4
        %v3864 = vsel %vm1128, 0.0, %v3863
        %v3866 = vunpack.c.l.s4 1983009808
        %v3867 = vunpack.c.0.s8 %v3866
        %v3868 = vperm.slane %v1103, %v3867
        %v3870 = vunpack.c.l.s4 1983009808
        %v3871 = vunpack.c.0.s8 %v3870
        %v3872 = vperm.slane %v3864, %v3871
        %v3873 = vrot.slane %v3868, 4
        %v3874 = vsel %vm1128, 0.0, %v3873
        %v3876 = vunpack.c.l.s4 1934713408
        %v3877 = vunpack.c.0.s8 %v3876
        %v3878 = vperm.slane %v3868, %v3877
        %v3880 = vunpack.c.l.s4 1934713408
        %v3881 = vunpack.c.0.s8 %v3880
        %v3882 = vperm.slane %v3874, %v3881
        %v3883 = vrot.slane %v3872, 4
        %v3884 = vsel %vm1128, 0.0, %v3883
        %v3886 = vunpack.c.l.s4 1934713408
        %v3887 = vunpack.c.0.s8 %v3886
        %v3888 = vperm.slane %v3872, %v3887
        %v3890 = vunpack.c.l.s4 1934713408
        %v3891 = vunpack.c.0.s8 %v3890
        %v3892 = vperm.slane %v3884, %v3891
        %v3893 = vrot.slane %v3878, 4
        %v3894 = vsel %vm1128, 0.0, %v3893
        %v3895 = vrot.slane %v3882, 4
        %v3896 = vsel %vm1128, 0.0, %v3895
        %v3897 = vrot.slane %v3888, 4
        %v3898 = vsel %vm1128, 0.0, %v3897
        %v3899 = vrot.slane %v3892, 4
        %v3900 = vsel %vm1128, 0.0, %v3899
        %v3901 = vrot.slane %v1104, 4
        %v3902 = vsel %vm1128, 0.0, %v3901
        %v3904 = vunpack.c.l.s4 1983009808
        %v3905 = vunpack.c.0.s8 %v3904
        %v3906 = vperm.slane %v1104, %v3905
        %v3908 = vunpack.c.l.s4 1983009808
        %v3909 = vunpack.c.0.s8 %v3908
        %v3910 = vperm.slane %v3902, %v3909
        %v3911 = vrot.slane %v3906, 4
        %v3912 = vsel %vm1128, 0.0, %v3911
        %v3914 = vunpack.c.l.s4 1934713408
        %v3915 = vunpack.c.0.s8 %v3914
        %v3916 = vperm.slane %v3906, %v3915
        %v3918 = vunpack.c.l.s4 1934713408
        %v3919 = vunpack.c.0.s8 %v3918
        %v3920 = vperm.slane %v3912, %v3919
        %v3921 = vrot.slane %v3910, 4
        %v3922 = vsel %vm1128, 0.0, %v3921
        %v3924 = vunpack.c.l.s4 1934713408
        %v3925 = vunpack.c.0.s8 %v3924
        %v3926 = vperm.slane %v3910, %v3925
        %v3928 = vunpack.c.l.s4 1934713408
        %v3929 = vunpack.c.0.s8 %v3928
        %v3930 = vperm.slane %v3922, %v3929
        %v3931 = vrot.slane %v3916, 4
        %v3932 = vsel %vm1128, 0.0, %v3931
        %v3933 = vrot.slane %v3920, 4
        %v3934 = vsel %vm1128, 0.0, %v3933
        %v3935 = vrot.slane %v3926, 4
        %v3936 = vsel %vm1128, 0.0, %v3935
        %v3937 = vrot.slane %v3930, 4
        %v3938 = vsel %vm1128, 0.0, %v3937
        %v3939 = vrot.slane %v1105, 4
        %v3940 = vsel %vm1128, 0.0, %v3939
        %v3942 = vunpack.c.l.s4 1983009808
        %v3943 = vunpack.c.0.s8 %v3942
        %v3944 = vperm.slane %v1105, %v3943
        %v3946 = vunpack.c.l.s4 1983009808
        %v3947 = vunpack.c.0.s8 %v3946
        %v3948 = vperm.slane %v3940, %v3947
        %v3949 = vrot.slane %v3944, 4
        %v3950 = vsel %vm1128, 0.0, %v3949
        %v3952 = vunpack.c.l.s4 1934713408
        %v3953 = vunpack.c.0.s8 %v3952
        %v3954 = vperm.slane %v3944, %v3953
        %v3956 = vunpack.c.l.s4 1934713408
        %v3957 = vunpack.c.0.s8 %v3956
        %v3958 = vperm.slane %v3950, %v3957
        %v3959 = vrot.slane %v3948, 4
        %v3960 = vsel %vm1128, 0.0, %v3959
        %v3962 = vunpack.c.l.s4 1934713408
        %v3963 = vunpack.c.0.s8 %v3962
        %v3964 = vperm.slane %v3948, %v3963
        %v3966 = vunpack.c.l.s4 1934713408
        %v3967 = vunpack.c.0.s8 %v3966
        %v3968 = vperm.slane %v3960, %v3967
        %v3969 = vrot.slane %v3954, 4
        %v3970 = vsel %vm1128, 0.0, %v3969
        %v3971 = vrot.slane %v3958, 4
        %v3972 = vsel %vm1128, 0.0, %v3971
        %v3973 = vrot.slane %v3964, 4
        %v3974 = vsel %vm1128, 0.0, %v3973
        %v3975 = vrot.slane %v3968, 4
        %v3976 = vsel %vm1128, 0.0, %v3975
        %v3977 = vrot.slane %v1106, 4
        %v3978 = vsel %vm1128, 0.0, %v3977
        %v3980 = vunpack.c.l.s4 1983009808
        %v3981 = vunpack.c.0.s8 %v3980
        %v3982 = vperm.slane %v1106, %v3981
        %v3984 = vunpack.c.l.s4 1983009808
        %v3985 = vunpack.c.0.s8 %v3984
        %v3986 = vperm.slane %v3978, %v3985
        %v3987 = vrot.slane %v3982, 4
        %v3988 = vsel %vm1128, 0.0, %v3987
        %v3990 = vunpack.c.l.s4 1934713408
        %v3991 = vunpack.c.0.s8 %v3990
        %v3992 = vperm.slane %v3982, %v3991
        %v3994 = vunpack.c.l.s4 1934713408
        %v3995 = vunpack.c.0.s8 %v3994
        %v3996 = vperm.slane %v3988, %v3995
        %v3997 = vrot.slane %v3986, 4
        %v3998 = vsel %vm1128, 0.0, %v3997
        %v4000 = vunpack.c.l.s4 1934713408
        %v4001 = vunpack.c.0.s8 %v4000
        %v4002 = vperm.slane %v3986, %v4001
        %v4004 = vunpack.c.l.s4 1934713408
        %v4005 = vunpack.c.0.s8 %v4004
        %v4006 = vperm.slane %v3998, %v4005
        %v4007 = vrot.slane %v3992, 4
        %v4008 = vsel %vm1128, 0.0, %v4007
        %v4009 = vrot.slane %v3996, 4
        %v4010 = vsel %vm1128, 0.0, %v4009
        %v4011 = vrot.slane %v4002, 4
        %v4012 = vsel %vm1128, 0.0, %v4011
        %v4013 = vrot.slane %v4006, 4
        %v4014 = vsel %vm1128, 0.0, %v4013
        %v4015 = vrot.slane %v1107, 4
        %v4016 = vsel %vm1128, 0.0, %v4015
        %v4018 = vunpack.c.l.s4 1983009808
        %v4019 = vunpack.c.0.s8 %v4018
        %v4020 = vperm.slane %v1107, %v4019
        %v4022 = vunpack.c.l.s4 1983009808
        %v4023 = vunpack.c.0.s8 %v4022
        %v4024 = vperm.slane %v4016, %v4023
        %v4025 = vrot.slane %v4020, 4
        %v4026 = vsel %vm1128, 0.0, %v4025
        %v4028 = vunpack.c.l.s4 1934713408
        %v4029 = vunpack.c.0.s8 %v4028
        %v4030 = vperm.slane %v4020, %v4029
        %v4032 = vunpack.c.l.s4 1934713408
        %v4033 = vunpack.c.0.s8 %v4032
        %v4034 = vperm.slane %v4026, %v4033
        %v4035 = vrot.slane %v4024, 4
        %v4036 = vsel %vm1128, 0.0, %v4035
        %v4038 = vunpack.c.l.s4 1934713408
        %v4039 = vunpack.c.0.s8 %v4038
        %v4040 = vperm.slane %v4024, %v4039
        %v4042 = vunpack.c.l.s4 1934713408
        %v4043 = vunpack.c.0.s8 %v4042
        %v4044 = vperm.slane %v4036, %v4043
        %v4045 = vrot.slane %v4030, 4
        %v4046 = vsel %vm1128, 0.0, %v4045
        %v4047 = vrot.slane %v4034, 4
        %v4048 = vsel %vm1128, 0.0, %v4047
        %v4049 = vrot.slane %v4040, 4
        %v4050 = vsel %vm1128, 0.0, %v4049
        %v4051 = vrot.slane %v4044, 4
        %v4052 = vsel %vm1128, 0.0, %v4051
        %v4053 = vrot.slane %v1108, 4
        %v4054 = vsel %vm1128, 0.0, %v4053
        %v4056 = vunpack.c.l.s4 1983009808
        %v4057 = vunpack.c.0.s8 %v4056
        %v4058 = vperm.slane %v1108, %v4057
        %v4060 = vunpack.c.l.s4 1983009808
        %v4061 = vunpack.c.0.s8 %v4060
        %v4062 = vperm.slane %v4054, %v4061
        %v4063 = vrot.slane %v4058, 4
        %v4064 = vsel %vm1128, 0.0, %v4063
        %v4066 = vunpack.c.l.s4 1934713408
        %v4067 = vunpack.c.0.s8 %v4066
        %v4068 = vperm.slane %v4058, %v4067
        %v4070 = vunpack.c.l.s4 1934713408
        %v4071 = vunpack.c.0.s8 %v4070
        %v4072 = vperm.slane %v4064, %v4071
        %v4073 = vrot.slane %v4062, 4
        %v4074 = vsel %vm1128, 0.0, %v4073
        %v4076 = vunpack.c.l.s4 1934713408
        %v4077 = vunpack.c.0.s8 %v4076
        %v4078 = vperm.slane %v4062, %v4077
        %v4080 = vunpack.c.l.s4 1934713408
        %v4081 = vunpack.c.0.s8 %v4080
        %v4082 = vperm.slane %v4074, %v4081
        %v4083 = vrot.slane %v4068, 4
        %v4084 = vsel %vm1128, 0.0, %v4083
        %v4085 = vrot.slane %v4072, 4
        %v4086 = vsel %vm1128, 0.0, %v4085
        %v4087 = vrot.slane %v4078, 4
        %v4088 = vsel %vm1128, 0.0, %v4087
        %v4089 = vrot.slane %v4082, 4
        %v4090 = vsel %vm1128, 0.0, %v4089
        %v4091 = vrot.slane %v1109, 4
        %v4092 = vsel %vm1128, 0.0, %v4091
        %v4094 = vunpack.c.l.s4 1983009808
        %v4095 = vunpack.c.0.s8 %v4094
        %v4096 = vperm.slane %v1109, %v4095
        %v4098 = vunpack.c.l.s4 1983009808
        %v4099 = vunpack.c.0.s8 %v4098
        %v4100 = vperm.slane %v4092, %v4099
        %v4101 = vrot.slane %v4096, 4
        %v4102 = vsel %vm1128, 0.0, %v4101
        %v4104 = vunpack.c.l.s4 1934713408
        %v4105 = vunpack.c.0.s8 %v4104
        %v4106 = vperm.slane %v4096, %v4105
        %v4108 = vunpack.c.l.s4 1934713408
        %v4109 = vunpack.c.0.s8 %v4108
        %v4110 = vperm.slane %v4102, %v4109
        %v4111 = vrot.slane %v4100, 4
        %v4112 = vsel %vm1128, 0.0, %v4111
        %v4114 = vunpack.c.l.s4 1934713408
        %v4115 = vunpack.c.0.s8 %v4114
        %v4116 = vperm.slane %v4100, %v4115
        %v4118 = vunpack.c.l.s4 1934713408
        %v4119 = vunpack.c.0.s8 %v4118
        %v4120 = vperm.slane %v4112, %v4119
        %v4121 = vrot.slane %v4106, 4
        %v4122 = vsel %vm1128, 0.0, %v4121
        %v4123 = vrot.slane %v4110, 4
        %v4124 = vsel %vm1128, 0.0, %v4123
        %v4125 = vrot.slane %v4116, 4
        %v4126 = vsel %vm1128, 0.0, %v4125
        %v4127 = vrot.slane %v4120, 4
        %v4128 = vsel %vm1128, 0.0, %v4127
        %v4129 = vrot.slane %v1110, 4
        %v4130 = vsel %vm1128, 0.0, %v4129
        %v4132 = vunpack.c.l.s4 1983009808
        %v4133 = vunpack.c.0.s8 %v4132
        %v4134 = vperm.slane %v1110, %v4133
        %v4136 = vunpack.c.l.s4 1983009808
        %v4137 = vunpack.c.0.s8 %v4136
        %v4138 = vperm.slane %v4130, %v4137
        %v4139 = vrot.slane %v4134, 4
        %v4140 = vsel %vm1128, 0.0, %v4139
        %v4142 = vunpack.c.l.s4 1934713408
        %v4143 = vunpack.c.0.s8 %v4142
        %v4144 = vperm.slane %v4134, %v4143
        %v4146 = vunpack.c.l.s4 1934713408
        %v4147 = vunpack.c.0.s8 %v4146
        %v4148 = vperm.slane %v4140, %v4147
        %v4149 = vrot.slane %v4138, 4
        %v4150 = vsel %vm1128, 0.0, %v4149
        %v4152 = vunpack.c.l.s4 1934713408
        %v4153 = vunpack.c.0.s8 %v4152
        %v4154 = vperm.slane %v4138, %v4153
        %v4156 = vunpack.c.l.s4 1934713408
        %v4157 = vunpack.c.0.s8 %v4156
        %v4158 = vperm.slane %v4150, %v4157
        %v4159 = vrot.slane %v4144, 4
        %v4160 = vsel %vm1128, 0.0, %v4159
        %v4161 = vrot.slane %v4148, 4
        %v4162 = vsel %vm1128, 0.0, %v4161
        %v4163 = vrot.slane %v4154, 4
        %v4164 = vsel %vm1128, 0.0, %v4163
        %v4165 = vrot.slane %v4158, 4
        %v4166 = vsel %vm1128, 0.0, %v4165
        %v4167 = vrot.slane %v1111, 4
        %v4168 = vsel %vm1128, 0.0, %v4167
        %v4170 = vunpack.c.l.s4 1983009808
        %v4171 = vunpack.c.0.s8 %v4170
        %v4172 = vperm.slane %v1111, %v4171
        %v4174 = vunpack.c.l.s4 1983009808
        %v4175 = vunpack.c.0.s8 %v4174
        %v4176 = vperm.slane %v4168, %v4175
        %v4177 = vrot.slane %v4172, 4
        %v4178 = vsel %vm1128, 0.0, %v4177
        %v4180 = vunpack.c.l.s4 1934713408
        %v4181 = vunpack.c.0.s8 %v4180
        %v4182 = vperm.slane %v4172, %v4181
        %v4184 = vunpack.c.l.s4 1934713408
        %v4185 = vunpack.c.0.s8 %v4184
        %v4186 = vperm.slane %v4178, %v4185
        %v4187 = vrot.slane %v4176, 4
        %v4188 = vsel %vm1128, 0.0, %v4187
        %v4190 = vunpack.c.l.s4 1934713408
        %v4191 = vunpack.c.0.s8 %v4190
        %v4192 = vperm.slane %v4176, %v4191
        %v4194 = vunpack.c.l.s4 1934713408
        %v4195 = vunpack.c.0.s8 %v4194
        %v4196 = vperm.slane %v4188, %v4195
        %v4197 = vrot.slane %v4182, 4
        %v4198 = vsel %vm1128, 0.0, %v4197
        %v4199 = vrot.slane %v4186, 4
        %v4200 = vsel %vm1128, 0.0, %v4199
        %v4201 = vrot.slane %v4192, 4
        %v4202 = vsel %vm1128, 0.0, %v4201
        %v4203 = vrot.slane %v4196, 4
        %v4204 = vsel %vm1128, 0.0, %v4203
        %v4205 = vrot.slane %v1112, 4
        %v4206 = vsel %vm1128, 0.0, %v4205
        %v4208 = vunpack.c.l.s4 1983009808
        %v4209 = vunpack.c.0.s8 %v4208
        %v4210 = vperm.slane %v1112, %v4209
        %v4212 = vunpack.c.l.s4 1983009808
        %v4213 = vunpack.c.0.s8 %v4212
        %v4214 = vperm.slane %v4206, %v4213
        %v4215 = vrot.slane %v4210, 4
        %v4216 = vsel %vm1128, 0.0, %v4215
        %v4218 = vunpack.c.l.s4 1934713408
        %v4219 = vunpack.c.0.s8 %v4218
        %v4220 = vperm.slane %v4210, %v4219
        %v4222 = vunpack.c.l.s4 1934713408
        %v4223 = vunpack.c.0.s8 %v4222
        %v4224 = vperm.slane %v4216, %v4223
        %v4225 = vrot.slane %v4214, 4
        %v4226 = vsel %vm1128, 0.0, %v4225
        %v4228 = vunpack.c.l.s4 1934713408
        %v4229 = vunpack.c.0.s8 %v4228
        %v4230 = vperm.slane %v4214, %v4229
        %v4232 = vunpack.c.l.s4 1934713408
        %v4233 = vunpack.c.0.s8 %v4232
        %v4234 = vperm.slane %v4226, %v4233
        %v4235 = vrot.slane %v4220, 4
        %v4236 = vsel %vm1128, 0.0, %v4235
        %v4237 = vrot.slane %v4224, 4
        %v4238 = vsel %vm1128, 0.0, %v4237
        %v4239 = vrot.slane %v4230, 4
        %v4240 = vsel %vm1128, 0.0, %v4239
        %v4241 = vrot.slane %v4234, 4
        %v4242 = vsel %vm1128, 0.0, %v4241
        %v4243 = vrot.slane %v1113, 4
        %v4244 = vsel %vm1128, 0.0, %v4243
        %v4246 = vunpack.c.l.s4 1983009808
        %v4247 = vunpack.c.0.s8 %v4246
        %v4248 = vperm.slane %v1113, %v4247
        %v4250 = vunpack.c.l.s4 1983009808
        %v4251 = vunpack.c.0.s8 %v4250
        %v4252 = vperm.slane %v4244, %v4251
        %v4253 = vrot.slane %v4248, 4
        %v4254 = vsel %vm1128, 0.0, %v4253
        %v4256 = vunpack.c.l.s4 1934713408
        %v4257 = vunpack.c.0.s8 %v4256
        %v4258 = vperm.slane %v4248, %v4257
        %v4260 = vunpack.c.l.s4 1934713408
        %v4261 = vunpack.c.0.s8 %v4260
        %v4262 = vperm.slane %v4254, %v4261
        %v4263 = vrot.slane %v4252, 4
        %v4264 = vsel %vm1128, 0.0, %v4263
        %v4266 = vunpack.c.l.s4 1934713408
        %v4267 = vunpack.c.0.s8 %v4266
        %v4268 = vperm.slane %v4252, %v4267
        %v4270 = vunpack.c.l.s4 1934713408
        %v4271 = vunpack.c.0.s8 %v4270
        %v4272 = vperm.slane %v4264, %v4271
        %v4273 = vrot.slane %v4258, 4
        %v4274 = vsel %vm1128, 0.0, %v4273
        %v4275 = vrot.slane %v4262, 4
        %v4276 = vsel %vm1128, 0.0, %v4275
        %v4277 = vrot.slane %v4268, 4
        %v4278 = vsel %vm1128, 0.0, %v4277
        %v4279 = vrot.slane %v4272, 4
        %v4280 = vsel %vm1128, 0.0, %v4279
        %v4281 = vrot.slane %v1114, 4
        %v4282 = vsel %vm1128, 0.0, %v4281
        %v4284 = vunpack.c.l.s4 1983009808
        %v4285 = vunpack.c.0.s8 %v4284
        %v4286 = vperm.slane %v1114, %v4285
        %v4288 = vunpack.c.l.s4 1983009808
        %v4289 = vunpack.c.0.s8 %v4288
        %v4290 = vperm.slane %v4282, %v4289
        %v4291 = vrot.slane %v4286, 4
        %v4292 = vsel %vm1128, 0.0, %v4291
        %v4294 = vunpack.c.l.s4 1934713408
        %v4295 = vunpack.c.0.s8 %v4294
        %v4296 = vperm.slane %v4286, %v4295
        %v4298 = vunpack.c.l.s4 1934713408
        %v4299 = vunpack.c.0.s8 %v4298
        %v4300 = vperm.slane %v4292, %v4299
        %v4301 = vrot.slane %v4290, 4
        %v4302 = vsel %vm1128, 0.0, %v4301
        %v4304 = vunpack.c.l.s4 1934713408
        %v4305 = vunpack.c.0.s8 %v4304
        %v4306 = vperm.slane %v4290, %v4305
        %v4308 = vunpack.c.l.s4 1934713408
        %v4309 = vunpack.c.0.s8 %v4308
        %v4310 = vperm.slane %v4302, %v4309
        %v4311 = vrot.slane %v4296, 4
        %v4312 = vsel %vm1128, 0.0, %v4311
        %v4313 = vrot.slane %v4300, 4
        %v4314 = vsel %vm1128, 0.0, %v4313
        %v4315 = vrot.slane %v4306, 4
        %v4316 = vsel %vm1128, 0.0, %v4315
        %v4317 = vrot.slane %v4310, 4
        %v4318 = vsel %vm1128, 0.0, %v4317
        %v4319 = vrot.slane %v1115, 4
        %v4320 = vsel %vm1128, 0.0, %v4319
        %v4322 = vunpack.c.l.s4 1983009808
        %v4323 = vunpack.c.0.s8 %v4322
        %v4324 = vperm.slane %v1115, %v4323
        %v4326 = vunpack.c.l.s4 1983009808
        %v4327 = vunpack.c.0.s8 %v4326
        %v4328 = vperm.slane %v4320, %v4327
        %v4329 = vrot.slane %v4324, 4
        %v4330 = vsel %vm1128, 0.0, %v4329
        %v4332 = vunpack.c.l.s4 1934713408
        %v4333 = vunpack.c.0.s8 %v4332
        %v4334 = vperm.slane %v4324, %v4333
        %v4336 = vunpack.c.l.s4 1934713408
        %v4337 = vunpack.c.0.s8 %v4336
        %v4338 = vperm.slane %v4330, %v4337
        %v4339 = vrot.slane %v4328, 4
        %v4340 = vsel %vm1128, 0.0, %v4339
        %v4342 = vunpack.c.l.s4 1934713408
        %v4343 = vunpack.c.0.s8 %v4342
        %v4344 = vperm.slane %v4328, %v4343
        %v4346 = vunpack.c.l.s4 1934713408
        %v4347 = vunpack.c.0.s8 %v4346
        %v4348 = vperm.slane %v4340, %v4347
        %v4349 = vrot.slane %v4334, 4
        %v4350 = vsel %vm1128, 0.0, %v4349
        %v4351 = vrot.slane %v4338, 4
        %v4352 = vsel %vm1128, 0.0, %v4351
        %v4353 = vrot.slane %v4344, 4
        %v4354 = vsel %vm1128, 0.0, %v4353
        %v4355 = vrot.slane %v4348, 4
        %v4356 = vsel %vm1128, 0.0, %v4355
        %v4357 = vrot.slane %v1116, 4
        %v4358 = vsel %vm1128, 0.0, %v4357
        %v4360 = vunpack.c.l.s4 1983009808
        %v4361 = vunpack.c.0.s8 %v4360
        %v4362 = vperm.slane %v1116, %v4361
        %v4364 = vunpack.c.l.s4 1983009808
        %v4365 = vunpack.c.0.s8 %v4364
        %v4366 = vperm.slane %v4358, %v4365
        %v4367 = vrot.slane %v4362, 4
        %v4368 = vsel %vm1128, 0.0, %v4367
        %v4370 = vunpack.c.l.s4 1934713408
        %v4371 = vunpack.c.0.s8 %v4370
        %v4372 = vperm.slane %v4362, %v4371
        %v4374 = vunpack.c.l.s4 1934713408
        %v4375 = vunpack.c.0.s8 %v4374
        %v4376 = vperm.slane %v4368, %v4375
        %v4377 = vrot.slane %v4366, 4
        %v4378 = vsel %vm1128, 0.0, %v4377
        %v4380 = vunpack.c.l.s4 1934713408
        %v4381 = vunpack.c.0.s8 %v4380
        %v4382 = vperm.slane %v4366, %v4381
        %v4384 = vunpack.c.l.s4 1934713408
        %v4385 = vunpack.c.0.s8 %v4384
        %v4386 = vperm.slane %v4378, %v4385
        %v4387 = vrot.slane %v4372, 4
        %v4388 = vsel %vm1128, 0.0, %v4387
        %v4389 = vrot.slane %v4376, 4
        %v4390 = vsel %vm1128, 0.0, %v4389
        %v4391 = vrot.slane %v4382, 4
        %v4392 = vsel %vm1128, 0.0, %v4391
        %v4393 = vrot.slane %v4386, 4
        %v4394 = vsel %vm1128, 0.0, %v4393
        %v4395 = vrot.slane %v1117, 4
        %v4396 = vsel %vm1128, 0.0, %v4395
        %v4398 = vunpack.c.l.s4 1983009808
        %v4399 = vunpack.c.0.s8 %v4398
        %v4400 = vperm.slane %v1117, %v4399
        %v4402 = vunpack.c.l.s4 1983009808
        %v4403 = vunpack.c.0.s8 %v4402
        %v4404 = vperm.slane %v4396, %v4403
        %v4405 = vrot.slane %v4400, 4
        %v4406 = vsel %vm1128, 0.0, %v4405
        %v4408 = vunpack.c.l.s4 1934713408
        %v4409 = vunpack.c.0.s8 %v4408
        %v4410 = vperm.slane %v4400, %v4409
        %v4412 = vunpack.c.l.s4 1934713408
        %v4413 = vunpack.c.0.s8 %v4412
        %v4414 = vperm.slane %v4406, %v4413
        %v4415 = vrot.slane %v4404, 4
        %v4416 = vsel %vm1128, 0.0, %v4415
        %v4418 = vunpack.c.l.s4 1934713408
        %v4419 = vunpack.c.0.s8 %v4418
        %v4420 = vperm.slane %v4404, %v4419
        %v4422 = vunpack.c.l.s4 1934713408
        %v4423 = vunpack.c.0.s8 %v4422
        %v4424 = vperm.slane %v4416, %v4423
        %v4425 = vrot.slane %v4410, 4
        %v4426 = vsel %vm1128, 0.0, %v4425
        %v4427 = vrot.slane %v4414, 4
        %v4428 = vsel %vm1128, 0.0, %v4427
        %v4429 = vrot.slane %v4420, 4
        %v4430 = vsel %vm1128, 0.0, %v4429
        %v4431 = vrot.slane %v4424, 4
        %v4432 = vsel %vm1128, 0.0, %v4431
        %v4433 = vrot.slane %v1118, 4
        %v4434 = vsel %vm1128, 0.0, %v4433
        %v4436 = vunpack.c.l.s4 1983009808
        %v4437 = vunpack.c.0.s8 %v4436
        %v4438 = vperm.slane %v1118, %v4437
        %v4440 = vunpack.c.l.s4 1983009808
        %v4441 = vunpack.c.0.s8 %v4440
        %v4442 = vperm.slane %v4434, %v4441
        %v4443 = vrot.slane %v4438, 4
        %v4444 = vsel %vm1128, 0.0, %v4443
        %v4446 = vunpack.c.l.s4 1934713408
        %v4447 = vunpack.c.0.s8 %v4446
        %v4448 = vperm.slane %v4438, %v4447
        %v4450 = vunpack.c.l.s4 1934713408
        %v4451 = vunpack.c.0.s8 %v4450
        %v4452 = vperm.slane %v4444, %v4451
        %v4453 = vrot.slane %v4442, 4
        %v4454 = vsel %vm1128, 0.0, %v4453
        %v4456 = vunpack.c.l.s4 1934713408
        %v4457 = vunpack.c.0.s8 %v4456
        %v4458 = vperm.slane %v4442, %v4457
        %v4460 = vunpack.c.l.s4 1934713408
        %v4461 = vunpack.c.0.s8 %v4460
        %v4462 = vperm.slane %v4454, %v4461
        %v4463 = vrot.slane %v4448, 4
        %v4464 = vsel %vm1128, 0.0, %v4463
        %v4465 = vrot.slane %v4452, 4
        %v4466 = vsel %vm1128, 0.0, %v4465
        %v4467 = vrot.slane %v4458, 4
        %v4468 = vsel %vm1128, 0.0, %v4467
        %v4469 = vrot.slane %v4462, 4
        %v4470 = vsel %vm1128, 0.0, %v4469
        %v4471 = vrot.slane %v1119, 4
        %v4472 = vsel %vm1128, 0.0, %v4471
        %v4474 = vunpack.c.l.s4 1983009808
        %v4475 = vunpack.c.0.s8 %v4474
        %v4476 = vperm.slane %v1119, %v4475
        %v4478 = vunpack.c.l.s4 1983009808
        %v4479 = vunpack.c.0.s8 %v4478
        %v4480 = vperm.slane %v4472, %v4479
        %v4481 = vrot.slane %v4476, 4
        %v4482 = vsel %vm1128, 0.0, %v4481
        %v4484 = vunpack.c.l.s4 1934713408
        %v4485 = vunpack.c.0.s8 %v4484
        %v4486 = vperm.slane %v4476, %v4485
        %v4488 = vunpack.c.l.s4 1934713408
        %v4489 = vunpack.c.0.s8 %v4488
        %v4490 = vperm.slane %v4482, %v4489
        %v4491 = vrot.slane %v4480, 4
        %v4492 = vsel %vm1128, 0.0, %v4491
        %v4494 = vunpack.c.l.s4 1934713408
        %v4495 = vunpack.c.0.s8 %v4494
        %v4496 = vperm.slane %v4480, %v4495
        %v4498 = vunpack.c.l.s4 1934713408
        %v4499 = vunpack.c.0.s8 %v4498
        %v4500 = vperm.slane %v4492, %v4499
        %v4501 = vrot.slane %v4486, 4
        %v4502 = vsel %vm1128, 0.0, %v4501
        %v4503 = vrot.slane %v4490, 4
        %v4504 = vsel %vm1128, 0.0, %v4503
        %v4505 = vrot.slane %v4496, 4
        %v4506 = vsel %vm1128, 0.0, %v4505
        %v4507 = vrot.slane %v4500, 4
        %v4508 = vsel %vm1128, 0.0, %v4507
        %v4509 = vrot.slane %v1120, 4
        %v4510 = vsel %vm1128, 0.0, %v4509
        %v4512 = vunpack.c.l.s4 1983009808
        %v4513 = vunpack.c.0.s8 %v4512
        %v4514 = vperm.slane %v1120, %v4513
        %v4516 = vunpack.c.l.s4 1983009808
        %v4517 = vunpack.c.0.s8 %v4516
        %v4518 = vperm.slane %v4510, %v4517
        %v4519 = vrot.slane %v4514, 4
        %v4520 = vsel %vm1128, 0.0, %v4519
        %v4522 = vunpack.c.l.s4 1934713408
        %v4523 = vunpack.c.0.s8 %v4522
        %v4524 = vperm.slane %v4514, %v4523
        %v4526 = vunpack.c.l.s4 1934713408
        %v4527 = vunpack.c.0.s8 %v4526
        %v4528 = vperm.slane %v4520, %v4527
        %v4529 = vrot.slane %v4518, 4
        %v4530 = vsel %vm1128, 0.0, %v4529
        %v4532 = vunpack.c.l.s4 1934713408
        %v4533 = vunpack.c.0.s8 %v4532
        %v4534 = vperm.slane %v4518, %v4533
        %v4536 = vunpack.c.l.s4 1934713408
        %v4537 = vunpack.c.0.s8 %v4536
        %v4538 = vperm.slane %v4530, %v4537
        %v4539 = vrot.slane %v4524, 4
        %v4540 = vsel %vm1128, 0.0, %v4539
        %v4541 = vrot.slane %v4528, 4
        %v4542 = vsel %vm1128, 0.0, %v4541
        %v4543 = vrot.slane %v4534, 4
        %v4544 = vsel %vm1128, 0.0, %v4543
        %v4545 = vrot.slane %v4538, 4
        %v4546 = vsel %vm1128, 0.0, %v4545
        %v4547 = vrot.slane %v1121, 4
        %v4548 = vsel %vm1128, 0.0, %v4547
        %v4550 = vunpack.c.l.s4 1983009808
        %v4551 = vunpack.c.0.s8 %v4550
        %v4552 = vperm.slane %v1121, %v4551
        %v4554 = vunpack.c.l.s4 1983009808
        %v4555 = vunpack.c.0.s8 %v4554
        %v4556 = vperm.slane %v4548, %v4555
        %v4557 = vrot.slane %v4552, 4
        %v4558 = vsel %vm1128, 0.0, %v4557
        %v4560 = vunpack.c.l.s4 1934713408
        %v4561 = vunpack.c.0.s8 %v4560
        %v4562 = vperm.slane %v4552, %v4561
        %v4564 = vunpack.c.l.s4 1934713408
        %v4565 = vunpack.c.0.s8 %v4564
        %v4566 = vperm.slane %v4558, %v4565
        %v4567 = vrot.slane %v4556, 4
        %v4568 = vsel %vm1128, 0.0, %v4567
        %v4570 = vunpack.c.l.s4 1934713408
        %v4571 = vunpack.c.0.s8 %v4570
        %v4572 = vperm.slane %v4556, %v4571
        %v4574 = vunpack.c.l.s4 1934713408
        %v4575 = vunpack.c.0.s8 %v4574
        %v4576 = vperm.slane %v4568, %v4575
        %v4577 = vrot.slane %v4562, 4
        %v4578 = vsel %vm1128, 0.0, %v4577
        %v4579 = vrot.slane %v4566, 4
        %v4580 = vsel %vm1128, 0.0, %v4579
        %v4581 = vrot.slane %v4572, 4
        %v4582 = vsel %vm1128, 0.0, %v4581
        %v4583 = vrot.slane %v4576, 4
        %v4584 = vsel %vm1128, 0.0, %v4583
        %v4585 = vrot.slane %v1122, 4
        %v4586 = vsel %vm1128, 0.0, %v4585
        %v4588 = vunpack.c.l.s4 1983009808
        %v4589 = vunpack.c.0.s8 %v4588
        %v4590 = vperm.slane %v1122, %v4589
        %v4592 = vunpack.c.l.s4 1983009808
        %v4593 = vunpack.c.0.s8 %v4592
        %v4594 = vperm.slane %v4586, %v4593
        %v4595 = vrot.slane %v4590, 4
        %v4596 = vsel %vm1128, 0.0, %v4595
        %v4598 = vunpack.c.l.s4 1934713408
        %v4599 = vunpack.c.0.s8 %v4598
        %v4600 = vperm.slane %v4590, %v4599
        %v4602 = vunpack.c.l.s4 1934713408
        %v4603 = vunpack.c.0.s8 %v4602
        %v4604 = vperm.slane %v4596, %v4603
        %v4605 = vrot.slane %v4594, 4
        %v4606 = vsel %vm1128, 0.0, %v4605
        %v4608 = vunpack.c.l.s4 1934713408
        %v4609 = vunpack.c.0.s8 %v4608
        %v4610 = vperm.slane %v4594, %v4609
        %v4612 = vunpack.c.l.s4 1934713408
        %v4613 = vunpack.c.0.s8 %v4612
        %v4614 = vperm.slane %v4606, %v4613
        %v4615 = vrot.slane %v4600, 4
        %v4616 = vsel %vm1128, 0.0, %v4615
        %v4617 = vrot.slane %v4604, 4
        %v4618 = vsel %vm1128, 0.0, %v4617
        %v4619 = vrot.slane %v4610, 4
        %v4620 = vsel %vm1128, 0.0, %v4619
        %v4621 = vrot.slane %v4614, 4
        %v4622 = vsel %vm1128, 0.0, %v4621
        %v4623 = vrot.slane %v1123, 4
        %v4624 = vsel %vm1128, 0.0, %v4623
        %v4626 = vunpack.c.l.s4 1983009808
        %v4627 = vunpack.c.0.s8 %v4626
        %v4628 = vperm.slane %v1123, %v4627
        %v4630 = vunpack.c.l.s4 1983009808
        %v4631 = vunpack.c.0.s8 %v4630
        %v4632 = vperm.slane %v4624, %v4631
        %v4633 = vrot.slane %v4628, 4
        %v4634 = vsel %vm1128, 0.0, %v4633
        %v4636 = vunpack.c.l.s4 1934713408
        %v4637 = vunpack.c.0.s8 %v4636
        %v4638 = vperm.slane %v4628, %v4637
        %v4640 = vunpack.c.l.s4 1934713408
        %v4641 = vunpack.c.0.s8 %v4640
        %v4642 = vperm.slane %v4634, %v4641
        %v4643 = vrot.slane %v4632, 4
        %v4644 = vsel %vm1128, 0.0, %v4643
        %v4646 = vunpack.c.l.s4 1934713408
        %v4647 = vunpack.c.0.s8 %v4646
        %v4648 = vperm.slane %v4632, %v4647
        %v4650 = vunpack.c.l.s4 1934713408
        %v4651 = vunpack.c.0.s8 %v4650
        %v4652 = vperm.slane %v4644, %v4651
        %v4653 = vrot.slane %v4638, 4
        %v4654 = vsel %vm1128, 0.0, %v4653
        %v4655 = vrot.slane %v4642, 4
        %v4656 = vsel %vm1128, 0.0, %v4655
        %v4657 = vrot.slane %v4648, 4
        %v4658 = vsel %vm1128, 0.0, %v4657
        %v4659 = vrot.slane %v4652, 4
        %v4660 = vsel %vm1128, 0.0, %v4659
        %v4661 = vrot.slane %v1124, 4
        %v4662 = vsel %vm1128, 0.0, %v4661
        %v4664 = vunpack.c.l.s4 1983009808
        %v4665 = vunpack.c.0.s8 %v4664
        %v4666 = vperm.slane %v1124, %v4665
        %v4668 = vunpack.c.l.s4 1983009808
        %v4669 = vunpack.c.0.s8 %v4668
        %v4670 = vperm.slane %v4662, %v4669
        %v4671 = vrot.slane %v4666, 4
        %v4672 = vsel %vm1128, 0.0, %v4671
        %v4674 = vunpack.c.l.s4 1934713408
        %v4675 = vunpack.c.0.s8 %v4674
        %v4676 = vperm.slane %v4666, %v4675
        %v4678 = vunpack.c.l.s4 1934713408
        %v4679 = vunpack.c.0.s8 %v4678
        %v4680 = vperm.slane %v4672, %v4679
        %v4681 = vrot.slane %v4670, 4
        %v4682 = vsel %vm1128, 0.0, %v4681
        %v4684 = vunpack.c.l.s4 1934713408
        %v4685 = vunpack.c.0.s8 %v4684
        %v4686 = vperm.slane %v4670, %v4685
        %v4688 = vunpack.c.l.s4 1934713408
        %v4689 = vunpack.c.0.s8 %v4688
        %v4690 = vperm.slane %v4682, %v4689
        %v4691 = vrot.slane %v4676, 4
        %v4692 = vsel %vm1128, 0.0, %v4691
        %v4693 = vrot.slane %v4680, 4
        %v4694 = vsel %vm1128, 0.0, %v4693
        %v4695 = vrot.slane %v4686, 4
        %v4696 = vsel %vm1128, 0.0, %v4695
        %v4697 = vrot.slane %v4690, 4
        %v4698 = vsel %vm1128, 0.0, %v4697
        %v4699 = vrot.slane %v1125, 4
        %v4700 = vsel %vm1128, 0.0, %v4699
        %v4702 = vunpack.c.l.s4 1983009808
        %v4703 = vunpack.c.0.s8 %v4702
        %v4704 = vperm.slane %v1125, %v4703
        %v4706 = vunpack.c.l.s4 1983009808
        %v4707 = vunpack.c.0.s8 %v4706
        %v4708 = vperm.slane %v4700, %v4707
        %v4709 = vrot.slane %v4704, 4
        %v4710 = vsel %vm1128, 0.0, %v4709
        %v4712 = vunpack.c.l.s4 1934713408
        %v4713 = vunpack.c.0.s8 %v4712
        %v4714 = vperm.slane %v4704, %v4713
        %v4716 = vunpack.c.l.s4 1934713408
        %v4717 = vunpack.c.0.s8 %v4716
        %v4718 = vperm.slane %v4710, %v4717
        %v4719 = vrot.slane %v4708, 4
        %v4720 = vsel %vm1128, 0.0, %v4719
        %v4722 = vunpack.c.l.s4 1934713408
        %v4723 = vunpack.c.0.s8 %v4722
        %v4724 = vperm.slane %v4708, %v4723
        %v4726 = vunpack.c.l.s4 1934713408
        %v4727 = vunpack.c.0.s8 %v4726
        %v4728 = vperm.slane %v4720, %v4727
        %v4729 = vrot.slane %v4714, 4
        %v4730 = vsel %vm1128, 0.0, %v4729
        %v4731 = vrot.slane %v4718, 4
        %v4732 = vsel %vm1128, 0.0, %v4731
        %v4733 = vrot.slane %v4724, 4
        %v4734 = vsel %vm1128, 0.0, %v4733
        %v4735 = vrot.slane %v4728, 4
        %v4736 = vsel %vm1128, 0.0, %v4735
        %v4737 = vrot.slane %v1126, 4
        %v4738 = vsel %vm1128, 0.0, %v4737
        %v4740 = vunpack.c.l.s4 1983009808
        %v4741 = vunpack.c.0.s8 %v4740
        %v4742 = vperm.slane %v1126, %v4741
        %v4744 = vunpack.c.l.s4 1983009808
        %v4745 = vunpack.c.0.s8 %v4744
        %v4746 = vperm.slane %v4738, %v4745
        %v4747 = vrot.slane %v4742, 4
        %v4748 = vsel %vm1128, 0.0, %v4747
        %v4750 = vunpack.c.l.s4 1934713408
        %v4751 = vunpack.c.0.s8 %v4750
        %v4752 = vperm.slane %v4742, %v4751
        %v4754 = vunpack.c.l.s4 1934713408
        %v4755 = vunpack.c.0.s8 %v4754
        %v4756 = vperm.slane %v4748, %v4755
        %v4757 = vrot.slane %v4746, 4
        %v4758 = vsel %vm1128, 0.0, %v4757
        %v4760 = vunpack.c.l.s4 1934713408
        %v4761 = vunpack.c.0.s8 %v4760
        %v4762 = vperm.slane %v4746, %v4761
        %v4764 = vunpack.c.l.s4 1934713408
        %v4765 = vunpack.c.0.s8 %v4764
        %v4766 = vperm.slane %v4758, %v4765
        %v4767 = vrot.slane %v4752, 4
        %v4768 = vsel %vm1128, 0.0, %v4767
        %v4769 = vrot.slane %v4756, 4
        %v4770 = vsel %vm1128, 0.0, %v4769
        %v4771 = vrot.slane %v4762, 4
        %v4772 = vsel %vm1128, 0.0, %v4771
        %v4773 = vrot.slane %v4766, 4
        %v4774 = vsel %vm1128, 0.0, %v4773
        %4791 = vrot.lane.b32.xlu0 %v3590, 2
        %v4792 = vpop.permute.xlu0 %4791
        %4793 = vrot.lane.b32.xlu0 %v3666, 2
        %v4794 = vpop.permute.xlu0 %4793
        %4795 = vrot.lane.b32.xlu0 %v3742, 2
        %v4796 = vpop.permute.xlu0 %4795
        %4797 = vrot.lane.b32.xlu0 %v3818, 2
        %v4798 = vpop.permute.xlu0 %4797
        %4799 = vrot.lane.b32.xlu0 %v3894, 2
        %v4800 = vpop.permute.xlu0 %4799
        %4801 = vrot.lane.b32.xlu0 %v3970, 2
        %v4802 = vpop.permute.xlu0 %4801
        %4803 = vrot.lane.b32.xlu0 %v4046, 2
        %v4804 = vpop.permute.xlu0 %4803
        %4805 = vrot.lane.b32.xlu0 %v4122, 2
        %v4806 = vpop.permute.xlu0 %4805
        %4807 = vrot.lane.b32.xlu0 %v4198, 2
        %v4808 = vpop.permute.xlu0 %4807
        %4809 = vrot.lane.b32.xlu0 %v4274, 2
        %v4810 = vpop.permute.xlu0 %4809
        %4811 = vrot.lane.b32.xlu0 %v4350, 2
        %v4812 = vpop.permute.xlu0 %4811
        %4813 = vrot.lane.b32.xlu0 %v4426, 2
        %v4814 = vpop.permute.xlu0 %4813
        %4815 = vrot.lane.b32.xlu0 %v4502, 2
        %v4816 = vpop.permute.xlu0 %4815
        %4817 = vrot.lane.b32.xlu0 %v4578, 2
        %v4818 = vpop.permute.xlu0 %4817
        %4819 = vrot.lane.b32.xlu0 %v4654, 2
        %v4820 = vpop.permute.xlu0 %4819
        %4821 = vrot.lane.b32.xlu0 %v4730, 2
        %v4822 = vpop.permute.xlu0 %4821
        %4855 = vrot.lane.b32.xlu0 %v3578, 4
        %v4856 = vpop.permute.xlu0 %4855
        %4857 = vrot.lane.b32.xlu0 %v3654, 4
        %v4858 = vpop.permute.xlu0 %4857
        %4859 = vrot.lane.b32.xlu0 %v3730, 4
        %v4860 = vpop.permute.xlu0 %4859
        %4861 = vrot.lane.b32.xlu0 %v3806, 4
        %v4862 = vpop.permute.xlu0 %4861
        %4863 = vrot.lane.b32.xlu0 %v3882, 4
        %v4864 = vpop.permute.xlu0 %4863
        %4865 = vrot.lane.b32.xlu0 %v3958, 4
        %v4866 = vpop.permute.xlu0 %4865
        %4867 = vrot.lane.b32.xlu0 %v4034, 4
        %v4868 = vpop.permute.xlu0 %4867
        %4869 = vrot.lane.b32.xlu0 %v4110, 4
        %v4870 = vpop.permute.xlu0 %4869
        %4871 = vrot.lane.b32.xlu0 %v4186, 4
        %v4872 = vpop.permute.xlu0 %4871
        %4873 = vrot.lane.b32.xlu0 %v4262, 4
        %v4874 = vpop.permute.xlu0 %4873
        %4875 = vrot.lane.b32.xlu0 %v4338, 4
        %v4876 = vpop.permute.xlu0 %4875
        %4877 = vrot.lane.b32.xlu0 %v4414, 4
        %v4878 = vpop.permute.xlu0 %4877
        %4879 = vrot.lane.b32.xlu0 %v4490, 4
        %v4880 = vpop.permute.xlu0 %4879
        %4881 = vrot.lane.b32.xlu0 %v4566, 4
        %v4882 = vpop.permute.xlu0 %4881
        %4883 = vrot.lane.b32.xlu0 %v4642, 4
        %v4884 = vpop.permute.xlu0 %4883
        %4885 = vrot.lane.b32.xlu0 %v4718, 4
        %v4886 = vpop.permute.xlu0 %4885
        %4919 = vrot.lane.b32.xlu0 %v3592, 6
        %v4920 = vpop.permute.xlu0 %4919
        %4921 = vrot.lane.b32.xlu0 %v3668, 6
        %v4922 = vpop.permute.xlu0 %4921
        %4923 = vrot.lane.b32.xlu0 %v3744, 6
        %v4924 = vpop.permute.xlu0 %4923
        %4925 = vrot.lane.b32.xlu0 %v3820, 6
        %v4926 = vpop.permute.xlu0 %4925
        %4927 = vrot.lane.b32.xlu0 %v3896, 6
        %v4928 = vpop.permute.xlu0 %4927
        %4929 = vrot.lane.b32.xlu0 %v3972, 6
        %v4930 = vpop.permute.xlu0 %4929
        %4931 = vrot.lane.b32.xlu0 %v4048, 6
        %v4932 = vpop.permute.xlu0 %4931
        %4933 = vrot.lane.b32.xlu0 %v4124, 6
        %v4934 = vpop.permute.xlu0 %4933
        %4935 = vrot.lane.b32.xlu0 %v4200, 6
        %v4936 = vpop.permute.xlu0 %4935
        %4937 = vrot.lane.b32.xlu0 %v4276, 6
        %v4938 = vpop.permute.xlu0 %4937
        %4939 = vrot.lane.b32.xlu0 %v4352, 6
        %v4940 = vpop.permute.xlu0 %4939
        %4941 = vrot.lane.b32.xlu0 %v4428, 6
        %v4942 = vpop.permute.xlu0 %4941
        %4943 = vrot.lane.b32.xlu0 %v4504, 6
        %v4944 = vpop.permute.xlu0 %4943
        %4945 = vrot.lane.b32.xlu0 %v4580, 6
        %v4946 = vpop.permute.xlu0 %4945
        %4947 = vrot.lane.b32.xlu0 %v4656, 6
        %v4948 = vpop.permute.xlu0 %4947
        %4949 = vrot.lane.b32.xlu0 %v4732, 6
        %v4950 = vpop.permute.xlu0 %4949
        %4983 = vrot.lane.b32.xlu0 %v3584, 8
        %v4984 = vpop.permute.xlu0 %4983
        %4985 = vrot.lane.b32.xlu0 %v3660, 8
        %v4986 = vpop.permute.xlu0 %4985
        %4987 = vrot.lane.b32.xlu0 %v3736, 8
        %v4988 = vpop.permute.xlu0 %4987
        %4989 = vrot.lane.b32.xlu0 %v3812, 8
        %v4990 = vpop.permute.xlu0 %4989
        %4991 = vrot.lane.b32.xlu0 %v3888, 8
        %v4992 = vpop.permute.xlu0 %4991
        %4993 = vrot.lane.b32.xlu0 %v3964, 8
        %v4994 = vpop.permute.xlu0 %4993
        %4995 = vrot.lane.b32.xlu0 %v4040, 8
        %v4996 = vpop.permute.xlu0 %4995
        %4997 = vrot.lane.b32.xlu0 %v4116, 8
        %v4998 = vpop.permute.xlu0 %4997
        %4999 = vrot.lane.b32.xlu0 %v4192, 8
        %v5000 = vpop.permute.xlu0 %4999
        %5001 = vrot.lane.b32.xlu0 %v4268, 8
        %v5002 = vpop.permute.xlu0 %5001
        %5003 = vrot.lane.b32.xlu0 %v4344, 8
        %v5004 = vpop.permute.xlu0 %5003
        %5005 = vrot.lane.b32.xlu0 %v4420, 8
        %v5006 = vpop.permute.xlu0 %5005
        %5007 = vrot.lane.b32.xlu0 %v4496, 8
        %v5008 = vpop.permute.xlu0 %5007
        %5009 = vrot.lane.b32.xlu0 %v4572, 8
        %v5010 = vpop.permute.xlu0 %5009
        %5011 = vrot.lane.b32.xlu0 %v4648, 8
        %v5012 = vpop.permute.xlu0 %5011
        %5013 = vrot.lane.b32.xlu0 %v4724, 8
        %v5014 = vpop.permute.xlu0 %5013
        %5047 = vrot.lane.b32.xlu0 %v3594, 10
        %v5048 = vpop.permute.xlu0 %5047
        %5049 = vrot.lane.b32.xlu0 %v3670, 10
        %v5050 = vpop.permute.xlu0 %5049
        %5051 = vrot.lane.b32.xlu0 %v3746, 10
        %v5052 = vpop.permute.xlu0 %5051
        %5053 = vrot.lane.b32.xlu0 %v3822, 10
        %v5054 = vpop.permute.xlu0 %5053
        %5055 = vrot.lane.b32.xlu0 %v3898, 10
        %v5056 = vpop.permute.xlu0 %5055
        %5057 = vrot.lane.b32.xlu0 %v3974, 10
        %v5058 = vpop.permute.xlu0 %5057
        %5059 = vrot.lane.b32.xlu0 %v4050, 10
        %v5060 = vpop.permute.xlu0 %5059
        %5061 = vrot.lane.b32.xlu0 %v4126, 10
        %v5062 = vpop.permute.xlu0 %5061
        %5063 = vrot.lane.b32.xlu0 %v4202, 10
        %v5064 = vpop.permute.xlu0 %5063
        %5065 = vrot.lane.b32.xlu0 %v4278, 10
        %v5066 = vpop.permute.xlu0 %5065
        %5067 = vrot.lane.b32.xlu0 %v4354, 10
        %v5068 = vpop.permute.xlu0 %5067
        %5069 = vrot.lane.b32.xlu0 %v4430, 10
        %v5070 = vpop.permute.xlu0 %5069
        %5071 = vrot.lane.b32.xlu0 %v4506, 10
        %v5072 = vpop.permute.xlu0 %5071
        %5073 = vrot.lane.b32.xlu0 %v4582, 10
        %v5074 = vpop.permute.xlu0 %5073
        %5075 = vrot.lane.b32.xlu0 %v4658, 10
        %v5076 = vpop.permute.xlu0 %5075
        %5077 = vrot.lane.b32.xlu0 %v4734, 10
        %v5078 = vpop.permute.xlu0 %5077
        %5111 = vrot.lane.b32.xlu0 %v3588, 12
        %v5112 = vpop.permute.xlu0 %5111
        %5113 = vrot.lane.b32.xlu0 %v3664, 12
        %v5114 = vpop.permute.xlu0 %5113
        %5115 = vrot.lane.b32.xlu0 %v3740, 12
        %v5116 = vpop.permute.xlu0 %5115
        %5117 = vrot.lane.b32.xlu0 %v3816, 12
        %v5118 = vpop.permute.xlu0 %5117
        %5119 = vrot.lane.b32.xlu0 %v3892, 12
        %v5120 = vpop.permute.xlu0 %5119
        %5121 = vrot.lane.b32.xlu0 %v3968, 12
        %v5122 = vpop.permute.xlu0 %5121
        %5123 = vrot.lane.b32.xlu0 %v4044, 12
        %v5124 = vpop.permute.xlu0 %5123
        %5125 = vrot.lane.b32.xlu0 %v4120, 12
        %v5126 = vpop.permute.xlu0 %5125
        %5127 = vrot.lane.b32.xlu0 %v4196, 12
        %v5128 = vpop.permute.xlu0 %5127
        %5129 = vrot.lane.b32.xlu0 %v4272, 12
        %v5130 = vpop.permute.xlu0 %5129
        %5131 = vrot.lane.b32.xlu0 %v4348, 12
        %v5132 = vpop.permute.xlu0 %5131
        %5133 = vrot.lane.b32.xlu0 %v4424, 12
        %v5134 = vpop.permute.xlu0 %5133
        %5135 = vrot.lane.b32.xlu0 %v4500, 12
        %v5136 = vpop.permute.xlu0 %5135
        %5137 = vrot.lane.b32.xlu0 %v4576, 12
        %v5138 = vpop.permute.xlu0 %5137
        %5139 = vrot.lane.b32.xlu0 %v4652, 12
        %v5140 = vpop.permute.xlu0 %5139
        %5141 = vrot.lane.b32.xlu0 %v4728, 12
        %v5142 = vpop.permute.xlu0 %5141
        %5175 = vrot.lane.b32.xlu0 %v3596, 14
        %v5176 = vpop.permute.xlu0 %5175
        %5177 = vrot.lane.b32.xlu0 %v3672, 14
        %v5178 = vpop.permute.xlu0 %5177
        %5179 = vrot.lane.b32.xlu0 %v3748, 14
        %v5180 = vpop.permute.xlu0 %5179
        %5181 = vrot.lane.b32.xlu0 %v3824, 14
        %v5182 = vpop.permute.xlu0 %5181
        %5183 = vrot.lane.b32.xlu0 %v3900, 14
        %v5184 = vpop.permute.xlu0 %5183
        %5185 = vrot.lane.b32.xlu0 %v3976, 14
        %v5186 = vpop.permute.xlu0 %5185
        %5187 = vrot.lane.b32.xlu0 %v4052, 14
        %v5188 = vpop.permute.xlu0 %5187
        %5189 = vrot.lane.b32.xlu0 %v4128, 14
        %v5190 = vpop.permute.xlu0 %5189
        %5191 = vrot.lane.b32.xlu0 %v4204, 14
        %v5192 = vpop.permute.xlu0 %5191
        %5193 = vrot.lane.b32.xlu0 %v4280, 14
        %v5194 = vpop.permute.xlu0 %5193
        %5195 = vrot.lane.b32.xlu0 %v4356, 14
        %v5196 = vpop.permute.xlu0 %5195
        %5197 = vrot.lane.b32.xlu0 %v4432, 14
        %v5198 = vpop.permute.xlu0 %5197
        %5199 = vrot.lane.b32.xlu0 %v4508, 14
        %v5200 = vpop.permute.xlu0 %5199
        %5201 = vrot.lane.b32.xlu0 %v4584, 14
        %v5202 = vpop.permute.xlu0 %5201
        %5203 = vrot.lane.b32.xlu0 %v4660, 14
        %v5204 = vpop.permute.xlu0 %5203
        %5205 = vrot.lane.b32.xlu0 %v4736, 14
        %v5206 = vpop.permute.xlu0 %5205
        %5239 = vrot.lane.b32.xlu0 %v3612, 16
        %v5240 = vpop.permute.xlu0 %5239
        %5241 = vrot.lane.b32.xlu0 %v3688, 16
        %v5242 = vpop.permute.xlu0 %5241
        %5243 = vrot.lane.b32.xlu0 %v3764, 16
        %v5244 = vpop.permute.xlu0 %5243
        %5245 = vrot.lane.b32.xlu0 %v3840, 16
        %v5246 = vpop.permute.xlu0 %5245
        %5247 = vrot.lane.b32.xlu0 %v3916, 16
        %v5248 = vpop.permute.xlu0 %5247
        %5249 = vrot.lane.b32.xlu0 %v3992, 16
        %v5250 = vpop.permute.xlu0 %5249
        %5251 = vrot.lane.b32.xlu0 %v4068, 16
        %v5252 = vpop.permute.xlu0 %5251
        %5253 = vrot.lane.b32.xlu0 %v4144, 16
        %v5254 = vpop.permute.xlu0 %5253
        %5255 = vrot.lane.b32.xlu0 %v4220, 16
        %v5256 = vpop.permute.xlu0 %5255
        %5257 = vrot.lane.b32.xlu0 %v4296, 16
        %v5258 = vpop.permute.xlu0 %5257
        %5259 = vrot.lane.b32.xlu0 %v4372, 16
        %v5260 = vpop.permute.xlu0 %5259
        %5261 = vrot.lane.b32.xlu0 %v4448, 16
        %v5262 = vpop.permute.xlu0 %5261
        %5263 = vrot.lane.b32.xlu0 %v4524, 16
        %v5264 = vpop.permute.xlu0 %5263
        %5265 = vrot.lane.b32.xlu0 %v4600, 16
        %v5266 = vpop.permute.xlu0 %5265
        %5267 = vrot.lane.b32.xlu0 %v4676, 16
        %v5268 = vpop.permute.xlu0 %5267
        %5269 = vrot.lane.b32.xlu0 %v4752, 16
        %v5270 = vpop.permute.xlu0 %5269
        %5303 = vrot.lane.b32.xlu0 %v3628, 18
        %v5304 = vpop.permute.xlu0 %5303
        %5305 = vrot.lane.b32.xlu0 %v3704, 18
        %v5306 = vpop.permute.xlu0 %5305
        %5307 = vrot.lane.b32.xlu0 %v3780, 18
        %v5308 = vpop.permute.xlu0 %5307
        %5309 = vrot.lane.b32.xlu0 %v3856, 18
        %v5310 = vpop.permute.xlu0 %5309
        %5311 = vrot.lane.b32.xlu0 %v3932, 18
        %v5312 = vpop.permute.xlu0 %5311
        %5313 = vrot.lane.b32.xlu0 %v4008, 18
        %v5314 = vpop.permute.xlu0 %5313
        %5315 = vrot.lane.b32.xlu0 %v4084, 18
        %v5316 = vpop.permute.xlu0 %5315
        %5317 = vrot.lane.b32.xlu0 %v4160, 18
        %v5318 = vpop.permute.xlu0 %5317
        %5319 = vrot.lane.b32.xlu0 %v4236, 18
        %v5320 = vpop.permute.xlu0 %5319
        %5321 = vrot.lane.b32.xlu0 %v4312, 18
        %v5322 = vpop.permute.xlu0 %5321
        %5323 = vrot.lane.b32.xlu0 %v4388, 18
        %v5324 = vpop.permute.xlu0 %5323
        %5325 = vrot.lane.b32.xlu0 %v4464, 18
        %v5326 = vpop.permute.xlu0 %5325
        %5327 = vrot.lane.b32.xlu0 %v4540, 18
        %v5328 = vpop.permute.xlu0 %5327
        %5329 = vrot.lane.b32.xlu0 %v4616, 18
        %v5330 = vpop.permute.xlu0 %5329
        %5331 = vrot.lane.b32.xlu0 %v4692, 18
        %v5332 = vpop.permute.xlu0 %5331
        %5333 = vrot.lane.b32.xlu0 %v4768, 18
        %v5334 = vpop.permute.xlu0 %5333
        %5367 = vrot.lane.b32.xlu0 %v3616, 20
        %v5368 = vpop.permute.xlu0 %5367
        %5369 = vrot.lane.b32.xlu0 %v3692, 20
        %v5370 = vpop.permute.xlu0 %5369
        %5371 = vrot.lane.b32.xlu0 %v3768, 20
        %v5372 = vpop.permute.xlu0 %5371
        %5373 = vrot.lane.b32.xlu0 %v3844, 20
        %v5374 = vpop.permute.xlu0 %5373
        %5375 = vrot.lane.b32.xlu0 %v3920, 20
        %v5376 = vpop.permute.xlu0 %5375
        %5377 = vrot.lane.b32.xlu0 %v3996, 20
        %v5378 = vpop.permute.xlu0 %5377
        %5379 = vrot.lane.b32.xlu0 %v4072, 20
        %v5380 = vpop.permute.xlu0 %5379
        %5381 = vrot.lane.b32.xlu0 %v4148, 20
        %v5382 = vpop.permute.xlu0 %5381
        %5383 = vrot.lane.b32.xlu0 %v4224, 20
        %v5384 = vpop.permute.xlu0 %5383
        %5385 = vrot.lane.b32.xlu0 %v4300, 20
        %v5386 = vpop.permute.xlu0 %5385
        %5387 = vrot.lane.b32.xlu0 %v4376, 20
        %v5388 = vpop.permute.xlu0 %5387
        %5389 = vrot.lane.b32.xlu0 %v4452, 20
        %v5390 = vpop.permute.xlu0 %5389
        %5391 = vrot.lane.b32.xlu0 %v4528, 20
        %v5392 = vpop.permute.xlu0 %5391
        %5393 = vrot.lane.b32.xlu0 %v4604, 20
        %v5394 = vpop.permute.xlu0 %5393
        %5395 = vrot.lane.b32.xlu0 %v4680, 20
        %v5396 = vpop.permute.xlu0 %5395
        %5397 = vrot.lane.b32.xlu0 %v4756, 20
        %v5398 = vpop.permute.xlu0 %5397
        %5431 = vrot.lane.b32.xlu0 %v3630, 22
        %v5432 = vpop.permute.xlu0 %5431
        %5433 = vrot.lane.b32.xlu0 %v3706, 22
        %v5434 = vpop.permute.xlu0 %5433
        %5435 = vrot.lane.b32.xlu0 %v3782, 22
        %v5436 = vpop.permute.xlu0 %5435
        %5437 = vrot.lane.b32.xlu0 %v3858, 22
        %v5438 = vpop.permute.xlu0 %5437
        %5439 = vrot.lane.b32.xlu0 %v3934, 22
        %v5440 = vpop.permute.xlu0 %5439
        %5441 = vrot.lane.b32.xlu0 %v4010, 22
        %v5442 = vpop.permute.xlu0 %5441
        %5443 = vrot.lane.b32.xlu0 %v4086, 22
        %v5444 = vpop.permute.xlu0 %5443
        %5445 = vrot.lane.b32.xlu0 %v4162, 22
        %v5446 = vpop.permute.xlu0 %5445
        %5447 = vrot.lane.b32.xlu0 %v4238, 22
        %v5448 = vpop.permute.xlu0 %5447
        %5449 = vrot.lane.b32.xlu0 %v4314, 22
        %v5450 = vpop.permute.xlu0 %5449
        %5451 = vrot.lane.b32.xlu0 %v4390, 22
        %v5452 = vpop.permute.xlu0 %5451
        %5453 = vrot.lane.b32.xlu0 %v4466, 22
        %v5454 = vpop.permute.xlu0 %5453
        %5455 = vrot.lane.b32.xlu0 %v4542, 22
        %v5456 = vpop.permute.xlu0 %5455
        %5457 = vrot.lane.b32.xlu0 %v4618, 22
        %v5458 = vpop.permute.xlu0 %5457
        %5459 = vrot.lane.b32.xlu0 %v4694, 22
        %v5460 = vpop.permute.xlu0 %5459
        %5461 = vrot.lane.b32.xlu0 %v4770, 22
        %v5462 = vpop.permute.xlu0 %5461
        %5495 = vrot.lane.b32.xlu0 %v3622, 24
        %v5496 = vpop.permute.xlu0 %5495
        %5497 = vrot.lane.b32.xlu0 %v3698, 24
        %v5498 = vpop.permute.xlu0 %5497
        %5499 = vrot.lane.b32.xlu0 %v3774, 24
        %v5500 = vpop.permute.xlu0 %5499
        %5501 = vrot.lane.b32.xlu0 %v3850, 24
        %v5502 = vpop.permute.xlu0 %5501
        %5503 = vrot.lane.b32.xlu0 %v3926, 24
        %v5504 = vpop.permute.xlu0 %5503
        %5505 = vrot.lane.b32.xlu0 %v4002, 24
        %v5506 = vpop.permute.xlu0 %5505
        %5507 = vrot.lane.b32.xlu0 %v4078, 24
        %v5508 = vpop.permute.xlu0 %5507
        %5509 = vrot.lane.b32.xlu0 %v4154, 24
        %v5510 = vpop.permute.xlu0 %5509
        %5511 = vrot.lane.b32.xlu0 %v4230, 24
        %v5512 = vpop.permute.xlu0 %5511
        %5513 = vrot.lane.b32.xlu0 %v4306, 24
        %v5514 = vpop.permute.xlu0 %5513
        %5515 = vrot.lane.b32.xlu0 %v4382, 24
        %v5516 = vpop.permute.xlu0 %5515
        %5517 = vrot.lane.b32.xlu0 %v4458, 24
        %v5518 = vpop.permute.xlu0 %5517
        %5519 = vrot.lane.b32.xlu0 %v4534, 24
        %v5520 = vpop.permute.xlu0 %5519
        %5521 = vrot.lane.b32.xlu0 %v4610, 24
        %v5522 = vpop.permute.xlu0 %5521
        %5523 = vrot.lane.b32.xlu0 %v4686, 24
        %v5524 = vpop.permute.xlu0 %5523
        %5525 = vrot.lane.b32.xlu0 %v4762, 24
        %v5526 = vpop.permute.xlu0 %5525
        %5559 = vrot.lane.b32.xlu0 %v3632, 26
        %v5560 = vpop.permute.xlu0 %5559
        %5561 = vrot.lane.b32.xlu0 %v3708, 26
        %v5562 = vpop.permute.xlu0 %5561
        %5563 = vrot.lane.b32.xlu0 %v3784, 26
        %v5564 = vpop.permute.xlu0 %5563
        %5565 = vrot.lane.b32.xlu0 %v3860, 26
        %v5566 = vpop.permute.xlu0 %5565
        %5567 = vrot.lane.b32.xlu0 %v3936, 26
        %v5568 = vpop.permute.xlu0 %5567
        %5569 = vrot.lane.b32.xlu0 %v4012, 26
        %v5570 = vpop.permute.xlu0 %5569
        %5571 = vrot.lane.b32.xlu0 %v4088, 26
        %v5572 = vpop.permute.xlu0 %5571
        %5573 = vrot.lane.b32.xlu0 %v4164, 26
        %v5574 = vpop.permute.xlu0 %5573
        %5575 = vrot.lane.b32.xlu0 %v4240, 26
        %v5576 = vpop.permute.xlu0 %5575
        %5577 = vrot.lane.b32.xlu0 %v4316, 26
        %v5578 = vpop.permute.xlu0 %5577
        %5579 = vrot.lane.b32.xlu0 %v4392, 26
        %v5580 = vpop.permute.xlu0 %5579
        %5581 = vrot.lane.b32.xlu0 %v4468, 26
        %v5582 = vpop.permute.xlu0 %5581
        %5583 = vrot.lane.b32.xlu0 %v4544, 26
        %v5584 = vpop.permute.xlu0 %5583
        %5585 = vrot.lane.b32.xlu0 %v4620, 26
        %v5586 = vpop.permute.xlu0 %5585
        %5587 = vrot.lane.b32.xlu0 %v4696, 26
        %v5588 = vpop.permute.xlu0 %5587
        %5589 = vrot.lane.b32.xlu0 %v4772, 26
        %v5590 = vpop.permute.xlu0 %5589
        %5623 = vrot.lane.b32.xlu0 %v3626, 28
        %v5624 = vpop.permute.xlu0 %5623
        %5625 = vrot.lane.b32.xlu0 %v3702, 28
        %v5626 = vpop.permute.xlu0 %5625
        %5627 = vrot.lane.b32.xlu0 %v3778, 28
        %v5628 = vpop.permute.xlu0 %5627
        %5629 = vrot.lane.b32.xlu0 %v3854, 28
        %v5630 = vpop.permute.xlu0 %5629
        %5631 = vrot.lane.b32.xlu0 %v3930, 28
        %v5632 = vpop.permute.xlu0 %5631
        %5633 = vrot.lane.b32.xlu0 %v4006, 28
        %v5634 = vpop.permute.xlu0 %5633
        %5635 = vrot.lane.b32.xlu0 %v4082, 28
        %v5636 = vpop.permute.xlu0 %5635
        %5637 = vrot.lane.b32.xlu0 %v4158, 28
        %v5638 = vpop.permute.xlu0 %5637
        %5639 = vrot.lane.b32.xlu0 %v4234, 28
        %v5640 = vpop.permute.xlu0 %5639
        %5641 = vrot.lane.b32.xlu0 %v4310, 28
        %v5642 = vpop.permute.xlu0 %5641
        %5643 = vrot.lane.b32.xlu0 %v4386, 28
        %v5644 = vpop.permute.xlu0 %5643
        %5645 = vrot.lane.b32.xlu0 %v4462, 28
        %v5646 = vpop.permute.xlu0 %5645
        %5647 = vrot.lane.b32.xlu0 %v4538, 28
        %v5648 = vpop.permute.xlu0 %5647
        %5649 = vrot.lane.b32.xlu0 %v4614, 28
        %v5650 = vpop.permute.xlu0 %5649
        %5651 = vrot.lane.b32.xlu0 %v4690, 28
        %v5652 = vpop.permute.xlu0 %5651
        %5653 = vrot.lane.b32.xlu0 %v4766, 28
        %v5654 = vpop.permute.xlu0 %5653
        %5687 = vrot.lane.b32.xlu0 %v3634, 30
        %v5688 = vpop.permute.xlu0 %5687
        %5689 = vrot.lane.b32.xlu0 %v3710, 30
        %v5690 = vpop.permute.xlu0 %5689
        %5691 = vrot.lane.b32.xlu0 %v3786, 30
        %v5692 = vpop.permute.xlu0 %5691
        %5693 = vrot.lane.b32.xlu0 %v3862, 30
        %v5694 = vpop.permute.xlu0 %5693
        %5695 = vrot.lane.b32.xlu0 %v3938, 30
        %v5696 = vpop.permute.xlu0 %5695
        %5697 = vrot.lane.b32.xlu0 %v4014, 30
        %v5698 = vpop.permute.xlu0 %5697
        %5699 = vrot.lane.b32.xlu0 %v4090, 30
        %v5700 = vpop.permute.xlu0 %5699
        %5701 = vrot.lane.b32.xlu0 %v4166, 30
        %v5702 = vpop.permute.xlu0 %5701
        %5703 = vrot.lane.b32.xlu0 %v4242, 30
        %v5704 = vpop.permute.xlu0 %5703
        %5705 = vrot.lane.b32.xlu0 %v4318, 30
        %v5706 = vpop.permute.xlu0 %5705
        %5707 = vrot.lane.b32.xlu0 %v4394, 30
        %v5708 = vpop.permute.xlu0 %5707
        %5709 = vrot.lane.b32.xlu0 %v4470, 30
        %v5710 = vpop.permute.xlu0 %5709
        %5711 = vrot.lane.b32.xlu0 %v4546, 30
        %v5712 = vpop.permute.xlu0 %5711
        %5713 = vrot.lane.b32.xlu0 %v4622, 30
        %v5714 = vpop.permute.xlu0 %5713
        %5715 = vrot.lane.b32.xlu0 %v4698, 30
        %v5716 = vpop.permute.xlu0 %5715
        %5717 = vrot.lane.b32.xlu0 %v4774, 30
        %v5718 = vpop.permute.xlu0 %5717
        %v5735 = vsel %vm3304, %v3574, %v4792
        %v5736 = vsel %vm3304, %v3650, %v4794
        %v5737 = vsel %vm3304, %v3726, %v4796
        %v5738 = vsel %vm3304, %v3802, %v4798
        %v5739 = vsel %vm3304, %v3878, %v4800
        %v5740 = vsel %vm3304, %v3954, %v4802
        %v5741 = vsel %vm3304, %v4030, %v4804
        %v5742 = vsel %vm3304, %v4106, %v4806
        %v5743 = vsel %vm3304, %v4182, %v4808
        %v5744 = vsel %vm3304, %v4258, %v4810
        %v5745 = vsel %vm3304, %v4334, %v4812
        %v5746 = vsel %vm3304, %v4410, %v4814
        %v5747 = vsel %vm3304, %v4486, %v4816
        %v5748 = vsel %vm3304, %v4562, %v4818
        %v5749 = vsel %vm3304, %v4638, %v4820
        %v5750 = vsel %vm3304, %v4714, %v4822
        %v5751 = vsel %vm3321, %v5735, %v4856
        %v5752 = vsel %vm3321, %v5736, %v4858
        %v5753 = vsel %vm3321, %v5737, %v4860
        %v5754 = vsel %vm3321, %v5738, %v4862
        %v5755 = vsel %vm3321, %v5739, %v4864
        %v5756 = vsel %vm3321, %v5740, %v4866
        %v5757 = vsel %vm3321, %v5741, %v4868
        %v5758 = vsel %vm3321, %v5742, %v4870
        %v5759 = vsel %vm3321, %v5743, %v4872
        %v5760 = vsel %vm3321, %v5744, %v4874
        %v5761 = vsel %vm3321, %v5745, %v4876
        %v5762 = vsel %vm3321, %v5746, %v4878
        %v5763 = vsel %vm3321, %v5747, %v4880
        %v5764 = vsel %vm3321, %v5748, %v4882
        %v5765 = vsel %vm3321, %v5749, %v4884
        %v5766 = vsel %vm3321, %v5750, %v4886
        %v5767 = vsel %vm3338, %v5751, %v4920
        %v5768 = vsel %vm3338, %v5752, %v4922
        %v5769 = vsel %vm3338, %v5753, %v4924
        %v5770 = vsel %vm3338, %v5754, %v4926
        %v5771 = vsel %vm3338, %v5755, %v4928
        %v5772 = vsel %vm3338, %v5756, %v4930
        %v5773 = vsel %vm3338, %v5757, %v4932
        %v5774 = vsel %vm3338, %v5758, %v4934
        %v5775 = vsel %vm3338, %v5759, %v4936
        %v5776 = vsel %vm3338, %v5760, %v4938
        %v5777 = vsel %vm3338, %v5761, %v4940
        %v5778 = vsel %vm3338, %v5762, %v4942
        %v5779 = vsel %vm3338, %v5763, %v4944
        %v5780 = vsel %vm3338, %v5764, %v4946
        %v5781 = vsel %vm3338, %v5765, %v4948
        %v5782 = vsel %vm3338, %v5766, %v4950
        %v5783 = vsel %vm3355, %v5767, %v4984
        %v5784 = vsel %vm3355, %v5768, %v4986
        %v5785 = vsel %vm3355, %v5769, %v4988
        %v5786 = vsel %vm3355, %v5770, %v4990
        %v5787 = vsel %vm3355, %v5771, %v4992
        %v5788 = vsel %vm3355, %v5772, %v4994
        %v5789 = vsel %vm3355, %v5773, %v4996
        %v5790 = vsel %vm3355, %v5774, %v4998
        %v5791 = vsel %vm3355, %v5775, %v5000
        %v5792 = vsel %vm3355, %v5776, %v5002
        %v5793 = vsel %vm3355, %v5777, %v5004
        %v5794 = vsel %vm3355, %v5778, %v5006
        %v5795 = vsel %vm3355, %v5779, %v5008
        %v5796 = vsel %vm3355, %v5780, %v5010
        %v5797 = vsel %vm3355, %v5781, %v5012
        %v5798 = vsel %vm3355, %v5782, %v5014
        %v5799 = vsel %vm3372, %v5783, %v5048
        %v5800 = vsel %vm3372, %v5784, %v5050
        %v5801 = vsel %vm3372, %v5785, %v5052
        %v5802 = vsel %vm3372, %v5786, %v5054
        %v5803 = vsel %vm3372, %v5787, %v5056
        %v5804 = vsel %vm3372, %v5788, %v5058
        %v5805 = vsel %vm3372, %v5789, %v5060
        %v5806 = vsel %vm3372, %v5790, %v5062
        %v5807 = vsel %vm3372, %v5791, %v5064
        %v5808 = vsel %vm3372, %v5792, %v5066
        %v5809 = vsel %vm3372, %v5793, %v5068
        %v5810 = vsel %vm3372, %v5794, %v5070
        %v5811 = vsel %vm3372, %v5795, %v5072
        %v5812 = vsel %vm3372, %v5796, %v5074
        %v5813 = vsel %vm3372, %v5797, %v5076
        %v5814 = vsel %vm3372, %v5798, %v5078
        %v5815 = vsel %vm3389, %v5799, %v5112
        %v5816 = vsel %vm3389, %v5800, %v5114
        %v5817 = vsel %vm3389, %v5801, %v5116
        %v5818 = vsel %vm3389, %v5802, %v5118
        %v5819 = vsel %vm3389, %v5803, %v5120
        %v5820 = vsel %vm3389, %v5804, %v5122
        %v5821 = vsel %vm3389, %v5805, %v5124
        %v5822 = vsel %vm3389, %v5806, %v5126
        %v5823 = vsel %vm3389, %v5807, %v5128
        %v5824 = vsel %vm3389, %v5808, %v5130
        %v5825 = vsel %vm3389, %v5809, %v5132
        %v5826 = vsel %vm3389, %v5810, %v5134
        %v5827 = vsel %vm3389, %v5811, %v5136
        %v5828 = vsel %vm3389, %v5812, %v5138
        %v5829 = vsel %vm3389, %v5813, %v5140
        %v5830 = vsel %vm3389, %v5814, %v5142
        %v5831 = vsel %vm3406, %v5815, %v5176
        %v5832 = vsel %vm3406, %v5816, %v5178
        %v5833 = vsel %vm3406, %v5817, %v5180
        %v5834 = vsel %vm3406, %v5818, %v5182
        %v5835 = vsel %vm3406, %v5819, %v5184
        %v5836 = vsel %vm3406, %v5820, %v5186
        %v5837 = vsel %vm3406, %v5821, %v5188
        %v5838 = vsel %vm3406, %v5822, %v5190
        %v5839 = vsel %vm3406, %v5823, %v5192
        %v5840 = vsel %vm3406, %v5824, %v5194
        %v5841 = vsel %vm3406, %v5825, %v5196
        %v5842 = vsel %vm3406, %v5826, %v5198
        %v5843 = vsel %vm3406, %v5827, %v5200
        %v5844 = vsel %vm3406, %v5828, %v5202
        %v5845 = vsel %vm3406, %v5829, %v5204
        %v5846 = vsel %vm3406, %v5830, %v5206
        %v5847 = vsel %vm3423, %v5831, %v5240
        %v5848 = vsel %vm3423, %v5832, %v5242
        %v5849 = vsel %vm3423, %v5833, %v5244
        %v5850 = vsel %vm3423, %v5834, %v5246
        %v5851 = vsel %vm3423, %v5835, %v5248
        %v5852 = vsel %vm3423, %v5836, %v5250
        %v5853 = vsel %vm3423, %v5837, %v5252
        %v5854 = vsel %vm3423, %v5838, %v5254
        %v5855 = vsel %vm3423, %v5839, %v5256
        %v5856 = vsel %vm3423, %v5840, %v5258
        %v5857 = vsel %vm3423, %v5841, %v5260
        %v5858 = vsel %vm3423, %v5842, %v5262
        %v5859 = vsel %vm3423, %v5843, %v5264
        %v5860 = vsel %vm3423, %v5844, %v5266
        %v5861 = vsel %vm3423, %v5845, %v5268
        %v5862 = vsel %vm3423, %v5846, %v5270
        %v5863 = vsel %vm3440, %v5847, %v5304
        %v5864 = vsel %vm3440, %v5848, %v5306
        %v5865 = vsel %vm3440, %v5849, %v5308
        %v5866 = vsel %vm3440, %v5850, %v5310
        %v5867 = vsel %vm3440, %v5851, %v5312
        %v5868 = vsel %vm3440, %v5852, %v5314
        %v5869 = vsel %vm3440, %v5853, %v5316
        %v5870 = vsel %vm3440, %v5854, %v5318
        %v5871 = vsel %vm3440, %v5855, %v5320
        %v5872 = vsel %vm3440, %v5856, %v5322
        %v5873 = vsel %vm3440, %v5857, %v5324
        %v5874 = vsel %vm3440, %v5858, %v5326
        %v5875 = vsel %vm3440, %v5859, %v5328
        %v5876 = vsel %vm3440, %v5860, %v5330
        %v5877 = vsel %vm3440, %v5861, %v5332
        %v5878 = vsel %vm3440, %v5862, %v5334
        %v5879 = vsel %vm3457, %v5863, %v5368
        %v5880 = vsel %vm3457, %v5864, %v5370
        %v5881 = vsel %vm3457, %v5865, %v5372
        %v5882 = vsel %vm3457, %v5866, %v5374
        %v5883 = vsel %vm3457, %v5867, %v5376
        %v5884 = vsel %vm3457, %v5868, %v5378
        %v5885 = vsel %vm3457, %v5869, %v5380
        %v5886 = vsel %vm3457, %v5870, %v5382
        %v5887 = vsel %vm3457, %v5871, %v5384
        %v5888 = vsel %vm3457, %v5872, %v5386
        %v5889 = vsel %vm3457, %v5873, %v5388
        %v5890 = vsel %vm3457, %v5874, %v5390
        %v5891 = vsel %vm3457, %v5875, %v5392
        %v5892 = vsel %vm3457, %v5876, %v5394
        %v5893 = vsel %vm3457, %v5877, %v5396
        %v5894 = vsel %vm3457, %v5878, %v5398
        %v5895 = vsel %vm3474, %v5879, %v5432
        %v5896 = vsel %vm3474, %v5880, %v5434
        %v5897 = vsel %vm3474, %v5881, %v5436
        %v5898 = vsel %vm3474, %v5882, %v5438
        %v5899 = vsel %vm3474, %v5883, %v5440
        %v5900 = vsel %vm3474, %v5884, %v5442
        %v5901 = vsel %vm3474, %v5885, %v5444
        %v5902 = vsel %vm3474, %v5886, %v5446
        %v5903 = vsel %vm3474, %v5887, %v5448
        %v5904 = vsel %vm3474, %v5888, %v5450
        %v5905 = vsel %vm3474, %v5889, %v5452
        %v5906 = vsel %vm3474, %v5890, %v5454
        %v5907 = vsel %vm3474, %v5891, %v5456
        %v5908 = vsel %vm3474, %v5892, %v5458
        %v5909 = vsel %vm3474, %v5893, %v5460
        %v5910 = vsel %vm3474, %v5894, %v5462
        %v5911 = vsel %vm3491, %v5895, %v5496
        %v5912 = vsel %vm3491, %v5896, %v5498
        %v5913 = vsel %vm3491, %v5897, %v5500
        %v5914 = vsel %vm3491, %v5898, %v5502
        %v5915 = vsel %vm3491, %v5899, %v5504
        %v5916 = vsel %vm3491, %v5900, %v5506
        %v5917 = vsel %vm3491, %v5901, %v5508
        %v5918 = vsel %vm3491, %v5902, %v5510
        %v5919 = vsel %vm3491, %v5903, %v5512
        %v5920 = vsel %vm3491, %v5904, %v5514
        %v5921 = vsel %vm3491, %v5905, %v5516
        %v5922 = vsel %vm3491, %v5906, %v5518
        %v5923 = vsel %vm3491, %v5907, %v5520
        %v5924 = vsel %vm3491, %v5908, %v5522
        %v5925 = vsel %vm3491, %v5909, %v5524
        %v5926 = vsel %vm3491, %v5910, %v5526
        %v5927 = vsel %vm3508, %v5911, %v5560
        %v5928 = vsel %vm3508, %v5912, %v5562
        %v5929 = vsel %vm3508, %v5913, %v5564
        %v5930 = vsel %vm3508, %v5914, %v5566
        %v5931 = vsel %vm3508, %v5915, %v5568
        %v5932 = vsel %vm3508, %v5916, %v5570
        %v5933 = vsel %vm3508, %v5917, %v5572
        %v5934 = vsel %vm3508, %v5918, %v5574
        %v5935 = vsel %vm3508, %v5919, %v5576
        %v5936 = vsel %vm3508, %v5920, %v5578
        %v5937 = vsel %vm3508, %v5921, %v5580
        %v5938 = vsel %vm3508, %v5922, %v5582
        %v5939 = vsel %vm3508, %v5923, %v5584
        %v5940 = vsel %vm3508, %v5924, %v5586
        %v5941 = vsel %vm3508, %v5925, %v5588
        %v5942 = vsel %vm3508, %v5926, %v5590
        %v5943 = vsel %vm3525, %v5927, %v5624
        %v5944 = vsel %vm3525, %v5928, %v5626
        %v5945 = vsel %vm3525, %v5929, %v5628
        %v5946 = vsel %vm3525, %v5930, %v5630
        %v5947 = vsel %vm3525, %v5931, %v5632
        %v5948 = vsel %vm3525, %v5932, %v5634
        %v5949 = vsel %vm3525, %v5933, %v5636
        %v5950 = vsel %vm3525, %v5934, %v5638
        %v5951 = vsel %vm3525, %v5935, %v5640
        %v5952 = vsel %vm3525, %v5936, %v5642
        %v5953 = vsel %vm3525, %v5937, %v5644
        %v5954 = vsel %vm3525, %v5938, %v5646
        %v5955 = vsel %vm3525, %v5939, %v5648
        %v5956 = vsel %vm3525, %v5940, %v5650
        %v5957 = vsel %vm3525, %v5941, %v5652
        %v5958 = vsel %vm3525, %v5942, %v5654
        %v5959 = vsel %vm3542, %v5943, %v5688
        %v5960 = vsel %vm3542, %v5944, %v5690
        %v5961 = vsel %vm3542, %v5945, %v5692
        %v5962 = vsel %vm3542, %v5946, %v5694
        %v5963 = vsel %vm3542, %v5947, %v5696
        %v5964 = vsel %vm3542, %v5948, %v5698
        %v5965 = vsel %vm3542, %v5949, %v5700
        %v5966 = vsel %vm3542, %v5950, %v5702
        %v5967 = vsel %vm3542, %v5951, %v5704
        %v5968 = vsel %vm3542, %v5952, %v5706
        %v5969 = vsel %vm3542, %v5953, %v5708
        %v5970 = vsel %vm3542, %v5954, %v5710
        %v5971 = vsel %vm3542, %v5955, %v5712
        %v5972 = vsel %vm3542, %v5956, %v5714
        %v5973 = vsel %vm3542, %v5957, %v5716
        %v5974 = vsel %vm3542, %v5958, %v5718
        %v5991 = vrot.slane %v5959, 7
        %v5992 = vrot.slane %v5960, 7
        %v5993 = vrot.slane %v5961, 7
        %v5994 = vrot.slane %v5962, 7
        %v5995 = vrot.slane %v5963, 7
        %v5996 = vrot.slane %v5964, 7
        %v5997 = vrot.slane %v5965, 7
        %v5998 = vrot.slane %v5966, 7
        %v5999 = vrot.slane %v5967, 7
        %v6000 = vrot.slane %v5968, 7
        %v6001 = vrot.slane %v5969, 7
        %v6002 = vrot.slane %v5970, 7
        %v6003 = vrot.slane %v5971, 7
        %v6004 = vrot.slane %v5972, 7
        %v6005 = vrot.slane %v5973, 7
        %v6006 = vrot.slane %v5974, 7
        %vm6023 = vcmask 1040384
        %v6024 = vsel %vm6023, %v3543, %v5991
        %v6025 = vsel %vm6023, %v3544, %v5992
        %v6026 = vsel %vm6023, %v3545, %v5993
        %v6027 = vsel %vm6023, %v3546, %v5994
        %v6028 = vsel %vm6023, %v3547, %v5995
        %v6029 = vsel %vm6023, %v3548, %v5996
        %v6030 = vsel %vm6023, %v3549, %v5997
        %v6031 = vsel %vm6023, %v3550, %v5998
        %v6032 = vsel %vm6023, %v3551, %v5999
        %v6033 = vsel %vm6023, %v3552, %v6000
        %v6034 = vsel %vm6023, %v3553, %v6001
        %v6035 = vsel %vm6023, %v3554, %v6002
        %v6036 = vsel %vm6023, %v3555, %v6003
        %v6037 = vsel %vm6023, %v3556, %v6004
        %v6038 = vsel %vm6023, %v3557, %v6005
        %v6039 = vsel %vm6023, %v3558, %v6006
        %6056 = vst [vmem:[#allocation1] ss:$4 sm:$0xff] %v6024
        %s6057 = scalar_lea.vmem [#allocation1], 1
        %6058 = vst [vmem:[%s6057] ss:$4 sm:$0xff] %v6025
        %s6059 = scalar_lea.vmem [#allocation1], 2
        %6060 = vst [vmem:[%s6059] ss:$4 sm:$0xff] %v6026
        %s6061 = scalar_lea.vmem [#allocation1], 3
        %6062 = vst [vmem:[%s6061] ss:$4 sm:$0xff] %v6027
        %s6063 = scalar_lea.vmem [#allocation1], 32
        %6064 = vst [vmem:[%s6063] ss:$4 sm:$0xff] %v6028
        %s6065 = scalar_lea.vmem [#allocation1], 33
        %6066 = vst [vmem:[%s6065] ss:$4 sm:$0xff] %v6029
        %s6067 = scalar_lea.vmem [#allocation1], 34
        %6068 = vst [vmem:[%s6067] ss:$4 sm:$0xff] %v6030
        %s6069 = scalar_lea.vmem [#allocation1], 35
        %6070 = vst [vmem:[%s6069] ss:$4 sm:$0xff] %v6031
        %v6071 = vld.sshfl [vmem:[#allocation1] sm:$0xff pattern:$0x73625140]
        %v6072 = vld.sshfl [vmem:[#allocation1 + $0x20] sm:$0xff pattern:$0x73625140]
        %6073 = vst [vmem:[#allocation1] ss:$4 sm:$0xff] %v6032
        %6074 = vst [vmem:[%s6057] ss:$4 sm:$0xff] %v6033
        %6075 = vst [vmem:[%s6059] ss:$4 sm:$0xff] %v6034
        %6076 = vst [vmem:[%s6061] ss:$4 sm:$0xff] %v6035
        %6077 = vst [vmem:[%s6063] ss:$4 sm:$0xff] %v6036
        %6078 = vst [vmem:[%s6065] ss:$4 sm:$0xff] %v6037
        %6079 = vst [vmem:[%s6067] ss:$4 sm:$0xff] %v6038
        %6080 = vst [vmem:[%s6069] ss:$4 sm:$0xff] %v6039
        %v6081 = vld.sshfl [vmem:[#allocation1] sm:$0xff pattern:$0x73625140]
        %v6082 = vld.sshfl [vmem:[#allocation1 + $0x20] sm:$0xff pattern:$0x73625140]
        %vm6087 = vcmask 261120
        %6088 = vst.msk [vmem:[%s192] sm:$0xff] %vm6087, %v6071
        %6089 = vst.msk [vmem:[%s192 + $0x8] sm:$0xff] %vm6087, %v6072
        %6090 = vst.msk [vmem:[%s192 + $0x10] sm:$0xff] %vm6087, %v6081
        %6091 = vst.msk [vmem:[%s192 + $0x18] sm:$0xff] %vm6087, %v6082
        %s6092 = sand.u32 %s79, 1
        %s6093 = scalar_lea.sflag [#allocation4], %s6092
        %s6094 = sand.u32 %s79, 1
        %s6095 = smul.addr %s6094, 32
        %s6096 = scalar_lea.vmem [#allocation5], %s6095
        // Predicated region
        $region29: #{run.1} parent=23 // pred_check
          %p6097 = pneg %p89
        $region30: #{run.1} parent=23 // pred_check_branch
          %6099 = sbr.rel (%p6097) target = $region32
        $region31: #{run.1} parent=23 // pred_region
          %s6100 = smul.u32 4, %s25
          %6102 = vsyncadd %s6093, 0
          %s6103 = smul.addr %s24, 4
          %s6104 = sadd.s32 %s6100, %s6103
          %s6105 = smul.addr %s23, 16
          %s6106 = sadd.s32 %s6104, %s6105
          %s6107 = smul.addr %s6106, 8
          %s6108 = scalar_lea.hbm %s1, %s6107
          %s6109 = sshll.u32 %s6096, 4
          %s6110 = int_to_ptr.vmem [resolvable:$true] %s6109
          %s6111 = sshll.u32 %s6108, 4
          %s6112 = int_to_ptr.hbm [resolvable:$true] %s6111
          %6117 = dma.vmem_to_hbm [thread:$0]  %s6110, 512, %s6112, %s6093, 128, 128, 8
        $region32: #{run.1} parent=23 // pred_fallthru
          _
      $region24: #{run.1} parent=5 // pred_fallthru
        _
      %p6118 = scmp.le.s32.totalorder 2, %s13
      // Predicated region
      $region33: #{run.1} parent=5 // pred_check
        %p6119 = pneg %p6118
      $region34: #{run.1} parent=5 // pred_check_branch
        %6121 = sbr.rel (%p6119) target = $region36
      $region35: #{run.1} parent=5 // pred_region
        %s6122 = ssub.s32 %s13, 2
        // Predicated region
        $region37: #{run.1} parent=35 // pred_check
          %p6123 = pneg %p95
        $region38: #{run.1} parent=35 // pred_check_branch
          %6125 = sbr.rel (%p6123) target = $region40
        $region39: #{run.1} parent=35 // pred_region
          %s6126 = sand.u32 %s80, 1
          %s6127 = scalar_lea.sflag [#allocation4], %s6126
          %s6128 = sand.u32 %s80, 1
          %s6129 = smul.addr %s6128, 32
          %s6130 = scalar_lea.vmem [#allocation5], %s6129
          %6132 = dma.done %s6127, 512
        $region40: #{run.1} parent=35 // pred_fallthru
          _
      $region36: #{run.1} parent=5 // pred_fallthru
        _
    $region6: #{run.1} parent=1 // loop_footer
      %s17 = sadd.s32 1, %s13
    $region7: #{run.1} parent=1 // loop_footer_branch
      %12 = sbr.rel target = $region3
    $region8: #{run.1} parent=1 // loop_exit
      _
    %6133 = vsyncpa [#allocation3], 1
    %s6134 = scalar_lea.sflag [#allocation3], 1
    %6135 = vsyncpa %s6134, 1
    %6136 = vsyncpa [#allocation4], 1
    %s6137 = scalar_lea.sflag [#allocation4], 1
    %6138 = vsyncpa %s6137, 1

</llo_original>
